<compile_context>
chip_gen: v5e
topology: v5e:2x2
jax: 0.10.0
libtpu: 0.0.40
codegen_flags: <defaults>
</compile_context>

<pallas_src>
import functools

import jax
import jax.numpy as jnp
from jax import lax
from jax.experimental import pallas as pl
from jax.experimental.pallas import tpu as pltpu

# Keep XLA-side matmuls (wrapper precompute + pure-JAX reference) at true f32 so the
# reference comparison is meaningful; the in-kernel dots pick this up as well.
jax.config.update("jax_default_matmul_precision", "highest")

EPS = 1e-8  # torch.cosine_similarity eps


def _round8(n):
    return -(-n // 8) * 8


def _pack_rows(pieces, width):
    """Row-stack 2-D arrays into one (rows, width) f32 slab; every piece starts on an
    8-aligned row so in-kernel static slices are sublane-aligned (no relayout)."""
    offs, row = [], 0
    for a in pieces:
        offs.append(row)
        row += _round8(a.shape[0])
    slab = jnp.zeros((_round8(row), width), jnp.float32)
    for a, off in zip(pieces, offs):
        slab = slab.at[off:off + a.shape[0], :a.shape[1]].set(a.astype(jnp.float32))
    return slab, tuple(offs)


# ---------------------------------------------------------------------------
# Pallas kernel: dynamic branch + static branch + mlp head (one batch per grid step)
# ---------------------------------------------------------------------------
def _combined_colar_kernel(x_ref, wbig_ref, misc_ref, w5_ref, sstat_ref, out_ref,
                           *, C, NS, NOUT, OW, O5, OS):
    f32 = jnp.float32
    _, T, Cin = x_ref.shape
    x2 = x_ref[...].reshape(T, Cin)                         # (T, Cin)

    def mm(a, b):
        return jnp.dot(a, b, preferred_element_type=f32)

    # ---- slab views (static, 8-row-aligned offsets, lane start 0: no relayouts) ----
    wkv1 = wbig_ref[OW[0]:OW[0] + Cin, :]                   # (Cin, 2C), columns = [v | k]
    wkvs = wbig_ref[OW[1]:OW[1] + Cin, :]                   # (Cin, 2C)
    w2   = wbig_ref[OW[2]:OW[2] + 3 * C, :]                 # (3C, 2C), rows = [prev; cur; next]

    misc = misc_ref[...]                                    # (16, >=128)
    bkv1, bkv2, bkvs = misc[0:1, :2 * C], misc[1:2, :2 * C], misc[2:3, :2 * C]
    inv_e   = misc[3:4, 0:NS]
    ev_gate = misc[4:5, 0:NS]
    b31  = misc[5:6, 0:NOUT]
    b21  = misc[6:7, 0:NOUT]
    bh   = misc[7:8, 0:NOUT]
    b21w = misc[8:9, 0:1]

    w31  = w5_ref[O5[0]:O5[0] + C, :]                       # (C, 5)
    w21v = w5_ref[O5[1]:O5[1] + C, :]
    w21f = w5_ref[O5[2]:O5[2] + C, :]
    whd  = w5_ref[O5[3]:O5[3] + NOUT, :]                    # (5, 5)
    whs  = w5_ref[O5[4]:O5[4] + NOUT, :]

    ektp = sstat_ref[OS[0]:OS[0] + 2 * C, 0:NS]             # (2C, NS), zero rows for the v half
    evt  = sstat_ref[OS[1]:OS[1] + NS, 0:C]                 # (NS, C)
    mmt  = sstat_ref[OS[2]:OS[2] + NS, 0:NS]                # (NS, NS) block-diag ones = M @ M.T
    m    = sstat_ref[OS[3]:OS[3] + NS, 0:NOUT]              # (NS, 5)
    mt   = sstat_ref[OS[4]:OS[4] + NOUT, 0:NS]              # (5, NS)

    # --------------------------- dynamic branch ---------------------------
    def attend(kv):
        """Cosine-similarity attention vs. the last time step on the fused [v | k] tile
        (v = lanes [0,C), k = lanes [C,2C)); k-side reductions via lane mask."""
        lane = lax.broadcasted_iota(jnp.int32, kv.shape, 1)
        kk = jnp.where(lane >= C, kv, 0.0)                                   # (T, 2C)
        kk_last = kk[T - 1:T, :]                                             # (1, 2C)
        num = jnp.sum(kk * kk_last, axis=-1, keepdims=True)                  # (T, 1)
        inv_n  = lax.rsqrt(jnp.maximum(jnp.sum(kk * kk, -1, keepdims=True), EPS * EPS))
        inv_nl = lax.rsqrt(jnp.maximum(jnp.sum(kk_last * kk_last, -1, keepdims=True),
                                       EPS * EPS))
        sim = num * inv_n * inv_nl                                           # in [-1, 1]
        e = jnp.exp(sim)                                                     # bounded -> no max-sub
        w = e * pl.reciprocal(jnp.sum(e, axis=0, keepdims=True), approx=True)
        v = kv[:, :C]                                                        # lane-0 slice: free
        y_sum = jnp.sum(v * w, axis=0, keepdims=True)                        # (1, C)
        tpos = lax.broadcasted_iota(jnp.int32, v.shape, 0)
        out = v + jnp.where(tpos == T - 1, y_sum, 0.0)                       # masked add, no concat
        return jnp.maximum(out, 0.0)

    # layer 1: fused v/k 1x1 conv -> one lane-dense (T, 2C) matmul
    kv1 = mm(x2, wkv1) + bkv1                                                # (T, 2C)
    feat1 = attend(kv1)                                                      # (T, C)

    # layer 2: 3-tap conv (padding=1) as ONE matmul on a (T, 3C) lhs
    tpos = lax.broadcasted_iota(jnp.int32, feat1.shape, 0)
    f_prev = jnp.where(tpos == 0, 0.0, pltpu.roll(feat1, shift=1, axis=0))
    f_next = jnp.where(tpos == T - 1, 0.0, pltpu.roll(feat1, shift=T - 1, axis=0))
    lhs = jnp.concatenate([f_prev, feat1, f_next], axis=-1)                  # (T, 3C)
    kv2 = mm(lhs, w2) + bkv2                                                 # (T, 2C)
    feat2 = attend(kv2)                                                      # (T, C)

    dyn = mm(feat2, w31) + b31                                               # (T, 5)
    out_ref[:, 0:T, :] = dyn[None]
    dyn_last = dyn[T - 1:T, :]                                               # (1, 5)

    # --------------------------- static branch ---------------------------
    x_last = x2[T - 1:T, :]                                                  # (1, Cin)
    kvs = mm(x_last, wkvs) + bkvs                                            # (1, 2C) = [v | k]
    lane2 = lax.broadcasted_iota(jnp.int32, kvs.shape, 1)
    ks_sq = jnp.where(lane2 >= C, kvs, 0.0)
    num = mm(kvs, ektp)                                 # ektp has zero rows for v -> k @ Ek^T
    inv_k = lax.rsqrt(jnp.maximum(jnp.sum(ks_sq * ks_sq, -1, keepdims=True), EPS * EPS))
    sim = num * inv_k * inv_e                                                # (1, NS), in [-1, 1]

    # per-class (segmented) softmax over the whole row via block-diagonal MMt
    e = jnp.exp(sim)
    w = e * pl.reciprocal(mm(e, mmt), approx=True)                           # (1, NS)

    gate_raw = mm(w * ev_gate, m) + b21w                                     # (1, 5)
    gate = pl.reciprocal(1.0 + jnp.exp(-gate_raw), approx=True)              # sigmoid
    w_eff = w * mm(gate, mt)                                                 # (1, NS)
    feat_s = mm(w_eff, evt)                                                  # (1, C)

    vs = kvs[:, :C]                                                          # lane-0 slice: free
    # relu(cat(v, feat)) @ w21 == relu(v) @ w21_v + relu(feat) @ w21_f  (no lane concat)
    stat = (mm(jnp.maximum(vs, 0.0), w21v)
            + mm(jnp.maximum(feat_s, 0.0), w21f) + b21)                      # (1, 5)
    out_ref[:, T:T + 1, :] = stat[None]

    # --------------------------- mlp head ---------------------------
    head = mm(dyn_last, whd) + mm(stat, whs) + bh                            # (1, 5)
    out_ref[:, T + 1:T + 2, :] = head[None]


# ---------------------------------------------------------------------------
# Wrapper: hoists every x-independent computation; packs params into 4 slabs
# ---------------------------------------------------------------------------
@functools.partial(jax.jit, static_argnames=("chennel",))
def combined_colar_forward(x, statics, params, chennel):
    """x: (B, T, Cin); statics: list of 5 (N, Cin) kmeans arrays.
    Returns (head (B,5), dynamic_x (B,5,T), static_x (B,5,1)) like the PyTorch module."""
    f32 = jnp.float32
    x = x.astype(f32)
    B, T, Cin = x.shape
    C = chennel
    n_classes = len(statics)
    n_per = statics[0].shape[0]
    NS = n_classes * n_per
    p = {k: v.astype(f32) for k, v in params.items()}
    NOUT = p["dyn_w31"].shape[0]

    # ---- dynamic branch weights: pre-transpose, fuse [v | k] along output lanes ----
    wkv1 = jnp.concatenate([p["dyn_wv1"].T, p["dyn_wk1"].T], axis=1)          # (Cin, 2C)
    bkv1 = jnp.concatenate([p["dyn_bv1"], p["dyn_bk1"]])[None, :]
    w2 = jnp.concatenate(
        [jnp.concatenate([p["dyn_wv2"][:, :, o].T, p["dyn_wk2"][:, :, o].T], axis=1)
         for o in range(3)], axis=0)                                          # (3C, 2C)
    bkv2 = jnp.concatenate([p["dyn_bv2"], p["dyn_bk2"]])[None, :]
    w31 = p["dyn_w31"].T                                                      # (C, 5)
    b31 = p["dyn_b31"][None, :]

    # ---- static branch: x-independent hoist (Ek, Ev, norms, gate projection, M) ----
    wkvs = jnp.concatenate([p["st_wv"].T, p["st_wk"].T], axis=1)              # (Cin, 2C)
    bkvs = jnp.concatenate([p["st_bv"], p["st_bk"]])[None, :]
    S = jnp.concatenate([s.astype(f32) for s in statics], axis=0)             # (NS, Cin)
    Ek = S @ p["st_wek"].T + p["st_bek"][None, :]                             # (NS, C)
    Ev = S @ p["st_wev"].T + p["st_bev"][None, :]                             # (NS, C)
    ektp = jnp.concatenate([jnp.zeros((C, NS), f32), Ek.T], axis=0)           # (2C, NS)
    inv_e = (1.0 / jnp.maximum(jnp.linalg.norm(Ek, axis=1), EPS))[None, :]    # (1, NS)
    ev_gate = (Ev @ p["st_w21w"][0])[None, :]                                 # (1, NS)
    cls = jnp.repeat(jnp.arange(n_classes), n_per)
    M = (cls[:, None] == jnp.arange(n_classes)[None, :]).astype(f32)          # (NS, 5)
    Mt = M.T
    MMt = M @ Mt                                                              # (NS, NS)
    b21w = p["st_b21w"].reshape(1, 1)
    w21v = p["st_w21"][:, :C].T                                               # (C, 5)
    w21f = p["st_w21"][:, C:].T                                               # (C, 5)
    b21 = p["st_b21"][None, :]

    # ---- mlp head: de-interleave the Flatten((B,5,2)) ordering ----
    whd = p["head_w"][:, 0::2].T                                              # (5, 5)
    whs = p["head_w"][:, 1::2].T
    bh = p["head_b"][None, :]

    # ---- pack everything into a handful of lane-dense slabs (few prologue DMAs) ----
    wbig, OW = _pack_rows([wkv1, wkvs, w2], 2 * C)
    w5, O5 = _pack_rows([w31, w21v, w21f, whd, whs], NOUT)
    sslab, OS = _pack_rows([ektp, Ev, MMt, M, Mt], max(C, NS))
    mw = max(2 * C, NS, 128)
    misc = jnp.zeros((16, mw), f32)
    misc = (misc.at[0, :2 * C].set(bkv1[0])
                .at[1, :2 * C].set(bkv2[0])
                .at[2, :2 * C].set(bkvs[0])
                .at[3, :NS].set(inv_e[0])
                .at[4, :NS].set(ev_gate[0])
                .at[5, :NOUT].set(b31[0])
                .at[6, :NOUT].set(b21[0])
                .at[7, :NOUT].set(bh[0])
                .at[8, 0].set(b21w[0, 0]))

    kernel = functools.partial(_combined_colar_kernel, C=C, NS=NS, NOUT=NOUT,
                               OW=OW, O5=O5, OS=OS)
    out = pl.pallas_call(
        kernel,
        out_shape=jax.ShapeDtypeStruct((B, T + 2, NOUT), f32),
        grid=(B,),
        in_specs=[
            pl.BlockSpec((1, T, Cin), lambda b: (b, 0, 0)),
            pl.BlockSpec(wbig.shape, lambda b: (0, 0)),
            pl.BlockSpec(misc.shape, lambda b: (0, 0)),
            pl.BlockSpec(w5.shape, lambda b: (0, 0)),
            pl.BlockSpec(sslab.shape, lambda b: (0, 0)),
        ],
        out_specs=pl.BlockSpec((1, T + 2, NOUT), lambda b: (b, 0, 0)),
        compiler_params=pltpu.CompilerParams(dimension_semantics=("parallel",)),
    )(x, wbig, misc, w5, sslab)

    dyn = out[:, :T, :]                             # (B, T, 5)
    stat = out[:, T, :]                             # (B, 5)
    head = out[:, T + 1, :]                         # (B, 5)
    dynamic_x = jnp.transpose(dyn, (0, 2, 1))       # (B, 5, T) like PyTorch NCW
    static_x = stat[:, :, None]                     # (B, 5, 1)
    return head, dynamic_x, static_x


# ---------------------------------------------------------------------------
# Pure-JAX reference mirroring the PyTorch forward (silent sanity check)
# ---------------------------------------------------------------------------
def _reference_forward(x, statics, p):
    f32 = jnp.float32
    x = x.astype(f32)
    B, T, Cin = x.shape
    xt = jnp.transpose(x, (0, 2, 1))                            # (B, Cin, T)

    def conv1(w, b, inp):                                       # 1x1 conv, NCW
        return jnp.einsum("oi,biw->bow", w, inp) + b[None, :, None]

    def conv3(w, b, inp):                                       # 3-wide conv, padding=1
        pad = jnp.pad(inp, ((0, 0), (0, 0), (1, 1)))
        out = (jnp.einsum("oi,biw->bow", w[:, :, 0], pad[:, :, :-2])
               + jnp.einsum("oi,biw->bow", w[:, :, 1], pad[:, :, 1:-1])
               + jnp.einsum("oi,biw->bow", w[:, :, 2], pad[:, :, 2:]))
        return out + b[None, :, None]

    def cos_weight(k):
        kl = k[:, :, -1:]
        num = jnp.sum(k * kl, axis=1)
        n1 = jnp.maximum(jnp.linalg.norm(k, axis=1), EPS)
        n2 = jnp.maximum(jnp.linalg.norm(kl, axis=1), EPS)
        return jax.nn.softmax(num / (n1 * n2), axis=-1)         # (B, T)

    def attend_sum(v, w):
        y_sum = jnp.einsum("bct,bt->bc", v, w)[:, :, None]
        last = v[:, :, -1:] + y_sum
        return jnp.concatenate([v[:, :, :-1], last], axis=-1)

    # dynamic branch
    k = conv1(p["dyn_wk1"], p["dyn_bk1"], xt)
    v = conv1(p["dyn_wv1"], p["dyn_bv1"], xt)
    f1 = jnp.maximum(attend_sum(v, cos_weight(k)), 0.0)
    k = conv3(p["dyn_wk2"], p["dyn_bk2"], f1)
    v = conv3(p["dyn_wv2"], p["dyn_bv2"], f1)
    f2 = jnp.maximum(attend_sum(v, cos_weight(k)), 0.0)
    dyn = conv1(p["dyn_w31"], p["dyn_b31"], f2)                 # (B, 5, T)

    # static branch
    xs = xt[:, :, -1:]                                          # (B, Cin, 1)
    ks = conv1(p["st_wk"], p["st_bk"], xs)
    vs = conv1(p["st_wv"], p["st_bv"], xs)
    feats, gates = [], []
    for s in statics:                                           # (N, Cin)
        sf = s.astype(f32).T[None]                              # (1, Cin, N)
        Ek = conv1(p["st_wek"], p["st_bek"], sf)                # (1, C, N)
        Ev = conv1(p["st_wev"], p["st_bev"], sf)
        num = jnp.sum(Ek * ks, axis=1)                          # (B, N)
        n1 = jnp.maximum(jnp.linalg.norm(Ek, axis=1), EPS)      # (1, N)
        n2 = jnp.maximum(jnp.linalg.norm(ks, axis=1), EPS)      # (B, 1)
        w = jax.nn.softmax(num / (n1 * n2), axis=-1)            # (B, N)
        s_i = jnp.einsum("cn,bn->bc", Ev[0], w)                 # (B, C)
        feats.append(s_i)
        gates.append(jnp.sum(p["st_w21w"][0] * s_i, axis=1) + p["st_b21w"][0])
    g = jax.nn.sigmoid(jnp.stack(gates, axis=1))                # (B, 5)
    fE = jnp.stack(feats, axis=-1)                              # (B, C, 5)
    feat = jnp.einsum("bcf,bf->bc", fE, g)                      # (B, C)
    cat = jnp.maximum(jnp.concatenate([vs[:, :, 0], feat], axis=1), 0.0)
    stat = cat @ p["st_w21"].T + p["st_b21"]                    # (B, 5)

    # mlp head
    xcat = jnp.concatenate([dyn[:, :, -1:], stat[:, :, None]], axis=2)   # (B, 5, 2)
    head = xcat.reshape(B, -1) @ p["head_w"].T + p["head_b"]
    return head, dyn, stat[:, :, None]


def _init_params(key, ch_in, ch_out, chennel):
    keys = iter(jax.random.split(key, 24))
    sc = 0.1

    def rnd(shape):
        return sc * jax.random.normal(next(keys), shape, jnp.float32)

    return {
        "dyn_wk1": rnd((chennel, ch_in)), "dyn_bk1": rnd((chennel,)),
        "dyn_wv1": rnd((chennel, ch_in)), "dyn_bv1": rnd((chennel,)),
        "dyn_wk2": rnd((chennel, chennel, 3)), "dyn_bk2": rnd((chennel,)),
        "dyn_wv2": rnd((chennel, chennel, 3)), "dyn_bv2": rnd((chennel,)),
        "dyn_w31": rnd((ch_out, chennel)), "dyn_b31": rnd((ch_out,)),
        "st_wk": rnd((chennel, ch_in)), "st_bk": rnd((chennel,)),
        "st_wv": rnd((chennel, ch_in)), "st_bv": rnd((chennel,)),
        "st_wek": rnd((chennel, ch_in)), "st_bek": rnd((chennel,)),
        "st_wev": rnd((chennel, ch_in)), "st_bev": rnd((chennel,)),
        "st_w21w": rnd((1, chennel)), "st_b21w": rnd((1,)),
        "st_w21": rnd((5, 2 * chennel)), "st_b21": rnd((5,)),
        "head_w": rnd((ch_out, 2 * ch_out)), "head_b": rnd((ch_out,)),
    }


if __name__ == "__main__":
    # ch_out must be 5 for CombinedColar (static branch always emits 5 classes)
    B, T, CH_IN, CHENNEL, CH_OUT, N_CLUSTERS, N_CLASSES = 2, 8, 32, 64, 5, 8, 5

    key = jax.random.PRNGKey(0)
    k_x, k_p, k_s = jax.random.split(key, 3)

    x = jax.random.normal(k_x, (B, T, CH_IN), jnp.float32)
    # synthetic "kmeans" static features (deterministic stand-in for the .npy file)
    s_keys = jax.random.split(k_s, N_CLASSES)
    statics = [jax.random.normal(s_keys[i], (N_CLUSTERS, CH_IN), jnp.float32)
               for i in range(N_CLASSES)]
    params = _init_params(k_p, CH_IN, CH_OUT, CHENNEL)

    head, dyn, stat = jax.block_until_ready(
        combined_colar_forward(x, statics, params, CHENNEL))

    rhead, rdyn, rstat = jax.block_until_ready(_reference_forward(x, statics, params))
    assert head.shape == (B, CH_OUT) and dyn.shape == (B, CH_OUT, T) and stat.shape == (B, CH_OUT, 1)
    # tolerance is slightly looser than rev1: softmax / sigmoid denominators use the EUP
    # approximate reciprocal (pl.reciprocal(approx=True)) per the perf review.
    assert jnp.allclose(dyn, rdyn, rtol=2e-3, atol=2e-3), "dynamic branch mismatch"
    assert jnp.allclose(stat, rstat, rtol=2e-3, atol=2e-3), "static branch mismatch"
    assert jnp.allclose(head, rhead, rtol=2e-3, atol=2e-3), "head mismatch"

    print("KERNEL_OK")
</pallas_src>

<mosaic_0001>
module attributes {stable_mosaic.version = 11 : i64} {
  func.func @_combined_colar_kernel(%arg0: i32, %arg1: memref<1x8x32xf32, #tpu.memory_space<vmem>>, %arg2: memref<256x128xf32, #tpu.memory_space<vmem>>, %arg3: memref<16x128xf32, #tpu.memory_space<vmem>>, %arg4: memref<208x5xf32, #tpu.memory_space<vmem>>, %arg5: memref<256x64xf32, #tpu.memory_space<vmem>>, %arg6: memref<1x10x5xf32, #tpu.memory_space<vmem>>) attributes {dimension_semantics = [#tpu.dimension_semantics<parallel>], iteration_bounds = array<i64: 2>, scalar_prefetch = 0 : i64, scratch_operands = 0 : i64, tpu.core_type = #tpu.core_type<tc>, window_params = [{transform_indices = @transform_0, window_bounds = array<i64: 1, 8, 32>}, {pipeline_mode = #tpu.pipeline_mode<synchronous>, transform_indices = @transform_1, window_bounds = array<i64: 256, 128>}, {pipeline_mode = #tpu.pipeline_mode<synchronous>, transform_indices = @transform_2, window_bounds = array<i64: 16, 128>}, {pipeline_mode = #tpu.pipeline_mode<synchronous>, transform_indices = @transform_3, window_bounds = array<i64: 208, 5>}, {pipeline_mode = #tpu.pipeline_mode<synchronous>, transform_indices = @transform_4, window_bounds = array<i64: 256, 64>}, {transform_indices = @transform_5, window_bounds = array<i64: 1, 10, 5>}]} {
    %c0 = arith.constant 0 : index
    %c0_0 = arith.constant 0 : index
    %c0_1 = arith.constant 0 : index
    %0 = vector.load %arg1[%c0, %c0_0, %c0_1] : memref<1x8x32xf32, #tpu.memory_space<vmem>>, vector<1x8x32xf32>
    %1 = vector.shape_cast %0 : vector<1x8x32xf32> to vector<8x32xf32>
    %c0_2 = arith.constant 0 : index
    %c0_3 = arith.constant 0 : index
    %2 = vector.load %arg2[%c0_2, %c0_3] : memref<256x128xf32, #tpu.memory_space<vmem>>, vector<32x128xf32>
    %c32 = arith.constant 32 : index
    %c0_4 = arith.constant 0 : index
    %3 = vector.load %arg2[%c32, %c0_4] : memref<256x128xf32, #tpu.memory_space<vmem>>, vector<32x128xf32>
    %c64 = arith.constant 64 : index
    %c0_5 = arith.constant 0 : index
    %4 = vector.load %arg2[%c64, %c0_5] : memref<256x128xf32, #tpu.memory_space<vmem>>, vector<192x128xf32>
    %c0_6 = arith.constant 0 : index
    %c0_7 = arith.constant 0 : index
    %5 = vector.load %arg3[%c0_6, %c0_7] : memref<16x128xf32, #tpu.memory_space<vmem>>, vector<16x128xf32>
    %6 = vector.extract_strided_slice %5 {offsets = [0, 0], sizes = [1, 128], strides = [1, 1]} : vector<16x128xf32> to vector<1x128xf32>
    %7 = vector.extract_strided_slice %5 {offsets = [1, 0], sizes = [1, 128], strides = [1, 1]} : vector<16x128xf32> to vector<1x128xf32>
    %8 = vector.extract_strided_slice %5 {offsets = [2, 0], sizes = [1, 128], strides = [1, 1]} : vector<16x128xf32> to vector<1x128xf32>
    %9 = vector.extract_strided_slice %5 {offsets = [3, 0], sizes = [1, 40], strides = [1, 1]} : vector<16x128xf32> to vector<1x40xf32>
    %10 = vector.extract_strided_slice %5 {offsets = [4, 0], sizes = [1, 40], strides = [1, 1]} : vector<16x128xf32> to vector<1x40xf32>
    %11 = vector.extract_strided_slice %5 {offsets = [5, 0], sizes = [1, 5], strides = [1, 1]} : vector<16x128xf32> to vector<1x5xf32>
    %12 = vector.extract_strided_slice %5 {offsets = [6, 0], sizes = [1, 5], strides = [1, 1]} : vector<16x128xf32> to vector<1x5xf32>
    %13 = vector.extract_strided_slice %5 {offsets = [7, 0], sizes = [1, 5], strides = [1, 1]} : vector<16x128xf32> to vector<1x5xf32>
    %14 = vector.extract_strided_slice %5 {offsets = [8, 0], sizes = [1, 1], strides = [1, 1]} : vector<16x128xf32> to vector<1x1xf32>
    %c0_8 = arith.constant 0 : index
    %c0_9 = arith.constant 0 : index
    %15 = vector.load %arg4[%c0_8, %c0_9] : memref<208x5xf32, #tpu.memory_space<vmem>>, vector<64x5xf32>
    %c64_10 = arith.constant 64 : index
    %c0_11 = arith.constant 0 : index
    %16 = vector.load %arg4[%c64_10, %c0_11] : memref<208x5xf32, #tpu.memory_space<vmem>>, vector<64x5xf32>
    %c128 = arith.constant 128 : index
    %c0_12 = arith.constant 0 : index
    %17 = vector.load %arg4[%c128, %c0_12] : memref<208x5xf32, #tpu.memory_space<vmem>>, vector<64x5xf32>
    %c192 = arith.constant 192 : index
    %c0_13 = arith.constant 0 : index
    %18 = vector.load %arg4[%c192, %c0_13] : memref<208x5xf32, #tpu.memory_space<vmem>>, vector<5x5xf32>
    %c200 = arith.constant 200 : index
    %c0_14 = arith.constant 0 : index
    %19 = vector.load %arg4[%c200, %c0_14] : memref<208x5xf32, #tpu.memory_space<vmem>>, vector<5x5xf32>
    %c0_15 = arith.constant 0 : index
    %c0_16 = arith.constant 0 : index
    %20 = vector.load %arg5[%c0_15, %c0_16] : memref<256x64xf32, #tpu.memory_space<vmem>>, vector<128x40xf32>
    %c128_17 = arith.constant 128 : index
    %c0_18 = arith.constant 0 : index
    %21 = vector.load %arg5[%c128_17, %c0_18] : memref<256x64xf32, #tpu.memory_space<vmem>>, vector<40x64xf32>
    %c168 = arith.constant 168 : index
    %c0_19 = arith.constant 0 : index
    %22 = vector.load %arg5[%c168, %c0_19] : memref<256x64xf32, #tpu.memory_space<vmem>>, vector<40x40xf32>
    %c208 = arith.constant 208 : index
    %c0_20 = arith.constant 0 : index
    %23 = vector.load %arg5[%c208, %c0_20] : memref<256x64xf32, #tpu.memory_space<vmem>>, vector<40x5xf32>
    %c248 = arith.constant 248 : index
    %c0_21 = arith.constant 0 : index
    %24 = vector.load %arg5[%c248, %c0_21] : memref<256x64xf32, #tpu.memory_space<vmem>>, vector<5x40xf32>
    %cst = arith.constant dense<0.000000e+00> : vector<8x128xf32>
    %25 = tpu.matmul %1, %2, %cst {dimension_numbers = #tpu.dot_dimension_numbers<[1], [0], [0], [1], [0, 0, 1, 1], [], []>, precision = #tpu.contract_precision<fp32>} : vector<8x32xf32>, vector<32x128xf32>, vector<8x128xf32> -> vector<8x128xf32>
    %26 = vector.broadcast %6 : vector<1x128xf32> to vector<8x128xf32>
    %27 = arith.addf %25, %26 : vector<8x128xf32>
    %28 = tpu.iota {dimensions = array<i32: 1>} : vector<8x128xi32>
    %c64_i32 = arith.constant 64 : i32
    %29 = vector.broadcast %c64_i32 : i32 to vector<8x128xi32>
    %30 = arith.cmpi sge, %28, %29 : vector<8x128xi32>
    %cst_22 = arith.constant 0.000000e+00 : f32
    %31 = vector.broadcast %cst_22 : f32 to vector<8x128xf32>
    %32 = arith.select %30, %27, %31 : vector<8x128xi1>, vector<8x128xf32>
    %33 = vector.extract_strided_slice %32 {offsets = [7, 0], sizes = [1, 128], strides = [1, 1]} : vector<8x128xf32> to vector<1x128xf32>
    %34 = vector.broadcast %33 : vector<1x128xf32> to vector<8x128xf32>
    %35 = arith.mulf %32, %34 : vector<8x128xf32>
    %cst_23 = arith.constant dense<0.000000e+00> : vector<8xf32>
    %36 = vector.multi_reduction <add>, %35, %cst_23 [1] : vector<8x128xf32> to vector<8xf32>
    %37 = vector.shape_cast %36 : vector<8xf32> to vector<8x1xf32>
    %38 = arith.mulf %32, %32 : vector<8x128xf32>
    %cst_24 = arith.constant dense<0.000000e+00> : vector<8xf32>
    %39 = vector.multi_reduction <add>, %38, %cst_24 [1] : vector<8x128xf32> to vector<8xf32>
    %40 = vector.shape_cast %39 : vector<8xf32> to vector<8x1xf32>
    %cst_25 = arith.constant 1.000000e-16 : f32
    %41 = vector.broadcast %cst_25 : f32 to vector<8x1xf32>
    %42 = arith.maximumf %40, %41 : vector<8x1xf32>
    %43 = math.rsqrt %42 : vector<8x1xf32>
    %44 = arith.mulf %33, %33 : vector<1x128xf32>
    %cst_26 = arith.constant dense<0.000000e+00> : vector<1xf32>
    %45 = vector.multi_reduction <add>, %44, %cst_26 [1] : vector<1x128xf32> to vector<1xf32>
    %46 = vector.shape_cast %45 : vector<1xf32> to vector<1x1xf32>
    %cst_27 = arith.constant 1.000000e-16 : f32
    %47 = vector.broadcast %cst_27 : f32 to vector<1x1xf32>
    %48 = arith.maximumf %46, %47 : vector<1x1xf32>
    %49 = math.rsqrt %48 : vector<1x1xf32>
    %50 = arith.mulf %37, %43 : vector<8x1xf32>
    %51 = vector.broadcast %49 : vector<1x1xf32> to vector<8x1xf32>
    %52 = arith.mulf %50, %51 : vector<8x1xf32>
    %53 = math.exp %52 : vector<8x1xf32>
    %cst_28 = arith.constant dense<0.000000e+00> : vector<1xf32>
    %54 = vector.multi_reduction <add>, %53, %cst_28 [0] : vector<8x1xf32> to vector<1xf32>
    %55 = vector.shape_cast %54 : vector<1xf32> to vector<1x1xf32>
    %56 = tpu.reciprocal %55 {approx = true} : vector<1x1xf32> -> vector<1x1xf32>
    %57 = vector.broadcast %56 : vector<1x1xf32> to vector<8x1xf32>
    %58 = arith.mulf %53, %57 : vector<8x1xf32>
    %59 = vector.extract_strided_slice %27 {offsets = [0, 0], sizes = [8, 64], strides = [1, 1]} : vector<8x128xf32> to vector<8x64xf32>
    %60 = vector.broadcast %58 : vector<8x1xf32> to vector<8x64xf32>
    %61 = arith.mulf %59, %60 : vector<8x64xf32>
    %cst_29 = arith.constant dense<0.000000e+00> : vector<64xf32>
    %62 = vector.multi_reduction <add>, %61, %cst_29 [0] : vector<8x64xf32> to vector<64xf32>
    %63 = vector.shape_cast %62 : vector<64xf32> to vector<1x64xf32>
    %64 = tpu.iota {dimensions = array<i32: 0>} : vector<8x64xi32>
    %c7_i32 = arith.constant 7 : i32
    %65 = vector.broadcast %c7_i32 : i32 to vector<8x64xi32>
    %66 = arith.cmpi eq, %64, %65 : vector<8x64xi32>
    %cst_30 = arith.constant 0.000000e+00 : f32
    %67 = vector.shape_cast %63 : vector<1x64xf32> to vector<1x64xf32>
    %68 = vector.broadcast %67 : vector<1x64xf32> to vector<8x64xf32>
    %69 = vector.broadcast %cst_30 : f32 to vector<8x64xf32>
    %70 = arith.select %66, %68, %69 : vector<8x64xi1>, vector<8x64xf32>
    %71 = arith.addf %59, %70 : vector<8x64xf32>
    %cst_31 = arith.constant 0.000000e+00 : f32
    %72 = vector.broadcast %cst_31 : f32 to vector<8x64xf32>
    %73 = arith.maximumf %71, %72 : vector<8x64xf32>
    %74 = tpu.iota {dimensions = array<i32: 0>} : vector<8x64xi32>
    %c0_i32 = arith.constant 0 : i32
    %75 = vector.broadcast %c0_i32 : i32 to vector<8x64xi32>
    %76 = arith.cmpi eq, %74, %75 : vector<8x64xi32>
    %c1_i32 = arith.constant 1 : i32
    %77 = tpu.dynamic_rotate %73 by %c1_i32 dim 0 : vector<8x64xf32>, i32 -> vector<8x64xf32>
    %cst_32 = arith.constant 0.000000e+00 : f32
    %78 = vector.broadcast %cst_32 : f32 to vector<8x64xf32>
    %79 = arith.select %76, %78, %77 : vector<8x64xi1>, vector<8x64xf32>
    %c7_i32_33 = arith.constant 7 : i32
    %80 = vector.broadcast %c7_i32_33 : i32 to vector<8x64xi32>
    %81 = arith.cmpi eq, %74, %80 : vector<8x64xi32>
    %c7_i32_34 = arith.constant 7 : i32
    %82 = tpu.dynamic_rotate %73 by %c7_i32_34 dim 0 : vector<8x64xf32>, i32 -> vector<8x64xf32>
    %cst_35 = arith.constant 0.000000e+00 : f32
    %83 = vector.broadcast %cst_35 : f32 to vector<8x64xf32>
    %84 = arith.select %81, %83, %82 : vector<8x64xi1>, vector<8x64xf32>
    %85 = tpu.concatenate %79, %73, %84 in 1 : vector<8x64xf32>, vector<8x64xf32>, vector<8x64xf32> -> vector<8x192xf32>
    %cst_36 = arith.constant dense<0.000000e+00> : vector<8x128xf32>
    %86 = tpu.matmul %85, %4, %cst_36 {dimension_numbers = #tpu.dot_dimension_numbers<[1], [0], [0], [1], [0, 0, 1, 1], [], []>, precision = #tpu.contract_precision<fp32>} : vector<8x192xf32>, vector<192x128xf32>, vector<8x128xf32> -> vector<8x128xf32>
    %87 = vector.broadcast %7 : vector<1x128xf32> to vector<8x128xf32>
    %88 = arith.addf %86, %87 : vector<8x128xf32>
    %89 = tpu.iota {dimensions = array<i32: 1>} : vector<8x128xi32>
    %c64_i32_37 = arith.constant 64 : i32
    %90 = vector.broadcast %c64_i32_37 : i32 to vector<8x128xi32>
    %91 = arith.cmpi sge, %89, %90 : vector<8x128xi32>
    %cst_38 = arith.constant 0.000000e+00 : f32
    %92 = vector.broadcast %cst_38 : f32 to vector<8x128xf32>
    %93 = arith.select %91, %88, %92 : vector<8x128xi1>, vector<8x128xf32>
    %94 = vector.extract_strided_slice %93 {offsets = [7, 0], sizes = [1, 128], strides = [1, 1]} : vector<8x128xf32> to vector<1x128xf32>
    %95 = vector.broadcast %94 : vector<1x128xf32> to vector<8x128xf32>
    %96 = arith.mulf %93, %95 : vector<8x128xf32>
    %cst_39 = arith.constant dense<0.000000e+00> : vector<8xf32>
    %97 = vector.multi_reduction <add>, %96, %cst_39 [1] : vector<8x128xf32> to vector<8xf32>
    %98 = vector.shape_cast %97 : vector<8xf32> to vector<8x1xf32>
    %99 = arith.mulf %93, %93 : vector<8x128xf32>
    %cst_40 = arith.constant dense<0.000000e+00> : vector<8xf32>
    %100 = vector.multi_reduction <add>, %99, %cst_40 [1] : vector<8x128xf32> to vector<8xf32>
    %101 = vector.shape_cast %100 : vector<8xf32> to vector<8x1xf32>
    %cst_41 = arith.constant 1.000000e-16 : f32
    %102 = vector.broadcast %cst_41 : f32 to vector<8x1xf32>
    %103 = arith.maximumf %101, %102 : vector<8x1xf32>
    %104 = math.rsqrt %103 : vector<8x1xf32>
    %105 = arith.mulf %94, %94 : vector<1x128xf32>
    %cst_42 = arith.constant dense<0.000000e+00> : vector<1xf32>
    %106 = vector.multi_reduction <add>, %105, %cst_42 [1] : vector<1x128xf32> to vector<1xf32>
    %107 = vector.shape_cast %106 : vector<1xf32> to vector<1x1xf32>
    %cst_43 = arith.constant 1.000000e-16 : f32
    %108 = vector.broadcast %cst_43 : f32 to vector<1x1xf32>
    %109 = arith.maximumf %107, %108 : vector<1x1xf32>
    %110 = math.rsqrt %109 : vector<1x1xf32>
    %111 = arith.mulf %98, %104 : vector<8x1xf32>
    %112 = vector.broadcast %110 : vector<1x1xf32> to vector<8x1xf32>
    %113 = arith.mulf %111, %112 : vector<8x1xf32>
    %114 = math.exp %113 : vector<8x1xf32>
    %cst_44 = arith.constant dense<0.000000e+00> : vector<1xf32>
    %115 = vector.multi_reduction <add>, %114, %cst_44 [0] : vector<8x1xf32> to vector<1xf32>
    %116 = vector.shape_cast %115 : vector<1xf32> to vector<1x1xf32>
    %117 = tpu.reciprocal %116 {approx = true} : vector<1x1xf32> -> vector<1x1xf32>
    %118 = vector.broadcast %117 : vector<1x1xf32> to vector<8x1xf32>
    %119 = arith.mulf %114, %118 : vector<8x1xf32>
    %120 = vector.extract_strided_slice %88 {offsets = [0, 0], sizes = [8, 64], strides = [1, 1]} : vector<8x128xf32> to vector<8x64xf32>
    %121 = vector.broadcast %119 : vector<8x1xf32> to vector<8x64xf32>
    %122 = arith.mulf %120, %121 : vector<8x64xf32>
    %cst_45 = arith.constant dense<0.000000e+00> : vector<64xf32>
    %123 = vector.multi_reduction <add>, %122, %cst_45 [0] : vector<8x64xf32> to vector<64xf32>
    %124 = vector.shape_cast %123 : vector<64xf32> to vector<1x64xf32>
    %125 = tpu.iota {dimensions = array<i32: 0>} : vector<8x64xi32>
    %c7_i32_46 = arith.constant 7 : i32
    %126 = vector.broadcast %c7_i32_46 : i32 to vector<8x64xi32>
    %127 = arith.cmpi eq, %125, %126 : vector<8x64xi32>
    %cst_47 = arith.constant 0.000000e+00 : f32
    %128 = vector.shape_cast %124 : vector<1x64xf32> to vector<1x64xf32>
    %129 = vector.broadcast %128 : vector<1x64xf32> to vector<8x64xf32>
    %130 = vector.broadcast %cst_47 : f32 to vector<8x64xf32>
    %131 = arith.select %127, %129, %130 : vector<8x64xi1>, vector<8x64xf32>
    %132 = arith.addf %120, %131 : vector<8x64xf32>
    %cst_48 = arith.constant 0.000000e+00 : f32
    %133 = vector.broadcast %cst_48 : f32 to vector<8x64xf32>
    %134 = arith.maximumf %132, %133 : vector<8x64xf32>
    %cst_49 = arith.constant dense<0.000000e+00> : vector<8x5xf32>
    %135 = tpu.matmul %134, %15, %cst_49 {dimension_numbers = #tpu.dot_dimension_numbers<[1], [0], [0], [1], [0, 0, 1, 1], [], []>, precision = #tpu.contract_precision<fp32>} : vector<8x64xf32>, vector<64x5xf32>, vector<8x5xf32> -> vector<8x5xf32>
    %136 = vector.broadcast %11 : vector<1x5xf32> to vector<8x5xf32>
    %137 = arith.addf %135, %136 : vector<8x5xf32>
    %138 = vector.shape_cast %137 : vector<8x5xf32> to vector<1x8x5xf32>
    %c0_50 = arith.constant 0 : index
    %c0_51 = arith.constant 0 : index
    %c0_52 = arith.constant 0 : index
    %139 = vector.load %arg6[%c0_50, %c0_51, %c0_52] : memref<1x10x5xf32, #tpu.memory_space<vmem>>, vector<1x8x5xf32>
    tpu.vector_store %arg6[%c0_50, %c0_51, %c0_52], %138 {strides = array<i32>} : memref<1x10x5xf32, #tpu.memory_space<vmem>>, vector<1x8x5xf32>,
    %140 = vector.extract_strided_slice %137 {offsets = [7, 0], sizes = [1, 5], strides = [1, 1]} : vector<8x5xf32> to vector<1x5xf32>
    %141 = vector.extract_strided_slice %1 {offsets = [7, 0], sizes = [1, 32], strides = [1, 1]} : vector<8x32xf32> to vector<1x32xf32>
    %cst_53 = arith.constant dense<0.000000e+00> : vector<1x128xf32>
    %142 = tpu.matmul %141, %3, %cst_53 {dimension_numbers = #tpu.dot_dimension_numbers<[1], [0], [0], [1], [0, 0, 1, 1], [], []>, precision = #tpu.contract_precision<fp32>} : vector<1x32xf32>, vector<32x128xf32>, vector<1x128xf32> -> vector<1x128xf32>
    %143 = arith.addf %142, %8 : vector<1x128xf32>
    %144 = tpu.iota {dimensions = array<i32: 1>} : vector<1x128xi32>
    %c64_i32_54 = arith.constant 64 : i32
    %145 = vector.broadcast %c64_i32_54 : i32 to vector<1x128xi32>
    %146 = arith.cmpi sge, %144, %145 : vector<1x128xi32>
    %cst_55 = arith.constant 0.000000e+00 : f32
    %147 = vector.broadcast %cst_55 : f32 to vector<1x128xf32>
    %148 = arith.select %146, %143, %147 : vector<1x128xi1>, vector<1x128xf32>
    %cst_56 = arith.constant dense<0.000000e+00> : vector<1x40xf32>
    %149 = tpu.matmul %143, %20, %cst_56 {dimension_numbers = #tpu.dot_dimension_numbers<[1], [0], [0], [1], [0, 0, 1, 1], [], []>, precision = #tpu.contract_precision<fp32>} : vector<1x128xf32>, vector<128x40xf32>, vector<1x40xf32> -> vector<1x40xf32>
    %150 = arith.mulf %148, %148 : vector<1x128xf32>
    %cst_57 = arith.constant dense<0.000000e+00> : vector<1xf32>
    %151 = vector.multi_reduction <add>, %150, %cst_57 [1] : vector<1x128xf32> to vector<1xf32>
    %152 = vector.shape_cast %151 : vector<1xf32> to vector<1x1xf32>
    %cst_58 = arith.constant 1.000000e-16 : f32
    %153 = vector.broadcast %cst_58 : f32 to vector<1x1xf32>
    %154 = arith.maximumf %152, %153 : vector<1x1xf32>
    %155 = math.rsqrt %154 : vector<1x1xf32>
    %156 = vector.broadcast %155 : vector<1x1xf32> to vector<1x40xf32>
    %157 = arith.mulf %149, %156 : vector<1x40xf32>
    %158 = arith.mulf %157, %9 : vector<1x40xf32>
    %159 = math.exp %158 : vector<1x40xf32>
    %cst_59 = arith.constant dense<0.000000e+00> : vector<1x40xf32>
    %160 = tpu.matmul %159, %22, %cst_59 {dimension_numbers = #tpu.dot_dimension_numbers<[1], [0], [0], [1], [0, 0, 1, 1], [], []>, precision = #tpu.contract_precision<fp32>} : vector<1x40xf32>, vector<40x40xf32>, vector<1x40xf32> -> vector<1x40xf32>
    %161 = tpu.reciprocal %160 {approx = true} : vector<1x40xf32> -> vector<1x40xf32>
    %162 = arith.mulf %159, %161 : vector<1x40xf32>
    %163 = arith.mulf %162, %10 : vector<1x40xf32>
    %cst_60 = arith.constant dense<0.000000e+00> : vector<1x5xf32>
    %164 = tpu.matmul %163, %23, %cst_60 {dimension_numbers = #tpu.dot_dimension_numbers<[1], [0], [0], [1], [0, 0, 1, 1], [], []>, precision = #tpu.contract_precision<fp32>} : vector<1x40xf32>, vector<40x5xf32>, vector<1x5xf32> -> vector<1x5xf32>
    %165 = vector.broadcast %14 : vector<1x1xf32> to vector<1x5xf32>
    %166 = arith.addf %164, %165 : vector<1x5xf32>
    %cst_61 = arith.constant 0.000000e+00 : f32
    %167 = vector.broadcast %cst_61 : f32 to vector<1x5xf32>
    %168 = arith.subf %167, %166 : vector<1x5xf32>
    %169 = math.exp %168 : vector<1x5xf32>
    %cst_62 = arith.constant 1.000000e+00 : f32
    %170 = vector.broadcast %cst_62 : f32 to vector<1x5xf32>
    %171 = arith.addf %170, %169 : vector<1x5xf32>
    %172 = tpu.reciprocal %171 {approx = true} : vector<1x5xf32> -> vector<1x5xf32>
    %cst_63 = arith.constant dense<0.000000e+00> : vector<1x40xf32>
    %173 = tpu.matmul %172, %24, %cst_63 {dimension_numbers = #tpu.dot_dimension_numbers<[1], [0], [0], [1], [0, 0, 1, 1], [], []>, precision = #tpu.contract_precision<fp32>} : vector<1x5xf32>, vector<5x40xf32>, vector<1x40xf32> -> vector<1x40xf32>
    %174 = arith.mulf %162, %173 : vector<1x40xf32>
    %cst_64 = arith.constant dense<0.000000e+00> : vector<1x64xf32>
    %175 = tpu.matmul %174, %21, %cst_64 {dimension_numbers = #tpu.dot_dimension_numbers<[1], [0], [0], [1], [0, 0, 1, 1], [], []>, precision = #tpu.contract_precision<fp32>} : vector<1x40xf32>, vector<40x64xf32>, vector<1x64xf32> -> vector<1x64xf32>
    %176 = vector.extract_strided_slice %143 {offsets = [0, 0], sizes = [1, 64], strides = [1, 1]} : vector<1x128xf32> to vector<1x64xf32>
    %cst_65 = arith.constant 0.000000e+00 : f32
    %177 = vector.broadcast %cst_65 : f32 to vector<1x64xf32>
    %178 = arith.maximumf %176, %177 : vector<1x64xf32>
    %cst_66 = arith.constant dense<0.000000e+00> : vector<1x5xf32>
    %179 = tpu.matmul %178, %16, %cst_66 {dimension_numbers = #tpu.dot_dimension_numbers<[1], [0], [0], [1], [0, 0, 1, 1], [], []>, precision = #tpu.contract_precision<fp32>} : vector<1x64xf32>, vector<64x5xf32>, vector<1x5xf32> -> vector<1x5xf32>
    %cst_67 = arith.constant 0.000000e+00 : f32
    %180 = vector.broadcast %cst_67 : f32 to vector<1x64xf32>
    %181 = arith.maximumf %175, %180 : vector<1x64xf32>
    %cst_68 = arith.constant dense<0.000000e+00> : vector<1x5xf32>
    %182 = tpu.matmul %181, %17, %cst_68 {dimension_numbers = #tpu.dot_dimension_numbers<[1], [0], [0], [1], [0, 0, 1, 1], [], []>, precision = #tpu.contract_precision<fp32>} : vector<1x64xf32>, vector<64x5xf32>, vector<1x5xf32> -> vector<1x5xf32>
    %183 = arith.addf %179, %182 : vector<1x5xf32>
    %184 = arith.addf %183, %12 : vector<1x5xf32>
    %185 = vector.shape_cast %184 : vector<1x5xf32> to vector<1x1x5xf32>
    %c0_69 = arith.constant 0 : index
    %c8 = arith.constant 8 : index
    %c0_70 = arith.constant 0 : index
    %186 = vector.load %arg6[%c0_69, %c8, %c0_70] : memref<1x10x5xf32, #tpu.memory_space<vmem>>, vector<1x1x5xf32>
    tpu.vector_store %arg6[%c0_69, %c8, %c0_70], %185 {strides = array<i32>} : memref<1x10x5xf32, #tpu.memory_space<vmem>>, vector<1x1x5xf32>,
    %cst_71 = arith.constant dense<0.000000e+00> : vector<1x5xf32>
    %187 = tpu.matmul %140, %18, %cst_71 {dimension_numbers = #tpu.dot_dimension_numbers<[1], [0], [0], [1], [0, 0, 1, 1], [], []>, precision = #tpu.contract_precision<fp32>} : vector<1x5xf32>, vector<5x5xf32>, vector<1x5xf32> -> vector<1x5xf32>
    %cst_72 = arith.constant dense<0.000000e+00> : vector<1x5xf32>
    %188 = tpu.matmul %184, %19, %cst_72 {dimension_numbers = #tpu.dot_dimension_numbers<[1], [0], [0], [1], [0, 0, 1, 1], [], []>, precision = #tpu.contract_precision<fp32>} : vector<1x5xf32>, vector<5x5xf32>, vector<1x5xf32> -> vector<1x5xf32>
    %189 = arith.addf %187, %188 : vector<1x5xf32>
    %190 = arith.addf %189, %13 : vector<1x5xf32>
    %191 = vector.shape_cast %190 : vector<1x5xf32> to vector<1x1x5xf32>
    %c0_73 = arith.constant 0 : index
    %c9 = arith.constant 9 : index
    %c0_74 = arith.constant 0 : index
    %192 = vector.load %arg6[%c0_73, %c9, %c0_74] : memref<1x10x5xf32, #tpu.memory_space<vmem>>, vector<1x1x5xf32>
    tpu.vector_store %arg6[%c0_73, %c9, %c0_74], %191 {strides = array<i32>} : memref<1x10x5xf32, #tpu.memory_space<vmem>>, vector<1x1x5xf32>,
    return
  }
  func.func @transform_0(%arg0: i32) -> (i32, i32, i32) {
    %c0_i32 = arith.constant 0 : i32
    %c0_i32_0 = arith.constant 0 : i32
    %c0_i32_1 = arith.constant 0 : i32
    return %arg0, %c0_i32, %c0_i32_0 : i32, i32, i32
  }
  func.func @transform_1(%arg0: i32) -> (i32, i32) {
    %c0_i32 = arith.constant 0 : i32
    %c0_i32_0 = arith.constant 0 : i32
    %c0_i32_1 = arith.constant 0 : i32
    return %c0_i32, %c0_i32_0 : i32, i32
  }
  func.func @transform_2(%arg0: i32) -> (i32, i32) {
    %c0_i32 = arith.constant 0 : i32
    %c0_i32_0 = arith.constant 0 : i32
    %c0_i32_1 = arith.constant 0 : i32
    return %c0_i32, %c0_i32_0 : i32, i32
  }
  func.func @transform_3(%arg0: i32) -> (i32, i32) {
    %c0_i32 = arith.constant 0 : i32
    %c0_i32_0 = arith.constant 0 : i32
    %c0_i32_1 = arith.constant 0 : i32
    return %c0_i32, %c0_i32_0 : i32, i32
  }
  func.func @transform_4(%arg0: i32) -> (i32, i32) {
    %c0_i32 = arith.constant 0 : i32
    %c0_i32_0 = arith.constant 0 : i32
    %c0_i32_1 = arith.constant 0 : i32
    return %c0_i32, %c0_i32_0 : i32, i32
  }
  func.func @transform_5(%arg0: i32) -> (i32, i32, i32) {
    %c0_i32 = arith.constant 0 : i32
    %c0_i32_0 = arith.constant 0 : i32
    %c0_i32_1 = arith.constant 0 : i32
    return %arg0, %c0_i32, %c0_i32_0 : i32, i32, i32
  }
}

</mosaic_0001>

<llo_original>
// kernel: eq.8
$region0: #{eq.8}
  %s0 = inlined_call_operand.vmem [shape: s32[5,8], index: 0, kind: input, shape index: {}]
  %s1 = inlined_call_operand.vmem [shape: s32[40], index: 1, kind: output, shape index: {}]
  $region1: #{eq.8} parent=0
    #allocation0 [shape = 'u8[4096]{0}', space=vmem, size = 0x1000, scoped, tag = 'scoped mem for output reshape']
    %v2 = vld [vmem:[%s0] sm:$0x1]
    %vm3 = vcmask 64512
    %4 = vst.msk [vmem:[#allocation0] sm:$0x1] %vm3, %v2
    %s5 = scalar_lea.vmem %s0, 4
    %v6 = vld [vmem:[%s5] sm:$0x1]
    %7 = vrot.lane.b32.xlu0 %v6, 32
    %v8 = vpop.permute.xlu0 %7
    %vm9 = vcmask 326912
    %10 = vst.msk [vmem:[#allocation0] sm:$0x1] %vm9, %v8
    %s11 = scalar_lea.vmem %s0, 3
    %v12 = vld [vmem:[%s11] sm:$0x1]
    %13 = vrot.lane.b32.xlu0 %v12, 24
    %v14 = vpop.permute.xlu0 %13
    %vm15 = vcmask 261312
    %16 = vst.msk [vmem:[#allocation0] sm:$0x1] %vm15, %v14
    %s17 = scalar_lea.vmem %s0, 2
    %v18 = vld [vmem:[%s17] sm:$0x1]
    %19 = vrot.lane.b32.xlu0 %v18, 16
    %v20 = vpop.permute.xlu0 %19
    %vm21 = vcmask 195712
    %22 = vst.msk [vmem:[#allocation0] sm:$0x1] %vm21, %v20
    %s23 = scalar_lea.vmem %s0, 1
    %v24 = vld [vmem:[%s23] sm:$0x1]
    %25 = vrot.lane.b32.xlu0 %v24, 8
    %v26 = vpop.permute.xlu0 %25
    %vm27 = vcmask 130112
    %28 = vst.msk [vmem:[#allocation0] sm:$0x1] %vm27, %v26
    %s30 = ssub.s32 2, 1
    %v31 = vld [vmem:[#allocation0] sm:%s30]
    %s33 = ssub.s32 2, 1
    %34 = vst [vmem:[%s1] sm:%s33] %v31

// kernel: combined_colar_forward.1
$region0: #{combined_colar_forward.1}
  #allocation0 [shape = 'u32[]', space=smem, size = 0x4, offset = 0x4, fixed_abs, tag = 'smem constant byte address 0x4 - core index']
  #allocation1 [shape = 'u32[72,128]{1,0:T(1,128)}', space=vmem, size = 0x9000, scoped, tag = 'internal scratch']
  %s0 = inlined_call_operand.vmem [shape: f32[2,8,32], index: 0, kind: input, shape index: {}]
  %s1 = inlined_call_operand.vmem [shape: f32[256,128], index: 1, kind: input, shape index: {}]
  %s2 = inlined_call_operand.vmem [shape: f32[16,128], index: 2, kind: input, shape index: {}]
  %s3 = inlined_call_operand.vmem [shape: f32[208,5], index: 3, kind: input, shape index: {}]
  %s4 = inlined_call_operand.vmem [shape: f32[256,64], index: 4, kind: input, shape index: {}]
  %s5 = inlined_call_operand.vmem [shape: f32[2,10,5], index: 5, kind: output, shape index: {}]
  %s6 = sld [smem:[#allocation0]]
  $region53: #{combined_colar_forward.1} parent=0
    _
  %s8 = ssub.s32 1, %s6
  %s9 = scalar_select 0, %s8, %s6
  loop: start=0, step=1, limit=4
  $region2: #{combined_colar_forward.1} parent=0 // loop_pre_header
    _
  $region3: #{combined_colar_forward.1} parent=0 // loop_header
    %s11 = sphi 0, %s15
    %p12 = scmp.ge.s32.totalorder %s11, 4
    %s21 = sphi 0, %s23
    %s24 = sphi 0, %s21
    %s25 = sphi 0, %s24
    %s41 = sphi 0, %s25
    %s45 = sphi 0, %s45
    %s47 = sphi 0, %s45
    %s48 = sphi 0, %s47
    %s62 = sphi 0, %s48
    %s66 = sphi 0, %s66
    %s68 = sphi 0, %s66
    %s69 = sphi 0, %s68
    %s83 = sphi 0, %s69
    %s87 = sphi 0, %s87
    %s89 = sphi 0, %s87
    %s90 = sphi 0, %s89
    %s104 = sphi 0, %s90
    %s108 = sphi 0, %s108
    %s110 = sphi 0, %s108
    %s111 = sphi 0, %s110
    %s125 = sphi 0, %s111
    %s131 = sphi 0, %s133
    %s134 = sphi 0, %s131
    %s135 = sphi 0, %s134
    %s151 = sphi 0, %s135
  $region4: #{combined_colar_forward.1} parent=0 // loop_header_branch
    %14 = sbr.rel (%p12) target = $region8
  $region5: #{combined_colar_forward.1} parent=0 // loop_body
    %s16 = ssub.s32 %s11, 1
    %s17 = ssub.s32 %s11, 2
    %s18 = sadd.s32 %s11, 1
    %s19 = ssub.s32 %s11, %s18
    %p20 = scmp.eq.s32.totalorder %s19, 0
    %s22 = sadd.s32 %s21, 1
    %s23 = scalar_select %p20, %s21, %s22
    %p26 = pneg %p20
    %p27 = scmp.eq.s32.totalorder %s11, 1
    %p28 = por %p26, %p27
    %p29 = scmp.ne.s32.totalorder %s21, %s24
    %p30 = scmp.eq.s32.totalorder %s11, 0
    %p31 = por %p29, %p30
    %p32 = scmp.ne.s32.totalorder %s21, %s24
    %p33 = scmp.eq.s32.totalorder %s16, 1
    %p34 = por %p32, %p33
    %p35 = scmp.ne.s32.totalorder %s24, %s25
    %p36 = scmp.eq.s32.totalorder %s16, 0
    %p37 = por %p35, %p36
    %p38 = scmp.ne.s32.totalorder %s24, %s25
    %p39 = scmp.eq.s32.totalorder %s17, 1
    %p40 = por %p38, %p39
    %p42 = scmp.ne.s32.totalorder %s25, %s41
    %p43 = scmp.eq.s32.totalorder %s17, 0
    %p44 = por %p42, %p43
    %s46 = sadd.s32 %s45, 1
    %p49 = scmp.eq.s32.totalorder %s11, 1
    %p50 = scmp.ne.s32.totalorder %s45, %s47
    %p51 = scmp.eq.s32.totalorder %s11, 0
    %p52 = por %p50, %p51
    %p53 = scmp.ne.s32.totalorder %s45, %s47
    %p54 = scmp.eq.s32.totalorder %s16, 1
    %p55 = por %p53, %p54
    %p56 = scmp.ne.s32.totalorder %s47, %s48
    %p57 = scmp.eq.s32.totalorder %s16, 0
    %p58 = por %p56, %p57
    %p59 = scmp.ne.s32.totalorder %s47, %s48
    %p60 = scmp.eq.s32.totalorder %s17, 1
    %p61 = por %p59, %p60
    %p63 = scmp.ne.s32.totalorder %s48, %s62
    %p64 = scmp.eq.s32.totalorder %s17, 0
    %p65 = por %p63, %p64
    %s67 = sadd.s32 %s66, 1
    %p70 = scmp.eq.s32.totalorder %s11, 1
    %p71 = scmp.ne.s32.totalorder %s66, %s68
    %p72 = scmp.eq.s32.totalorder %s11, 0
    %p73 = por %p71, %p72
    %p74 = scmp.ne.s32.totalorder %s66, %s68
    %p75 = scmp.eq.s32.totalorder %s16, 1
    %p76 = por %p74, %p75
    %p77 = scmp.ne.s32.totalorder %s68, %s69
    %p78 = scmp.eq.s32.totalorder %s16, 0
    %p79 = por %p77, %p78
    %p80 = scmp.ne.s32.totalorder %s68, %s69
    %p81 = scmp.eq.s32.totalorder %s17, 1
    %p82 = por %p80, %p81
    %p84 = scmp.ne.s32.totalorder %s69, %s83
    %p85 = scmp.eq.s32.totalorder %s17, 0
    %p86 = por %p84, %p85
    %s88 = sadd.s32 %s87, 1
    %p91 = scmp.eq.s32.totalorder %s11, 1
    %p92 = scmp.ne.s32.totalorder %s87, %s89
    %p93 = scmp.eq.s32.totalorder %s11, 0
    %p94 = por %p92, %p93
    %p95 = scmp.ne.s32.totalorder %s87, %s89
    %p96 = scmp.eq.s32.totalorder %s16, 1
    %p97 = por %p95, %p96
    %p98 = scmp.ne.s32.totalorder %s89, %s90
    %p99 = scmp.eq.s32.totalorder %s16, 0
    %p100 = por %p98, %p99
    %p101 = scmp.ne.s32.totalorder %s89, %s90
    %p102 = scmp.eq.s32.totalorder %s17, 1
    %p103 = por %p101, %p102
    %p105 = scmp.ne.s32.totalorder %s90, %s104
    %p106 = scmp.eq.s32.totalorder %s17, 0
    %p107 = por %p105, %p106
    %s109 = sadd.s32 %s108, 1
    %p112 = scmp.eq.s32.totalorder %s11, 1
    %p113 = scmp.ne.s32.totalorder %s108, %s110
    %p114 = scmp.eq.s32.totalorder %s11, 0
    %p115 = por %p113, %p114
    %p116 = scmp.ne.s32.totalorder %s108, %s110
    %p117 = scmp.eq.s32.totalorder %s16, 1
    %p118 = por %p116, %p117
    %p119 = scmp.ne.s32.totalorder %s110, %s111
    %p120 = scmp.eq.s32.totalorder %s16, 0
    %p121 = por %p119, %p120
    %p122 = scmp.ne.s32.totalorder %s110, %s111
    %p123 = scmp.eq.s32.totalorder %s17, 1
    %p124 = por %p122, %p123
    %p126 = scmp.ne.s32.totalorder %s111, %s125
    %p127 = scmp.eq.s32.totalorder %s17, 0
    %p128 = por %p126, %p127
    %s129 = ssub.s32 %s11, %s18
    %p130 = scmp.eq.s32.totalorder %s129, 0
    %s132 = sadd.s32 %s131, 1
    %s133 = scalar_select %p130, %s131, %s132
    %p136 = pneg %p130
    %p137 = scmp.eq.s32.totalorder %s11, 1
    %p138 = por %p136, %p137
    %p139 = scmp.ne.s32.totalorder %s131, %s134
    %p140 = scmp.eq.s32.totalorder %s11, 0
    %p141 = por %p139, %p140
    %p142 = scmp.ne.s32.totalorder %s131, %s134
    %p143 = scmp.eq.s32.totalorder %s16, 1
    %p144 = por %p142, %p143
    %p145 = scmp.ne.s32.totalorder %s134, %s135
    %p146 = scmp.eq.s32.totalorder %s16, 0
    %p147 = por %p145, %p146
    %p148 = scmp.ne.s32.totalorder %s134, %s135
    %p149 = scmp.eq.s32.totalorder %s17, 1
    %p150 = por %p148, %p149
    %p152 = scmp.ne.s32.totalorder %s135, %s151
    %p153 = scmp.eq.s32.totalorder %s17, 0
    %p154 = por %p152, %p153
    %p155 = scmp.le.s32.totalorder 1, %s11
    %p156 = scmp.lt.s32.totalorder %s11, 3
    %p157 = pnand %p155, %p156
    %p158 = pneg %p157
    // Predicated region
    $region9: #{combined_colar_forward.1} parent=5 // pred_check
      _
    $region10: #{combined_colar_forward.1} parent=5 // pred_check_branch
      %160 = sbr.rel (%p157) target = $region12
    $region11: #{combined_colar_forward.1} parent=5 // pred_region
      %s161 = ssub.s32 %s11, 1
      // Predicated region
      $region13: #{combined_colar_forward.1} parent=11 // pred_check
        %p162 = pneg %p58
      $region14: #{combined_colar_forward.1} parent=11 // pred_check_branch
        %164 = sbr.rel (%p162) target = $region16
      $region15: #{combined_colar_forward.1} parent=11 // pred_region
        _
      $region16: #{combined_colar_forward.1} parent=11 // pred_fallthru
        _
      // Predicated region
      $region17: #{combined_colar_forward.1} parent=11 // pred_check
        %p165 = pneg %p79
      $region18: #{combined_colar_forward.1} parent=11 // pred_check_branch
        %167 = sbr.rel (%p165) target = $region20
      $region19: #{combined_colar_forward.1} parent=11 // pred_region
        _
      $region20: #{combined_colar_forward.1} parent=11 // pred_fallthru
        _
      // Predicated region
      $region21: #{combined_colar_forward.1} parent=11 // pred_check
        %p168 = pneg %p100
      $region22: #{combined_colar_forward.1} parent=11 // pred_check_branch
        %170 = sbr.rel (%p168) target = $region24
      $region23: #{combined_colar_forward.1} parent=11 // pred_region
        _
      $region24: #{combined_colar_forward.1} parent=11 // pred_fallthru
        _
      // Predicated region
      $region25: #{combined_colar_forward.1} parent=11 // pred_check
        %p171 = pneg %p121
      $region26: #{combined_colar_forward.1} parent=11 // pred_check_branch
        %173 = sbr.rel (%p171) target = $region28
      $region27: #{combined_colar_forward.1} parent=11 // pred_region
        _
      $region28: #{combined_colar_forward.1} parent=11 // pred_fallthru
        _
    $region12: #{combined_colar_forward.1} parent=5 // pred_fallthru
      _
    %p174 = scmp.lt.s32.totalorder %s11, 2
    // Predicated region
    $region29: #{combined_colar_forward.1} parent=5 // pred_check
      %p175 = pneg %p174
    $region30: #{combined_colar_forward.1} parent=5 // pred_check_branch
      %177 = sbr.rel (%p175) target = $region32
    $region31: #{combined_colar_forward.1} parent=5 // pred_region
      // Predicated region
      $region33: #{combined_colar_forward.1} parent=31 // pred_check
        %p178 = pneg %p31
      $region34: #{combined_colar_forward.1} parent=31 // pred_check_branch
        %180 = sbr.rel (%p178) target = $region36
      $region35: #{combined_colar_forward.1} parent=31 // pred_region
        %p181 = scmp.lt.s32.totalorder %s11, 1
        %s182 = scalar_select %p181, %s11, 1
        %s183 = smul.addr %s182, 8
        %s184 = scalar_lea.vmem %s0, %s183
      $region36: #{combined_colar_forward.1} parent=31 // pred_fallthru
        _
    $region32: #{combined_colar_forward.1} parent=5 // pred_fallthru
      _
    %p185 = scmp.le.s32.totalorder 1, %s11
    %p186 = scmp.lt.s32.totalorder %s11, 3
    %p187 = pnand %p185, %p186
    %p188 = pneg %p187
    // Predicated region
    $region37: #{combined_colar_forward.1} parent=5 // pred_check
      _
    $region38: #{combined_colar_forward.1} parent=5 // pred_check_branch
      %190 = sbr.rel (%p187) target = $region40
    $region39: #{combined_colar_forward.1} parent=5 // pred_region
      %s191 = ssub.s32 %s11, 1
      %p192 = scmp.lt.s32.totalorder %s16, 1
      %s193 = scalar_select %p192, %s16, 1
      %s194 = smul.addr %s193, 8
      %s195 = scalar_lea.vmem %s0, %s194
      %p196 = pneg %p37
      %p197 = pneg %p34
      %p198 = pneg %p58
      %p199 = pneg %p55
      %p200 = pneg %p79
      %p201 = pneg %p76
      %p202 = pneg %p100
      %p203 = pneg %p97
      %p204 = pneg %p121
      %p205 = pneg %p118
      %p206 = pneg %p147
      %p207 = pneg %p144
      %p208 = scmp.lt.s32.totalorder %s16, 1
      %s209 = scalar_select %p208, %s16, 1
      %s210 = smul.addr %s209, 2
      %s211 = smul.addr %s210, 8
      %s212 = scalar_lea.vmem %s5, %s211
      %p213 = scmp.lt.s32.totalorder %s16, 1
      %s214 = scalar_select %p213, %s16, 1
      %s215 = smul.addr %s214, 8
      %s216 = scalar_lea.vmem %s0, %s215
      %p217 = scmp.lt.s32.totalorder %s16, 1
      %s218 = scalar_select %p217, %s16, 1
      %s219 = smul.addr %s218, 2
      %s220 = smul.addr %s219, 8
      %s221 = scalar_lea.vmem %s5, %s220
      %v222 = vld [vmem:[%s216] sm:$0xff]
      %v223 = vld [vmem:[%s1] sm:$0xff]
      %v224 = vld [vmem:[%s1 + $0x8] sm:$0xff]
      %v225 = vld [vmem:[%s1 + $0x10] sm:$0xff]
      %v226 = vld [vmem:[%s1 + $0x18] sm:$0xff]
      %v227 = vld [vmem:[%s1 + $0x20] sm:$0xff]
      %v228 = vld [vmem:[%s1 + $0x28] sm:$0xff]
      %v229 = vld [vmem:[%s1 + $0x30] sm:$0xff]
      %v230 = vld [vmem:[%s1 + $0x38] sm:$0xff]
      %v231 = vld [vmem:[%s1 + $0x40] sm:$0xff]
      %v232 = vld [vmem:[%s1 + $0x48] sm:$0xff]
      %v233 = vld [vmem:[%s1 + $0x50] sm:$0xff]
      %v234 = vld [vmem:[%s1 + $0x58] sm:$0xff]
      %v235 = vld [vmem:[%s1 + $0x60] sm:$0xff]
      %v236 = vld [vmem:[%s1 + $0x68] sm:$0xff]
      %v237 = vld [vmem:[%s1 + $0x70] sm:$0xff]
      %v238 = vld [vmem:[%s1 + $0x78] sm:$0xff]
      %v239 = vld [vmem:[%s1 + $0x80] sm:$0xff]
      %v240 = vld [vmem:[%s1 + $0x88] sm:$0xff]
      %v241 = vld [vmem:[%s1 + $0x90] sm:$0xff]
      %v242 = vld [vmem:[%s1 + $0x98] sm:$0xff]
      %v243 = vld [vmem:[%s1 + $0xa0] sm:$0xff]
      %v244 = vld [vmem:[%s1 + $0xa8] sm:$0xff]
      %v245 = vld [vmem:[%s1 + $0xb0] sm:$0xff]
      %v246 = vld [vmem:[%s1 + $0xb8] sm:$0xff]
      %v247 = vld [vmem:[%s1 + $0xc0] sm:$0xff]
      %v248 = vld [vmem:[%s1 + $0xc8] sm:$0xff]
      %v249 = vld [vmem:[%s1 + $0xd0] sm:$0xff]
      %v250 = vld [vmem:[%s1 + $0xd8] sm:$0xff]
      %v251 = vld [vmem:[%s1 + $0xe0] sm:$0xff]
      %v252 = vld [vmem:[%s1 + $0xe8] sm:$0xff]
      %v253 = vld [vmem:[%s1 + $0xf0] sm:$0xff]
      %v254 = vld [vmem:[%s1 + $0xf8] sm:$0xff]
      %v255 = vld [vmem:[%s2] sm:$0xff]
      %v256 = vld [vmem:[%s2 + $0x8] sm:$0xff]
      %v257 = vld [vmem:[%s3] sm:$0xff]
      %v258 = vld [vmem:[%s3 + $0x8] sm:$0xff]
      %v259 = vld [vmem:[%s3 + $0x10] sm:$0xff]
      %v260 = vld [vmem:[%s3 + $0x18] sm:$0xff]
      %v261 = vld [vmem:[%s3 + $0x20] sm:$0xff]
      %v262 = vld [vmem:[%s3 + $0x28] sm:$0xff]
      %v263 = vld [vmem:[%s3 + $0x30] sm:$0xff]
      %v264 = vld [vmem:[%s3 + $0x38] sm:$0xff]
      %v265 = vld [vmem:[%s3 + $0x40] sm:$0xff]
      %v266 = vld [vmem:[%s3 + $0x48] sm:$0xff]
      %v267 = vld [vmem:[%s3 + $0x50] sm:$0xff]
      %v268 = vld [vmem:[%s3 + $0x58] sm:$0xff]
      %v269 = vld [vmem:[%s3 + $0x60] sm:$0xff]
      %v270 = vld [vmem:[%s3 + $0x68] sm:$0xff]
      %v271 = vld [vmem:[%s3 + $0x70] sm:$0xff]
      %v272 = vld [vmem:[%s3 + $0x78] sm:$0xff]
      %v273 = vld [vmem:[%s3 + $0x80] sm:$0xff]
      %v274 = vld [vmem:[%s3 + $0x88] sm:$0xff]
      %v275 = vld [vmem:[%s3 + $0x90] sm:$0xff]
      %v276 = vld [vmem:[%s3 + $0x98] sm:$0xff]
      %v277 = vld [vmem:[%s3 + $0xa0] sm:$0xff]
      %v278 = vld [vmem:[%s3 + $0xa8] sm:$0xff]
      %v279 = vld [vmem:[%s3 + $0xb0] sm:$0xff]
      %v280 = vld [vmem:[%s3 + $0xb8] sm:$0xff]
      %v281 = vld [vmem:[%s3 + $0xc0] sm:$0x1f]
      %v282 = vld [vmem:[%s3 + $0xc8] sm:$0x1f]
      %v283 = vld [vmem:[%s4] sm:$0xff]
      %v284 = vld [vmem:[%s4 + $0x8] sm:$0xff]
      %v285 = vld [vmem:[%s4 + $0x10] sm:$0xff]
      %v286 = vld [vmem:[%s4 + $0x18] sm:$0xff]
      %v287 = vld [vmem:[%s4 + $0x20] sm:$0xff]
      %v288 = vld [vmem:[%s4 + $0x28] sm:$0xff]
      %v289 = vld [vmem:[%s4 + $0x30] sm:$0xff]
      %v290 = vld [vmem:[%s4 + $0x38] sm:$0xff]
      %v291 = vld [vmem:[%s4 + $0x40] sm:$0xff]
      %v292 = vld [vmem:[%s4 + $0x48] sm:$0xff]
      %v293 = vld [vmem:[%s4 + $0x50] sm:$0xff]
      %v294 = vld [vmem:[%s4 + $0x58] sm:$0xff]
      %v295 = vld [vmem:[%s4 + $0x60] sm:$0xff]
      %v296 = vld [vmem:[%s4 + $0x68] sm:$0xff]
      %v297 = vld [vmem:[%s4 + $0x70] sm:$0xff]
      %v298 = vld [vmem:[%s4 + $0x78] sm:$0xff]
      %v299 = vld [vmem:[%s4 + $0x80] sm:$0xff]
      %v300 = vld [vmem:[%s4 + $0x88] sm:$0xff]
      %v301 = vld [vmem:[%s4 + $0x90] sm:$0xff]
      %v302 = vld [vmem:[%s4 + $0x98] sm:$0xff]
      %v303 = vld [vmem:[%s4 + $0xa0] sm:$0xff]
      %v304 = vld [vmem:[%s4 + $0xa8] sm:$0xff]
      %v305 = vld [vmem:[%s4 + $0xb0] sm:$0xff]
      %v306 = vld [vmem:[%s4 + $0xb8] sm:$0xff]
      %v307 = vld [vmem:[%s4 + $0xc0] sm:$0xff]
      %v308 = vld [vmem:[%s4 + $0xc8] sm:$0xff]
      %v309 = vld [vmem:[%s4 + $0xd0] sm:$0xff]
      %v310 = vld [vmem:[%s4 + $0xd8] sm:$0xff]
      %v311 = vld [vmem:[%s4 + $0xe0] sm:$0xff]
      %v312 = vld [vmem:[%s4 + $0xe8] sm:$0xff]
      %v313 = vld [vmem:[%s4 + $0xf0] sm:$0xff]
      %v314 = vld [vmem:[%s4 + $0xf8] sm:$0x1f]
      %v315 = vperm.slane %v255, 0
      %vm316 = vcmask 261120
      %v318 = vsel %vm316, %v222, 0
      %320 = vmatpush.msra.mxu0 0.0
      %321 = vmatpush.msra.mxu0 0.0
      %322 = vmatpush.msra.mxu0 0.0
      %323 = vmatpush.msra.mxu0 0.0
      %324 = vmatpush.msra.mxu0 0.0
      %325 = vmatpush.msra.mxu0 0.0
      %326 = vmatpush.msra.mxu0 0.0
      %327 = vmatpush.msra.mxu0 0.0
      %328 = vmatpush.msra.mxu0 0.0
      %329 = vmatpush.msra.mxu0 0.0
      %330 = vmatpush.msra.mxu0 0.0
      %331 = vmatpush.msra.mxu0 0.0
      %v332 = vand.u32 %v226, 4294901760
      %333 = vmatpush.msra.mxu0 %v332
      %v334 = vand.u32 %v225, 4294901760
      %335 = vmatpush.msra.mxu0 %v334
      %v336 = vand.u32 %v224, 4294901760
      %337 = vmatpush.msra.mxu0 %v336
      %v338 = vand.u32 %v223, 4294901760
      %339 = vmatpush.msra.mxu0 %v338
      %v340 = vand.u32 %v318, 4294901760
      %v341 = vsub.f32 %v318, %v340
      %v342 = vand.u32 %v341, 4294901760
      %v343 = vsub.f32 %v341, %v342
      %v344 = vand.u32 %v343, 4294901760
      %345 = vmatmul.f32.gmra.mxu0 %v344
      %v346 = vpop.f32.mrf.mxu0
      %v347 = vadd.f32 %v315, %v346
      %348 = vdwg.mxu0
      %349 = vmatpush.msra.mxu0 0.0
      %350 = vmatpush.msra.mxu0 0.0
      %351 = vmatpush.msra.mxu0 0.0
      %352 = vmatpush.msra.mxu0 0.0
      %353 = vmatpush.msra.mxu0 0.0
      %354 = vmatpush.msra.mxu0 0.0
      %355 = vmatpush.msra.mxu0 0.0
      %356 = vmatpush.msra.mxu0 0.0
      %357 = vmatpush.msra.mxu0 0.0
      %358 = vmatpush.msra.mxu0 0.0
      %359 = vmatpush.msra.mxu0 0.0
      %360 = vmatpush.msra.mxu0 0.0
      %v361 = vand.u32 %v226, 4294901760
      %v362 = vsub.f32 %v226, %v361
      %v363 = vand.u32 %v362, 4294901760
      %v364 = vsub.f32 %v362, %v363
      %v365 = vand.u32 %v364, 4294901760
      %366 = vmatpush.msra.mxu0 %v365
      %v367 = vand.u32 %v225, 4294901760
      %v368 = vsub.f32 %v225, %v367
      %v369 = vand.u32 %v368, 4294901760
      %v370 = vsub.f32 %v368, %v369
      %v371 = vand.u32 %v370, 4294901760
      %372 = vmatpush.msra.mxu0 %v371
      %v373 = vand.u32 %v224, 4294901760
      %v374 = vsub.f32 %v224, %v373
      %v375 = vand.u32 %v374, 4294901760
      %v376 = vsub.f32 %v374, %v375
      %v377 = vand.u32 %v376, 4294901760
      %378 = vmatpush.msra.mxu0 %v377
      %v379 = vand.u32 %v223, 4294901760
      %v380 = vsub.f32 %v223, %v379
      %v381 = vand.u32 %v380, 4294901760
      %v382 = vsub.f32 %v380, %v381
      %v383 = vand.u32 %v382, 4294901760
      %384 = vmatpush.msra.mxu0 %v383
      %v385 = vand.u32 %v318, 4294901760
      %386 = vmatmul.f32.gmra.mxu0 %v385
      %v387 = vpop.f32.mrf.mxu0
      %v388 = vadd.f32 %v347, %v387
      %389 = vdwg.mxu0
      %390 = vmatpush.msra.mxu0 0.0
      %391 = vmatpush.msra.mxu0 0.0
      %392 = vmatpush.msra.mxu0 0.0
      %393 = vmatpush.msra.mxu0 0.0
      %394 = vmatpush.msra.mxu0 0.0
      %395 = vmatpush.msra.mxu0 0.0
      %396 = vmatpush.msra.mxu0 0.0
      %397 = vmatpush.msra.mxu0 0.0
      %398 = vmatpush.msra.mxu0 0.0
      %399 = vmatpush.msra.mxu0 0.0
      %400 = vmatpush.msra.mxu0 0.0
      %401 = vmatpush.msra.mxu0 0.0
      %v402 = vand.u32 %v226, 4294901760
      %v403 = vsub.f32 %v226, %v402
      %404 = vmatpush.msra.mxu0 %v403
      %v405 = vand.u32 %v225, 4294901760
      %v406 = vsub.f32 %v225, %v405
      %407 = vmatpush.msra.mxu0 %v406
      %v408 = vand.u32 %v224, 4294901760
      %v409 = vsub.f32 %v224, %v408
      %410 = vmatpush.msra.mxu0 %v409
      %v411 = vand.u32 %v223, 4294901760
      %v412 = vsub.f32 %v223, %v411
      %413 = vmatpush.msra.mxu0 %v412
      %v414 = vand.u32 %v318, 4294901760
      %v415 = vsub.f32 %v318, %v414
      %416 = vmatmul.f32.gmra.mxu0 %v415
      %v417 = vpop.f32.mrf.mxu0
      %v418 = vadd.f32 %v388, %v417
      %419 = vdwg.mxu0
      %420 = vmatpush.msra.mxu0 0.0
      %421 = vmatpush.msra.mxu0 0.0
      %422 = vmatpush.msra.mxu0 0.0
      %423 = vmatpush.msra.mxu0 0.0
      %424 = vmatpush.msra.mxu0 0.0
      %425 = vmatpush.msra.mxu0 0.0
      %426 = vmatpush.msra.mxu0 0.0
      %427 = vmatpush.msra.mxu0 0.0
      %428 = vmatpush.msra.mxu0 0.0
      %429 = vmatpush.msra.mxu0 0.0
      %430 = vmatpush.msra.mxu0 0.0
      %431 = vmatpush.msra.mxu0 0.0
      %v432 = vand.u32 %v226, 4294901760
      %433 = vmatpush.msra.mxu0 %v432
      %v434 = vand.u32 %v225, 4294901760
      %435 = vmatpush.msra.mxu0 %v434
      %v436 = vand.u32 %v224, 4294901760
      %437 = vmatpush.msra.mxu0 %v436
      %v438 = vand.u32 %v223, 4294901760
      %439 = vmatpush.msra.mxu0 %v438
      %v440 = vand.u32 %v318, 4294901760
      %v441 = vsub.f32 %v318, %v440
      %v442 = vand.u32 %v441, 4294901760
      %443 = vmatmul.f32.gmra.mxu0 %v442
      %v444 = vpop.f32.mrf.mxu0
      %v445 = vadd.f32 %v418, %v444
      %446 = vdwg.mxu0
      %447 = vmatpush.msra.mxu0 0.0
      %448 = vmatpush.msra.mxu0 0.0
      %449 = vmatpush.msra.mxu0 0.0
      %450 = vmatpush.msra.mxu0 0.0
      %451 = vmatpush.msra.mxu0 0.0
      %452 = vmatpush.msra.mxu0 0.0
      %453 = vmatpush.msra.mxu0 0.0
      %454 = vmatpush.msra.mxu0 0.0
      %455 = vmatpush.msra.mxu0 0.0
      %456 = vmatpush.msra.mxu0 0.0
      %457 = vmatpush.msra.mxu0 0.0
      %458 = vmatpush.msra.mxu0 0.0
      %v459 = vand.u32 %v226, 4294901760
      %v460 = vsub.f32 %v226, %v459
      %v461 = vand.u32 %v460, 4294901760
      %462 = vmatpush.msra.mxu0 %v461
      %v463 = vand.u32 %v225, 4294901760
      %v464 = vsub.f32 %v225, %v463
      %v465 = vand.u32 %v464, 4294901760
      %466 = vmatpush.msra.mxu0 %v465
      %v467 = vand.u32 %v224, 4294901760
      %v468 = vsub.f32 %v224, %v467
      %v469 = vand.u32 %v468, 4294901760
      %470 = vmatpush.msra.mxu0 %v469
      %v471 = vand.u32 %v223, 4294901760
      %v472 = vsub.f32 %v223, %v471
      %v473 = vand.u32 %v472, 4294901760
      %474 = vmatpush.msra.mxu0 %v473
      %v475 = vand.u32 %v318, 4294901760
      %476 = vmatmul.f32.gmra.mxu0 %v475
      %v477 = vpop.f32.mrf.mxu0
      %v478 = vadd.f32 %v445, %v477
      %479 = vdwg.mxu0
      %480 = vmatpush.msra.mxu0 0.0
      %481 = vmatpush.msra.mxu0 0.0
      %482 = vmatpush.msra.mxu0 0.0
      %483 = vmatpush.msra.mxu0 0.0
      %484 = vmatpush.msra.mxu0 0.0
      %485 = vmatpush.msra.mxu0 0.0
      %486 = vmatpush.msra.mxu0 0.0
      %487 = vmatpush.msra.mxu0 0.0
      %488 = vmatpush.msra.mxu0 0.0
      %489 = vmatpush.msra.mxu0 0.0
      %490 = vmatpush.msra.mxu0 0.0
      %491 = vmatpush.msra.mxu0 0.0
      %v492 = vand.u32 %v226, 4294901760
      %493 = vmatpush.msra.mxu0 %v492
      %v494 = vand.u32 %v225, 4294901760
      %495 = vmatpush.msra.mxu0 %v494
      %v496 = vand.u32 %v224, 4294901760
      %497 = vmatpush.msra.mxu0 %v496
      %v498 = vand.u32 %v223, 4294901760
      %499 = vmatpush.msra.mxu0 %v498
      %v500 = vand.u32 %v318, 4294901760
      %501 = vmatmul.f32.gmra.mxu0 %v500
      %v502 = vpop.f32.mrf.mxu0
      %v503 = vadd.f32 %v478, %v502
      %504 = vdwg.mxu0
      %v505 = vlaneseq
      %v506 = vand.u32 %v505, 127
      %vm507 = vcmp.ge.s32.totalorder %v506, 64
      %v508 = vsel %vm507, %v503, 0.0
      %v509 = vperm.slane %v508, 7
      %v510 = vmul.f32 %v508, %v509
      %511 = vadd.xlane.f32.xlu0 %v510
      %v512 = vpop.xlane.xlu0 %511
      %v513 = vmul.f32 %v508, %v508
      %514 = vadd.xlane.f32.xlu0 %v513
      %v515 = vpop.xlane.xlu0 %514
      %v516 = vmax.f32 %v515, 1e-16
      %v517 = vrsqrt.pop %v516
      %v518 = vmul.f32 %v517, %v516
      %v519 = vmul.f32 %v518, %v517
      %v520 = vmul.f32 0.5, %v519
      %v521 = vsub.f32 1.5, %v520
      %v522 = vmul.f32 %v517, %v521
      %vm523 = vweird.f32 %v516
      %vm524 = vweird.f32 %v517
      %vm525 = vmor %vm523, %vm524
      %v526 = vsel %vm525, %v517, %v522
      %vm527 = vcmask 1047559
      %v528 = vsel %vm527, %v513, 0.0
      %529 = vadd.xlane.f32.xlu0 %v528
      %v530 = vpop.xlane.xlu0 %529
      %v531 = vmax.f32 %v530, 1e-16
      %v532 = vrsqrt.pop %v531
      %v533 = vmul.f32 %v532, %v531
      %v534 = vmul.f32 %v533, %v532
      %v535 = vmul.f32 0.5, %v534
      %v536 = vsub.f32 1.5, %v535
      %v537 = vmul.f32 %v532, %v536
      %vm538 = vweird.f32 %v531
      %vm539 = vweird.f32 %v532
      %vm540 = vmor %vm538, %vm539
      %v541 = vsel %vm540, %v532, %v537
      %v542 = vmul.f32 %v512, %v526
      %v543 = vperm.slane %v541, 7
      %v544 = vmul.f32 %v542, %v543
      %v545 = vmul.f32 %v544, 1.442695
      %v546 = vpow.pop %v545
      %v547 = vrot.slane %v546, 4
      %v548 = vadd.f32 %v546, %v547
      %v549 = vrot.slane %v548, 2
      %v550 = vadd.f32 %v548, %v549
      %v551 = vrot.slane %v550, 1
      %v552 = vadd.f32 %v550, %v551
      %v553 = vrcp.pop %v552
      %v554 = vmul.f32 %v546, %v553
      %v555 = vmul.f32 %v503, %v554
      %vm556 = vcmask 523264
      %v557 = vsel %vm556, %v555, 0.0
      %v558 = vrot.slane %v557, 4
      %v559 = vadd.f32 %v557, %v558
      %v560 = vrot.slane %v559, 2
      %v561 = vadd.f32 %v559, %v560
      %v562 = vrot.slane %v561, 1
      %v563 = vadd.f32 %v561, %v562
      %v564 = vlaneseq
      %v565 = vshrl.u32 %v564, 7
      %vm566 = vcmp.eq.s32.totalorder %v565, 7
      %v567 = vsel %vm566, %v563, 0.0
      %v568 = vadd.f32 %v503, %v567
      %v569 = vmax.f32 %v568, 0.0
      %vm570 = vcmp.eq.s32.totalorder %v565, 0
      %v571 = vrot.slane %v569, 7
      %v572 = vsel %vm570, 0.0, %v571
      %v573 = vrot.slane %v569, 1
      %v574 = vsel %vm566, 0.0, %v573
      %576 = vrot.lane.b32.xlu0 %v569, 64
      %v577 = vpop.permute.xlu0 %576
      %v579 = vsel %vm556, %v572, %v577
      %v580 = vperm.slane %v255, 1
      %v582 = vsel %vm556, %v574, 0
      %v584 = vand.u32 %v246, 4294901760
      %585 = vmatpush.msra.mxu0 %v584
      %v586 = vand.u32 %v245, 4294901760
      %587 = vmatpush.msra.mxu0 %v586
      %v588 = vand.u32 %v244, 4294901760
      %589 = vmatpush.msra.mxu0 %v588
      %v590 = vand.u32 %v243, 4294901760
      %591 = vmatpush.msra.mxu0 %v590
      %v592 = vand.u32 %v242, 4294901760
      %593 = vmatpush.msra.mxu0 %v592
      %v594 = vand.u32 %v241, 4294901760
      %595 = vmatpush.msra.mxu0 %v594
      %v596 = vand.u32 %v240, 4294901760
      %597 = vmatpush.msra.mxu0 %v596
      %v598 = vand.u32 %v239, 4294901760
      %599 = vmatpush.msra.mxu0 %v598
      %v600 = vand.u32 %v238, 4294901760
      %601 = vmatpush.msra.mxu0 %v600
      %v602 = vand.u32 %v237, 4294901760
      %603 = vmatpush.msra.mxu0 %v602
      %v604 = vand.u32 %v236, 4294901760
      %605 = vmatpush.msra.mxu0 %v604
      %v606 = vand.u32 %v235, 4294901760
      %607 = vmatpush.msra.mxu0 %v606
      %v608 = vand.u32 %v234, 4294901760
      %609 = vmatpush.msra.mxu0 %v608
      %v610 = vand.u32 %v233, 4294901760
      %611 = vmatpush.msra.mxu0 %v610
      %v612 = vand.u32 %v232, 4294901760
      %613 = vmatpush.msra.mxu0 %v612
      %v614 = vand.u32 %v231, 4294901760
      %615 = vmatpush.msra.mxu0 %v614
      %v616 = vand.u32 %v579, 4294901760
      %v617 = vsub.f32 %v579, %v616
      %v618 = vand.u32 %v617, 4294901760
      %v619 = vsub.f32 %v617, %v618
      %v620 = vand.u32 %v619, 4294901760
      %621 = vmatmul.f32.gmra.mxu0 %v620
      %v622 = vpop.f32.mrf.mxu0
      %v623 = vadd.f32 %v580, %v622
      %624 = vdwg.mxu0
      %v625 = vand.u32 %v246, 4294901760
      %v626 = vsub.f32 %v246, %v625
      %v627 = vand.u32 %v626, 4294901760
      %v628 = vsub.f32 %v626, %v627
      %v629 = vand.u32 %v628, 4294901760
      %630 = vmatpush.msra.mxu0 %v629
      %v631 = vand.u32 %v245, 4294901760
      %v632 = vsub.f32 %v245, %v631
      %v633 = vand.u32 %v632, 4294901760
      %v634 = vsub.f32 %v632, %v633
      %v635 = vand.u32 %v634, 4294901760
      %636 = vmatpush.msra.mxu0 %v635
      %v637 = vand.u32 %v244, 4294901760
      %v638 = vsub.f32 %v244, %v637
      %v639 = vand.u32 %v638, 4294901760
      %v640 = vsub.f32 %v638, %v639
      %v641 = vand.u32 %v640, 4294901760
      %642 = vmatpush.msra.mxu0 %v641
      %v643 = vand.u32 %v243, 4294901760
      %v644 = vsub.f32 %v243, %v643
      %v645 = vand.u32 %v644, 4294901760
      %v646 = vsub.f32 %v644, %v645
      %v647 = vand.u32 %v646, 4294901760
      %648 = vmatpush.msra.mxu0 %v647
      %v649 = vand.u32 %v242, 4294901760
      %v650 = vsub.f32 %v242, %v649
      %v651 = vand.u32 %v650, 4294901760
      %v652 = vsub.f32 %v650, %v651
      %v653 = vand.u32 %v652, 4294901760
      %654 = vmatpush.msra.mxu0 %v653
      %v655 = vand.u32 %v241, 4294901760
      %v656 = vsub.f32 %v241, %v655
      %v657 = vand.u32 %v656, 4294901760
      %v658 = vsub.f32 %v656, %v657
      %v659 = vand.u32 %v658, 4294901760
      %660 = vmatpush.msra.mxu0 %v659
      %v661 = vand.u32 %v240, 4294901760
      %v662 = vsub.f32 %v240, %v661
      %v663 = vand.u32 %v662, 4294901760
      %v664 = vsub.f32 %v662, %v663
      %v665 = vand.u32 %v664, 4294901760
      %666 = vmatpush.msra.mxu0 %v665
      %v667 = vand.u32 %v239, 4294901760
      %v668 = vsub.f32 %v239, %v667
      %v669 = vand.u32 %v668, 4294901760
      %v670 = vsub.f32 %v668, %v669
      %v671 = vand.u32 %v670, 4294901760
      %672 = vmatpush.msra.mxu0 %v671
      %v673 = vand.u32 %v238, 4294901760
      %v674 = vsub.f32 %v238, %v673
      %v675 = vand.u32 %v674, 4294901760
      %v676 = vsub.f32 %v674, %v675
      %v677 = vand.u32 %v676, 4294901760
      %678 = vmatpush.msra.mxu0 %v677
      %v679 = vand.u32 %v237, 4294901760
      %v680 = vsub.f32 %v237, %v679
      %v681 = vand.u32 %v680, 4294901760
      %v682 = vsub.f32 %v680, %v681
      %v683 = vand.u32 %v682, 4294901760
      %684 = vmatpush.msra.mxu0 %v683
      %v685 = vand.u32 %v236, 4294901760
      %v686 = vsub.f32 %v236, %v685
      %v687 = vand.u32 %v686, 4294901760
      %v688 = vsub.f32 %v686, %v687
      %v689 = vand.u32 %v688, 4294901760
      %690 = vmatpush.msra.mxu0 %v689
      %v691 = vand.u32 %v235, 4294901760
      %v692 = vsub.f32 %v235, %v691
      %v693 = vand.u32 %v692, 4294901760
      %v694 = vsub.f32 %v692, %v693
      %v695 = vand.u32 %v694, 4294901760
      %696 = vmatpush.msra.mxu0 %v695
      %v697 = vand.u32 %v234, 4294901760
      %v698 = vsub.f32 %v234, %v697
      %v699 = vand.u32 %v698, 4294901760
      %v700 = vsub.f32 %v698, %v699
      %v701 = vand.u32 %v700, 4294901760
      %702 = vmatpush.msra.mxu0 %v701
      %v703 = vand.u32 %v233, 4294901760
      %v704 = vsub.f32 %v233, %v703
      %v705 = vand.u32 %v704, 4294901760
      %v706 = vsub.f32 %v704, %v705
      %v707 = vand.u32 %v706, 4294901760
      %708 = vmatpush.msra.mxu0 %v707
      %v709 = vand.u32 %v232, 4294901760
      %v710 = vsub.f32 %v232, %v709
      %v711 = vand.u32 %v710, 4294901760
      %v712 = vsub.f32 %v710, %v711
      %v713 = vand.u32 %v712, 4294901760
      %714 = vmatpush.msra.mxu0 %v713
      %v715 = vand.u32 %v231, 4294901760
      %v716 = vsub.f32 %v231, %v715
      %v717 = vand.u32 %v716, 4294901760
      %v718 = vsub.f32 %v716, %v717
      %v719 = vand.u32 %v718, 4294901760
      %720 = vmatpush.msra.mxu0 %v719
      %v721 = vand.u32 %v579, 4294901760
      %722 = vmatmul.f32.gmra.mxu0 %v721
      %v723 = vpop.f32.mrf.mxu0
      %v724 = vadd.f32 %v623, %v723
      %725 = vdwg.mxu0
      %v726 = vand.u32 %v246, 4294901760
      %v727 = vsub.f32 %v246, %v726
      %728 = vmatpush.msra.mxu0 %v727
      %v729 = vand.u32 %v245, 4294901760
      %v730 = vsub.f32 %v245, %v729
      %731 = vmatpush.msra.mxu0 %v730
      %v732 = vand.u32 %v244, 4294901760
      %v733 = vsub.f32 %v244, %v732
      %734 = vmatpush.msra.mxu0 %v733
      %v735 = vand.u32 %v243, 4294901760
      %v736 = vsub.f32 %v243, %v735
      %737 = vmatpush.msra.mxu0 %v736
      %v738 = vand.u32 %v242, 4294901760
      %v739 = vsub.f32 %v242, %v738
      %740 = vmatpush.msra.mxu0 %v739
      %v741 = vand.u32 %v241, 4294901760
      %v742 = vsub.f32 %v241, %v741
      %743 = vmatpush.msra.mxu0 %v742
      %v744 = vand.u32 %v240, 4294901760
      %v745 = vsub.f32 %v240, %v744
      %746 = vmatpush.msra.mxu0 %v745
      %v747 = vand.u32 %v239, 4294901760
      %v748 = vsub.f32 %v239, %v747
      %749 = vmatpush.msra.mxu0 %v748
      %v750 = vand.u32 %v238, 4294901760
      %v751 = vsub.f32 %v238, %v750
      %752 = vmatpush.msra.mxu0 %v751
      %v753 = vand.u32 %v237, 4294901760
      %v754 = vsub.f32 %v237, %v753
      %755 = vmatpush.msra.mxu0 %v754
      %v756 = vand.u32 %v236, 4294901760
      %v757 = vsub.f32 %v236, %v756
      %758 = vmatpush.msra.mxu0 %v757
      %v759 = vand.u32 %v235, 4294901760
      %v760 = vsub.f32 %v235, %v759
      %761 = vmatpush.msra.mxu0 %v760
      %v762 = vand.u32 %v234, 4294901760
      %v763 = vsub.f32 %v234, %v762
      %764 = vmatpush.msra.mxu0 %v763
      %v765 = vand.u32 %v233, 4294901760
      %v766 = vsub.f32 %v233, %v765
      %767 = vmatpush.msra.mxu0 %v766
      %v768 = vand.u32 %v232, 4294901760
      %v769 = vsub.f32 %v232, %v768
      %770 = vmatpush.msra.mxu0 %v769
      %v771 = vand.u32 %v231, 4294901760
      %v772 = vsub.f32 %v231, %v771
      %773 = vmatpush.msra.mxu0 %v772
      %v774 = vand.u32 %v579, 4294901760
      %v775 = vsub.f32 %v579, %v774
      %776 = vmatmul.f32.gmra.mxu0 %v775
      %v777 = vpop.f32.mrf.mxu0
      %v778 = vadd.f32 %v724, %v777
      %779 = vdwg.mxu0
      %v780 = vand.u32 %v246, 4294901760
      %781 = vmatpush.msra.mxu0 %v780
      %v782 = vand.u32 %v245, 4294901760
      %783 = vmatpush.msra.mxu0 %v782
      %v784 = vand.u32 %v244, 4294901760
      %785 = vmatpush.msra.mxu0 %v784
      %v786 = vand.u32 %v243, 4294901760
      %787 = vmatpush.msra.mxu0 %v786
      %v788 = vand.u32 %v242, 4294901760
      %789 = vmatpush.msra.mxu0 %v788
      %v790 = vand.u32 %v241, 4294901760
      %791 = vmatpush.msra.mxu0 %v790
      %v792 = vand.u32 %v240, 4294901760
      %793 = vmatpush.msra.mxu0 %v792
      %v794 = vand.u32 %v239, 4294901760
      %795 = vmatpush.msra.mxu0 %v794
      %v796 = vand.u32 %v238, 4294901760
      %797 = vmatpush.msra.mxu0 %v796
      %v798 = vand.u32 %v237, 4294901760
      %799 = vmatpush.msra.mxu0 %v798
      %v800 = vand.u32 %v236, 4294901760
      %801 = vmatpush.msra.mxu0 %v800
      %v802 = vand.u32 %v235, 4294901760
      %803 = vmatpush.msra.mxu0 %v802
      %v804 = vand.u32 %v234, 4294901760
      %805 = vmatpush.msra.mxu0 %v804
      %v806 = vand.u32 %v233, 4294901760
      %807 = vmatpush.msra.mxu0 %v806
      %v808 = vand.u32 %v232, 4294901760
      %809 = vmatpush.msra.mxu0 %v808
      %v810 = vand.u32 %v231, 4294901760
      %811 = vmatpush.msra.mxu0 %v810
      %v812 = vand.u32 %v579, 4294901760
      %v813 = vsub.f32 %v579, %v812
      %v814 = vand.u32 %v813, 4294901760
      %815 = vmatmul.f32.gmra.mxu0 %v814
      %v816 = vpop.f32.mrf.mxu0
      %v817 = vadd.f32 %v778, %v816
      %818 = vdwg.mxu0
      %v819 = vand.u32 %v246, 4294901760
      %v820 = vsub.f32 %v246, %v819
      %v821 = vand.u32 %v820, 4294901760
      %822 = vmatpush.msra.mxu0 %v821
      %v823 = vand.u32 %v245, 4294901760
      %v824 = vsub.f32 %v245, %v823
      %v825 = vand.u32 %v824, 4294901760
      %826 = vmatpush.msra.mxu0 %v825
      %v827 = vand.u32 %v244, 4294901760
      %v828 = vsub.f32 %v244, %v827
      %v829 = vand.u32 %v828, 4294901760
      %830 = vmatpush.msra.mxu0 %v829
      %v831 = vand.u32 %v243, 4294901760
      %v832 = vsub.f32 %v243, %v831
      %v833 = vand.u32 %v832, 4294901760
      %834 = vmatpush.msra.mxu0 %v833
      %v835 = vand.u32 %v242, 4294901760
      %v836 = vsub.f32 %v242, %v835
      %v837 = vand.u32 %v836, 4294901760
      %838 = vmatpush.msra.mxu0 %v837
      %v839 = vand.u32 %v241, 4294901760
      %v840 = vsub.f32 %v241, %v839
      %v841 = vand.u32 %v840, 4294901760
      %842 = vmatpush.msra.mxu0 %v841
      %v843 = vand.u32 %v240, 4294901760
      %v844 = vsub.f32 %v240, %v843
      %v845 = vand.u32 %v844, 4294901760
      %846 = vmatpush.msra.mxu0 %v845
      %v847 = vand.u32 %v239, 4294901760
      %v848 = vsub.f32 %v239, %v847
      %v849 = vand.u32 %v848, 4294901760
      %850 = vmatpush.msra.mxu0 %v849
      %v851 = vand.u32 %v238, 4294901760
      %v852 = vsub.f32 %v238, %v851
      %v853 = vand.u32 %v852, 4294901760
      %854 = vmatpush.msra.mxu0 %v853
      %v855 = vand.u32 %v237, 4294901760
      %v856 = vsub.f32 %v237, %v855
      %v857 = vand.u32 %v856, 4294901760
      %858 = vmatpush.msra.mxu0 %v857
      %v859 = vand.u32 %v236, 4294901760
      %v860 = vsub.f32 %v236, %v859
      %v861 = vand.u32 %v860, 4294901760
      %862 = vmatpush.msra.mxu0 %v861
      %v863 = vand.u32 %v235, 4294901760
      %v864 = vsub.f32 %v235, %v863
      %v865 = vand.u32 %v864, 4294901760
      %866 = vmatpush.msra.mxu0 %v865
      %v867 = vand.u32 %v234, 4294901760
      %v868 = vsub.f32 %v234, %v867
      %v869 = vand.u32 %v868, 4294901760
      %870 = vmatpush.msra.mxu0 %v869
      %v871 = vand.u32 %v233, 4294901760
      %v872 = vsub.f32 %v233, %v871
      %v873 = vand.u32 %v872, 4294901760
      %874 = vmatpush.msra.mxu0 %v873
      %v875 = vand.u32 %v232, 4294901760
      %v876 = vsub.f32 %v232, %v875
      %v877 = vand.u32 %v876, 4294901760
      %878 = vmatpush.msra.mxu0 %v877
      %v879 = vand.u32 %v231, 4294901760
      %v880 = vsub.f32 %v231, %v879
      %v881 = vand.u32 %v880, 4294901760
      %882 = vmatpush.msra.mxu0 %v881
      %v883 = vand.u32 %v579, 4294901760
      %884 = vmatmul.f32.gmra.mxu0 %v883
      %v885 = vpop.f32.mrf.mxu0
      %v886 = vadd.f32 %v817, %v885
      %887 = vdwg.mxu0
      %v888 = vand.u32 %v246, 4294901760
      %889 = vmatpush.msra.mxu0 %v888
      %v890 = vand.u32 %v245, 4294901760
      %891 = vmatpush.msra.mxu0 %v890
      %v892 = vand.u32 %v244, 4294901760
      %893 = vmatpush.msra.mxu0 %v892
      %v894 = vand.u32 %v243, 4294901760
      %895 = vmatpush.msra.mxu0 %v894
      %v896 = vand.u32 %v242, 4294901760
      %897 = vmatpush.msra.mxu0 %v896
      %v898 = vand.u32 %v241, 4294901760
      %899 = vmatpush.msra.mxu0 %v898
      %v900 = vand.u32 %v240, 4294901760
      %901 = vmatpush.msra.mxu0 %v900
      %v902 = vand.u32 %v239, 4294901760
      %903 = vmatpush.msra.mxu0 %v902
      %v904 = vand.u32 %v238, 4294901760
      %905 = vmatpush.msra.mxu0 %v904
      %v906 = vand.u32 %v237, 4294901760
      %907 = vmatpush.msra.mxu0 %v906
      %v908 = vand.u32 %v236, 4294901760
      %909 = vmatpush.msra.mxu0 %v908
      %v910 = vand.u32 %v235, 4294901760
      %911 = vmatpush.msra.mxu0 %v910
      %v912 = vand.u32 %v234, 4294901760
      %913 = vmatpush.msra.mxu0 %v912
      %v914 = vand.u32 %v233, 4294901760
      %915 = vmatpush.msra.mxu0 %v914
      %v916 = vand.u32 %v232, 4294901760
      %917 = vmatpush.msra.mxu0 %v916
      %v918 = vand.u32 %v231, 4294901760
      %919 = vmatpush.msra.mxu0 %v918
      %v920 = vand.u32 %v579, 4294901760
      %921 = vmatmul.f32.gmra.mxu0 %v920
      %v922 = vpop.f32.mrf.mxu0
      %v923 = vadd.f32 %v886, %v922
      %924 = vdwg.mxu0
      %925 = vmatpush.msra.mxu0 0.0
      %926 = vmatpush.msra.mxu0 0.0
      %927 = vmatpush.msra.mxu0 0.0
      %928 = vmatpush.msra.mxu0 0.0
      %929 = vmatpush.msra.mxu0 0.0
      %930 = vmatpush.msra.mxu0 0.0
      %931 = vmatpush.msra.mxu0 0.0
      %932 = vmatpush.msra.mxu0 0.0
      %v933 = vand.u32 %v254, 4294901760
      %934 = vmatpush.msra.mxu0 %v933
      %v935 = vand.u32 %v253, 4294901760
      %936 = vmatpush.msra.mxu0 %v935
      %v937 = vand.u32 %v252, 4294901760
      %938 = vmatpush.msra.mxu0 %v937
      %v939 = vand.u32 %v251, 4294901760
      %940 = vmatpush.msra.mxu0 %v939
      %v941 = vand.u32 %v250, 4294901760
      %942 = vmatpush.msra.mxu0 %v941
      %v943 = vand.u32 %v249, 4294901760
      %944 = vmatpush.msra.mxu0 %v943
      %v945 = vand.u32 %v248, 4294901760
      %946 = vmatpush.msra.mxu0 %v945
      %v947 = vand.u32 %v247, 4294901760
      %948 = vmatpush.msra.mxu0 %v947
      %v949 = vand.u32 %v582, 4294901760
      %v950 = vsub.f32 %v582, %v949
      %v951 = vand.u32 %v950, 4294901760
      %v952 = vsub.f32 %v950, %v951
      %v953 = vand.u32 %v952, 4294901760
      %954 = vmatmul.f32.gmra.mxu0 %v953
      %v955 = vpop.f32.mrf.mxu0
      %v956 = vadd.f32 %v923, %v955
      %957 = vdwg.mxu0
      %958 = vmatpush.msra.mxu0 0.0
      %959 = vmatpush.msra.mxu0 0.0
      %960 = vmatpush.msra.mxu0 0.0
      %961 = vmatpush.msra.mxu0 0.0
      %962 = vmatpush.msra.mxu0 0.0
      %963 = vmatpush.msra.mxu0 0.0
      %964 = vmatpush.msra.mxu0 0.0
      %965 = vmatpush.msra.mxu0 0.0
      %v966 = vand.u32 %v254, 4294901760
      %v967 = vsub.f32 %v254, %v966
      %v968 = vand.u32 %v967, 4294901760
      %v969 = vsub.f32 %v967, %v968
      %v970 = vand.u32 %v969, 4294901760
      %971 = vmatpush.msra.mxu0 %v970
      %v972 = vand.u32 %v253, 4294901760
      %v973 = vsub.f32 %v253, %v972
      %v974 = vand.u32 %v973, 4294901760
      %v975 = vsub.f32 %v973, %v974
      %v976 = vand.u32 %v975, 4294901760
      %977 = vmatpush.msra.mxu0 %v976
      %v978 = vand.u32 %v252, 4294901760
      %v979 = vsub.f32 %v252, %v978
      %v980 = vand.u32 %v979, 4294901760
      %v981 = vsub.f32 %v979, %v980
      %v982 = vand.u32 %v981, 4294901760
      %983 = vmatpush.msra.mxu0 %v982
      %v984 = vand.u32 %v251, 4294901760
      %v985 = vsub.f32 %v251, %v984
      %v986 = vand.u32 %v985, 4294901760
      %v987 = vsub.f32 %v985, %v986
      %v988 = vand.u32 %v987, 4294901760
      %989 = vmatpush.msra.mxu0 %v988
      %v990 = vand.u32 %v250, 4294901760
      %v991 = vsub.f32 %v250, %v990
      %v992 = vand.u32 %v991, 4294901760
      %v993 = vsub.f32 %v991, %v992
      %v994 = vand.u32 %v993, 4294901760
      %995 = vmatpush.msra.mxu0 %v994
      %v996 = vand.u32 %v249, 4294901760
      %v997 = vsub.f32 %v249, %v996
      %v998 = vand.u32 %v997, 4294901760
      %v999 = vsub.f32 %v997, %v998
      %v1000 = vand.u32 %v999, 4294901760
      %1001 = vmatpush.msra.mxu0 %v1000
      %v1002 = vand.u32 %v248, 4294901760
      %v1003 = vsub.f32 %v248, %v1002
      %v1004 = vand.u32 %v1003, 4294901760
      %v1005 = vsub.f32 %v1003, %v1004
      %v1006 = vand.u32 %v1005, 4294901760
      %1007 = vmatpush.msra.mxu0 %v1006
      %v1008 = vand.u32 %v247, 4294901760
      %v1009 = vsub.f32 %v247, %v1008
      %v1010 = vand.u32 %v1009, 4294901760
      %v1011 = vsub.f32 %v1009, %v1010
      %v1012 = vand.u32 %v1011, 4294901760
      %1013 = vmatpush.msra.mxu0 %v1012
      %v1014 = vand.u32 %v582, 4294901760
      %1015 = vmatmul.f32.gmra.mxu0 %v1014
      %v1016 = vpop.f32.mrf.mxu0
      %v1017 = vadd.f32 %v956, %v1016
      %1018 = vdwg.mxu0
      %1019 = vmatpush.msra.mxu0 0.0
      %1020 = vmatpush.msra.mxu0 0.0
      %1021 = vmatpush.msra.mxu0 0.0
      %1022 = vmatpush.msra.mxu0 0.0
      %1023 = vmatpush.msra.mxu0 0.0
      %1024 = vmatpush.msra.mxu0 0.0
      %1025 = vmatpush.msra.mxu0 0.0
      %1026 = vmatpush.msra.mxu0 0.0
      %v1027 = vand.u32 %v254, 4294901760
      %v1028 = vsub.f32 %v254, %v1027
      %1029 = vmatpush.msra.mxu0 %v1028
      %v1030 = vand.u32 %v253, 4294901760
      %v1031 = vsub.f32 %v253, %v1030
      %1032 = vmatpush.msra.mxu0 %v1031
      %v1033 = vand.u32 %v252, 4294901760
      %v1034 = vsub.f32 %v252, %v1033
      %1035 = vmatpush.msra.mxu0 %v1034
      %v1036 = vand.u32 %v251, 4294901760
      %v1037 = vsub.f32 %v251, %v1036
      %1038 = vmatpush.msra.mxu0 %v1037
      %v1039 = vand.u32 %v250, 4294901760
      %v1040 = vsub.f32 %v250, %v1039
      %1041 = vmatpush.msra.mxu0 %v1040
      %v1042 = vand.u32 %v249, 4294901760
      %v1043 = vsub.f32 %v249, %v1042
      %1044 = vmatpush.msra.mxu0 %v1043
      %v1045 = vand.u32 %v248, 4294901760
      %v1046 = vsub.f32 %v248, %v1045
      %1047 = vmatpush.msra.mxu0 %v1046
      %v1048 = vand.u32 %v247, 4294901760
      %v1049 = vsub.f32 %v247, %v1048
      %1050 = vmatpush.msra.mxu0 %v1049
      %v1051 = vand.u32 %v582, 4294901760
      %v1052 = vsub.f32 %v582, %v1051
      %1053 = vmatmul.f32.gmra.mxu0 %v1052
      %v1054 = vpop.f32.mrf.mxu0
      %v1055 = vadd.f32 %v1017, %v1054
      %1056 = vdwg.mxu0
      %1057 = vmatpush.msra.mxu0 0.0
      %1058 = vmatpush.msra.mxu0 0.0
      %1059 = vmatpush.msra.mxu0 0.0
      %1060 = vmatpush.msra.mxu0 0.0
      %1061 = vmatpush.msra.mxu0 0.0
      %1062 = vmatpush.msra.mxu0 0.0
      %1063 = vmatpush.msra.mxu0 0.0
      %1064 = vmatpush.msra.mxu0 0.0
      %v1065 = vand.u32 %v254, 4294901760
      %1066 = vmatpush.msra.mxu0 %v1065
      %v1067 = vand.u32 %v253, 4294901760
      %1068 = vmatpush.msra.mxu0 %v1067
      %v1069 = vand.u32 %v252, 4294901760
      %1070 = vmatpush.msra.mxu0 %v1069
      %v1071 = vand.u32 %v251, 4294901760
      %1072 = vmatpush.msra.mxu0 %v1071
      %v1073 = vand.u32 %v250, 4294901760
      %1074 = vmatpush.msra.mxu0 %v1073
      %v1075 = vand.u32 %v249, 4294901760
      %1076 = vmatpush.msra.mxu0 %v1075
      %v1077 = vand.u32 %v248, 4294901760
      %1078 = vmatpush.msra.mxu0 %v1077
      %v1079 = vand.u32 %v247, 4294901760
      %1080 = vmatpush.msra.mxu0 %v1079
      %v1081 = vand.u32 %v582, 4294901760
      %v1082 = vsub.f32 %v582, %v1081
      %v1083 = vand.u32 %v1082, 4294901760
      %1084 = vmatmul.f32.gmra.mxu0 %v1083
      %v1085 = vpop.f32.mrf.mxu0
      %v1086 = vadd.f32 %v1055, %v1085
      %1087 = vdwg.mxu0
      %1088 = vmatpush.msra.mxu0 0.0
      %1089 = vmatpush.msra.mxu0 0.0
      %1090 = vmatpush.msra.mxu0 0.0
      %1091 = vmatpush.msra.mxu0 0.0
      %1092 = vmatpush.msra.mxu0 0.0
      %1093 = vmatpush.msra.mxu0 0.0
      %1094 = vmatpush.msra.mxu0 0.0
      %1095 = vmatpush.msra.mxu0 0.0
      %v1096 = vand.u32 %v254, 4294901760
      %v1097 = vsub.f32 %v254, %v1096
      %v1098 = vand.u32 %v1097, 4294901760
      %1099 = vmatpush.msra.mxu0 %v1098
      %v1100 = vand.u32 %v253, 4294901760
      %v1101 = vsub.f32 %v253, %v1100
      %v1102 = vand.u32 %v1101, 4294901760
      %1103 = vmatpush.msra.mxu0 %v1102
      %v1104 = vand.u32 %v252, 4294901760
      %v1105 = vsub.f32 %v252, %v1104
      %v1106 = vand.u32 %v1105, 4294901760
      %1107 = vmatpush.msra.mxu0 %v1106
      %v1108 = vand.u32 %v251, 4294901760
      %v1109 = vsub.f32 %v251, %v1108
      %v1110 = vand.u32 %v1109, 4294901760
      %1111 = vmatpush.msra.mxu0 %v1110
      %v1112 = vand.u32 %v250, 4294901760
      %v1113 = vsub.f32 %v250, %v1112
      %v1114 = vand.u32 %v1113, 4294901760
      %1115 = vmatpush.msra.mxu0 %v1114
      %v1116 = vand.u32 %v249, 4294901760
      %v1117 = vsub.f32 %v249, %v1116
      %v1118 = vand.u32 %v1117, 4294901760
      %1119 = vmatpush.msra.mxu0 %v1118
      %v1120 = vand.u32 %v248, 4294901760
      %v1121 = vsub.f32 %v248, %v1120
      %v1122 = vand.u32 %v1121, 4294901760
      %1123 = vmatpush.msra.mxu0 %v1122
      %v1124 = vand.u32 %v247, 4294901760
      %v1125 = vsub.f32 %v247, %v1124
      %v1126 = vand.u32 %v1125, 4294901760
      %1127 = vmatpush.msra.mxu0 %v1126
      %v1128 = vand.u32 %v582, 4294901760
      %1129 = vmatmul.f32.gmra.mxu0 %v1128
      %v1130 = vpop.f32.mrf.mxu0
      %v1131 = vadd.f32 %v1086, %v1130
      %1132 = vdwg.mxu0
      %1133 = vmatpush.msra.mxu0 0.0
      %1134 = vmatpush.msra.mxu0 0.0
      %1135 = vmatpush.msra.mxu0 0.0
      %1136 = vmatpush.msra.mxu0 0.0
      %1137 = vmatpush.msra.mxu0 0.0
      %1138 = vmatpush.msra.mxu0 0.0
      %1139 = vmatpush.msra.mxu0 0.0
      %1140 = vmatpush.msra.mxu0 0.0
      %v1141 = vand.u32 %v254, 4294901760
      %1142 = vmatpush.msra.mxu0 %v1141
      %v1143 = vand.u32 %v253, 4294901760
      %1144 = vmatpush.msra.mxu0 %v1143
      %v1145 = vand.u32 %v252, 4294901760
      %1146 = vmatpush.msra.mxu0 %v1145
      %v1147 = vand.u32 %v251, 4294901760
      %1148 = vmatpush.msra.mxu0 %v1147
      %v1149 = vand.u32 %v250, 4294901760
      %1150 = vmatpush.msra.mxu0 %v1149
      %v1151 = vand.u32 %v249, 4294901760
      %1152 = vmatpush.msra.mxu0 %v1151
      %v1153 = vand.u32 %v248, 4294901760
      %1154 = vmatpush.msra.mxu0 %v1153
      %v1155 = vand.u32 %v247, 4294901760
      %1156 = vmatpush.msra.mxu0 %v1155
      %v1157 = vand.u32 %v582, 4294901760
      %1158 = vmatmul.f32.gmra.mxu0 %v1157
      %v1159 = vpop.f32.mrf.mxu0
      %v1160 = vadd.f32 %v1131, %v1159
      %1161 = vdwg.mxu0
      %v1162 = vsel %vm507, %v1160, 0.0
      %v1163 = vperm.slane %v1162, 7
      %v1164 = vmul.f32 %v1162, %v1163
      %1165 = vadd.xlane.f32.xlu0 %v1164
      %v1166 = vpop.xlane.xlu0 %1165
      %v1167 = vmul.f32 %v1162, %v1162
      %1168 = vadd.xlane.f32.xlu0 %v1167
      %v1169 = vpop.xlane.xlu0 %1168
      %v1170 = vmax.f32 %v1169, 1e-16
      %v1171 = vrsqrt.pop %v1170
      %v1172 = vmul.f32 %v1171, %v1170
      %v1173 = vmul.f32 %v1172, %v1171
      %v1174 = vmul.f32 0.5, %v1173
      %v1175 = vsub.f32 1.5, %v1174
      %v1176 = vmul.f32 %v1171, %v1175
      %vm1177 = vweird.f32 %v1170
      %vm1178 = vweird.f32 %v1171
      %vm1179 = vmor %vm1177, %vm1178
      %v1180 = vsel %vm1179, %v1171, %v1176
      %v1181 = vsel %vm527, %v1167, 0.0
      %1182 = vadd.xlane.f32.xlu0 %v1181
      %v1183 = vpop.xlane.xlu0 %1182
      %v1184 = vmax.f32 %v1183, 1e-16
      %v1185 = vrsqrt.pop %v1184
      %v1186 = vmul.f32 %v1185, %v1184
      %v1187 = vmul.f32 %v1186, %v1185
      %v1188 = vmul.f32 0.5, %v1187
      %v1189 = vsub.f32 1.5, %v1188
      %v1190 = vmul.f32 %v1185, %v1189
      %vm1191 = vweird.f32 %v1184
      %vm1192 = vweird.f32 %v1185
      %vm1193 = vmor %vm1191, %vm1192
      %v1194 = vsel %vm1193, %v1185, %v1190
      %v1195 = vmul.f32 %v1166, %v1180
      %v1196 = vperm.slane %v1194, 7
      %v1197 = vmul.f32 %v1195, %v1196
      %v1198 = vmul.f32 %v1197, 1.442695
      %v1199 = vpow.pop %v1198
      %v1200 = vrot.slane %v1199, 4
      %v1201 = vadd.f32 %v1199, %v1200
      %v1202 = vrot.slane %v1201, 2
      %v1203 = vadd.f32 %v1201, %v1202
      %v1204 = vrot.slane %v1203, 1
      %v1205 = vadd.f32 %v1203, %v1204
      %v1206 = vrcp.pop %v1205
      %v1207 = vmul.f32 %v1199, %v1206
      %v1208 = vmul.f32 %v1160, %v1207
      %v1209 = vsel %vm556, %v1208, 0.0
      %v1210 = vrot.slane %v1209, 4
      %v1211 = vadd.f32 %v1209, %v1210
      %v1212 = vrot.slane %v1211, 2
      %v1213 = vadd.f32 %v1211, %v1212
      %v1214 = vrot.slane %v1213, 1
      %v1215 = vadd.f32 %v1213, %v1214
      %v1216 = vsel %vm566, %v1215, 0.0
      %v1217 = vadd.f32 %v1160, %v1216
      %v1218 = vmax.f32 %v1217, 0.0
      %v1219 = vperm.slane %v255, 5
      %v1221 = vsel %vm556, %v1218, 0
      %1223 = vmatpush.msra.mxu0 0.0
      %1224 = vmatpush.msra.mxu0 0.0
      %1225 = vmatpush.msra.mxu0 0.0
      %1226 = vmatpush.msra.mxu0 0.0
      %1227 = vmatpush.msra.mxu0 0.0
      %1228 = vmatpush.msra.mxu0 0.0
      %1229 = vmatpush.msra.mxu0 0.0
      %1230 = vmatpush.msra.mxu0 0.0
      %v1231 = vand.u32 %v264, 4294901760
      %1232 = vmatpush.msra.mxu0 %v1231
      %v1233 = vand.u32 %v263, 4294901760
      %1234 = vmatpush.msra.mxu0 %v1233
      %v1235 = vand.u32 %v262, 4294901760
      %1236 = vmatpush.msra.mxu0 %v1235
      %v1237 = vand.u32 %v261, 4294901760
      %1238 = vmatpush.msra.mxu0 %v1237
      %v1239 = vand.u32 %v260, 4294901760
      %1240 = vmatpush.msra.mxu0 %v1239
      %v1241 = vand.u32 %v259, 4294901760
      %1242 = vmatpush.msra.mxu0 %v1241
      %v1243 = vand.u32 %v258, 4294901760
      %1244 = vmatpush.msra.mxu0 %v1243
      %v1245 = vand.u32 %v257, 4294901760
      %1246 = vmatpush.msra.mxu0 %v1245
      %v1247 = vand.u32 %v1221, 4294901760
      %v1248 = vsub.f32 %v1221, %v1247
      %v1249 = vand.u32 %v1248, 4294901760
      %v1250 = vsub.f32 %v1248, %v1249
      %v1251 = vand.u32 %v1250, 4294901760
      %1252 = vmatmul.f32.gmra.mxu0 %v1251
      %v1253 = vpop.f32.mrf.mxu0
      %v1254 = vadd.f32 %v1219, %v1253
      %1255 = vdwg.mxu0
      %1256 = vmatpush.msra.mxu0 0.0
      %1257 = vmatpush.msra.mxu0 0.0
      %1258 = vmatpush.msra.mxu0 0.0
      %1259 = vmatpush.msra.mxu0 0.0
      %1260 = vmatpush.msra.mxu0 0.0
      %1261 = vmatpush.msra.mxu0 0.0
      %1262 = vmatpush.msra.mxu0 0.0
      %1263 = vmatpush.msra.mxu0 0.0
      %v1264 = vand.u32 %v264, 4294901760
      %v1265 = vsub.f32 %v264, %v1264
      %v1266 = vand.u32 %v1265, 4294901760
      %v1267 = vsub.f32 %v1265, %v1266
      %v1268 = vand.u32 %v1267, 4294901760
      %1269 = vmatpush.msra.mxu0 %v1268
      %v1270 = vand.u32 %v263, 4294901760
      %v1271 = vsub.f32 %v263, %v1270
      %v1272 = vand.u32 %v1271, 4294901760
      %v1273 = vsub.f32 %v1271, %v1272
      %v1274 = vand.u32 %v1273, 4294901760
      %1275 = vmatpush.msra.mxu0 %v1274
      %v1276 = vand.u32 %v262, 4294901760
      %v1277 = vsub.f32 %v262, %v1276
      %v1278 = vand.u32 %v1277, 4294901760
      %v1279 = vsub.f32 %v1277, %v1278
      %v1280 = vand.u32 %v1279, 4294901760
      %1281 = vmatpush.msra.mxu0 %v1280
      %v1282 = vand.u32 %v261, 4294901760
      %v1283 = vsub.f32 %v261, %v1282
      %v1284 = vand.u32 %v1283, 4294901760
      %v1285 = vsub.f32 %v1283, %v1284
      %v1286 = vand.u32 %v1285, 4294901760
      %1287 = vmatpush.msra.mxu0 %v1286
      %v1288 = vand.u32 %v260, 4294901760
      %v1289 = vsub.f32 %v260, %v1288
      %v1290 = vand.u32 %v1289, 4294901760
      %v1291 = vsub.f32 %v1289, %v1290
      %v1292 = vand.u32 %v1291, 4294901760
      %1293 = vmatpush.msra.mxu0 %v1292
      %v1294 = vand.u32 %v259, 4294901760
      %v1295 = vsub.f32 %v259, %v1294
      %v1296 = vand.u32 %v1295, 4294901760
      %v1297 = vsub.f32 %v1295, %v1296
      %v1298 = vand.u32 %v1297, 4294901760
      %1299 = vmatpush.msra.mxu0 %v1298
      %v1300 = vand.u32 %v258, 4294901760
      %v1301 = vsub.f32 %v258, %v1300
      %v1302 = vand.u32 %v1301, 4294901760
      %v1303 = vsub.f32 %v1301, %v1302
      %v1304 = vand.u32 %v1303, 4294901760
      %1305 = vmatpush.msra.mxu0 %v1304
      %v1306 = vand.u32 %v257, 4294901760
      %v1307 = vsub.f32 %v257, %v1306
      %v1308 = vand.u32 %v1307, 4294901760
      %v1309 = vsub.f32 %v1307, %v1308
      %v1310 = vand.u32 %v1309, 4294901760
      %1311 = vmatpush.msra.mxu0 %v1310
      %v1312 = vand.u32 %v1221, 4294901760
      %1313 = vmatmul.f32.gmra.mxu0 %v1312
      %v1314 = vpop.f32.mrf.mxu0
      %v1315 = vadd.f32 %v1254, %v1314
      %1316 = vdwg.mxu0
      %1317 = vmatpush.msra.mxu0 0.0
      %1318 = vmatpush.msra.mxu0 0.0
      %1319 = vmatpush.msra.mxu0 0.0
      %1320 = vmatpush.msra.mxu0 0.0
      %1321 = vmatpush.msra.mxu0 0.0
      %1322 = vmatpush.msra.mxu0 0.0
      %1323 = vmatpush.msra.mxu0 0.0
      %1324 = vmatpush.msra.mxu0 0.0
      %v1325 = vand.u32 %v264, 4294901760
      %v1326 = vsub.f32 %v264, %v1325
      %1327 = vmatpush.msra.mxu0 %v1326
      %v1328 = vand.u32 %v263, 4294901760
      %v1329 = vsub.f32 %v263, %v1328
      %1330 = vmatpush.msra.mxu0 %v1329
      %v1331 = vand.u32 %v262, 4294901760
      %v1332 = vsub.f32 %v262, %v1331
      %1333 = vmatpush.msra.mxu0 %v1332
      %v1334 = vand.u32 %v261, 4294901760
      %v1335 = vsub.f32 %v261, %v1334
      %1336 = vmatpush.msra.mxu0 %v1335
      %v1337 = vand.u32 %v260, 4294901760
      %v1338 = vsub.f32 %v260, %v1337
      %1339 = vmatpush.msra.mxu0 %v1338
      %v1340 = vand.u32 %v259, 4294901760
      %v1341 = vsub.f32 %v259, %v1340
      %1342 = vmatpush.msra.mxu0 %v1341
      %v1343 = vand.u32 %v258, 4294901760
      %v1344 = vsub.f32 %v258, %v1343
      %1345 = vmatpush.msra.mxu0 %v1344
      %v1346 = vand.u32 %v257, 4294901760
      %v1347 = vsub.f32 %v257, %v1346
      %1348 = vmatpush.msra.mxu0 %v1347
      %v1349 = vand.u32 %v1221, 4294901760
      %v1350 = vsub.f32 %v1221, %v1349
      %1351 = vmatmul.f32.gmra.mxu0 %v1350
      %v1352 = vpop.f32.mrf.mxu0
      %v1353 = vadd.f32 %v1315, %v1352
      %1354 = vdwg.mxu0
      %1355 = vmatpush.msra.mxu0 0.0
      %1356 = vmatpush.msra.mxu0 0.0
      %1357 = vmatpush.msra.mxu0 0.0
      %1358 = vmatpush.msra.mxu0 0.0
      %1359 = vmatpush.msra.mxu0 0.0
      %1360 = vmatpush.msra.mxu0 0.0
      %1361 = vmatpush.msra.mxu0 0.0
      %1362 = vmatpush.msra.mxu0 0.0
      %v1363 = vand.u32 %v264, 4294901760
      %1364 = vmatpush.msra.mxu0 %v1363
      %v1365 = vand.u32 %v263, 4294901760
      %1366 = vmatpush.msra.mxu0 %v1365
      %v1367 = vand.u32 %v262, 4294901760
      %1368 = vmatpush.msra.mxu0 %v1367
      %v1369 = vand.u32 %v261, 4294901760
      %1370 = vmatpush.msra.mxu0 %v1369
      %v1371 = vand.u32 %v260, 4294901760
      %1372 = vmatpush.msra.mxu0 %v1371
      %v1373 = vand.u32 %v259, 4294901760
      %1374 = vmatpush.msra.mxu0 %v1373
      %v1375 = vand.u32 %v258, 4294901760
      %1376 = vmatpush.msra.mxu0 %v1375
      %v1377 = vand.u32 %v257, 4294901760
      %1378 = vmatpush.msra.mxu0 %v1377
      %v1379 = vand.u32 %v1221, 4294901760
      %v1380 = vsub.f32 %v1221, %v1379
      %v1381 = vand.u32 %v1380, 4294901760
      %1382 = vmatmul.f32.gmra.mxu0 %v1381
      %v1383 = vpop.f32.mrf.mxu0
      %v1384 = vadd.f32 %v1353, %v1383
      %1385 = vdwg.mxu0
      %1386 = vmatpush.msra.mxu0 0.0
      %1387 = vmatpush.msra.mxu0 0.0
      %1388 = vmatpush.msra.mxu0 0.0
      %1389 = vmatpush.msra.mxu0 0.0
      %1390 = vmatpush.msra.mxu0 0.0
      %1391 = vmatpush.msra.mxu0 0.0
      %1392 = vmatpush.msra.mxu0 0.0
      %1393 = vmatpush.msra.mxu0 0.0
      %v1394 = vand.u32 %v264, 4294901760
      %v1395 = vsub.f32 %v264, %v1394
      %v1396 = vand.u32 %v1395, 4294901760
      %1397 = vmatpush.msra.mxu0 %v1396
      %v1398 = vand.u32 %v263, 4294901760
      %v1399 = vsub.f32 %v263, %v1398
      %v1400 = vand.u32 %v1399, 4294901760
      %1401 = vmatpush.msra.mxu0 %v1400
      %v1402 = vand.u32 %v262, 4294901760
      %v1403 = vsub.f32 %v262, %v1402
      %v1404 = vand.u32 %v1403, 4294901760
      %1405 = vmatpush.msra.mxu0 %v1404
      %v1406 = vand.u32 %v261, 4294901760
      %v1407 = vsub.f32 %v261, %v1406
      %v1408 = vand.u32 %v1407, 4294901760
      %1409 = vmatpush.msra.mxu0 %v1408
      %v1410 = vand.u32 %v260, 4294901760
      %v1411 = vsub.f32 %v260, %v1410
      %v1412 = vand.u32 %v1411, 4294901760
      %1413 = vmatpush.msra.mxu0 %v1412
      %v1414 = vand.u32 %v259, 4294901760
      %v1415 = vsub.f32 %v259, %v1414
      %v1416 = vand.u32 %v1415, 4294901760
      %1417 = vmatpush.msra.mxu0 %v1416
      %v1418 = vand.u32 %v258, 4294901760
      %v1419 = vsub.f32 %v258, %v1418
      %v1420 = vand.u32 %v1419, 4294901760
      %1421 = vmatpush.msra.mxu0 %v1420
      %v1422 = vand.u32 %v257, 4294901760
      %v1423 = vsub.f32 %v257, %v1422
      %v1424 = vand.u32 %v1423, 4294901760
      %1425 = vmatpush.msra.mxu0 %v1424
      %v1426 = vand.u32 %v1221, 4294901760
      %1427 = vmatmul.f32.gmra.mxu0 %v1426
      %v1428 = vpop.f32.mrf.mxu0
      %v1429 = vadd.f32 %v1384, %v1428
      %1430 = vdwg.mxu0
      %1431 = vmatpush.msra.mxu0 0.0
      %1432 = vmatpush.msra.mxu0 0.0
      %1433 = vmatpush.msra.mxu0 0.0
      %1434 = vmatpush.msra.mxu0 0.0
      %1435 = vmatpush.msra.mxu0 0.0
      %1436 = vmatpush.msra.mxu0 0.0
      %1437 = vmatpush.msra.mxu0 0.0
      %1438 = vmatpush.msra.mxu0 0.0
      %v1439 = vand.u32 %v264, 4294901760
      %1440 = vmatpush.msra.mxu0 %v1439
      %v1441 = vand.u32 %v263, 4294901760
      %1442 = vmatpush.msra.mxu0 %v1441
      %v1443 = vand.u32 %v262, 4294901760
      %1444 = vmatpush.msra.mxu0 %v1443
      %v1445 = vand.u32 %v261, 4294901760
      %1446 = vmatpush.msra.mxu0 %v1445
      %v1447 = vand.u32 %v260, 4294901760
      %1448 = vmatpush.msra.mxu0 %v1447
      %v1449 = vand.u32 %v259, 4294901760
      %1450 = vmatpush.msra.mxu0 %v1449
      %v1451 = vand.u32 %v258, 4294901760
      %1452 = vmatpush.msra.mxu0 %v1451
      %v1453 = vand.u32 %v257, 4294901760
      %1454 = vmatpush.msra.mxu0 %v1453
      %v1455 = vand.u32 %v1221, 4294901760
      %1456 = vmatmul.f32.gmra.mxu0 %v1455
      %v1457 = vpop.f32.mrf.mxu0
      %v1458 = vadd.f32 %v1429, %v1457
      %1459 = vdwg.mxu0
      %vm1460 = vcmask 39936
      %1461 = vst.msk [vmem:[%s221] sm:$0xff] %vm1460, %v1458
      %v1462 = vrot.slane %v222, 7
      %v1464 = vrot.slane %v255, 2
      %v1466 = vsel %vm316, %v1462, 0
      %1468 = vmatpush.msra.mxu0 0.0
      %1469 = vmatpush.msra.mxu0 0.0
      %1470 = vmatpush.msra.mxu0 0.0
      %1471 = vmatpush.msra.mxu0 0.0
      %1472 = vmatpush.msra.mxu0 0.0
      %1473 = vmatpush.msra.mxu0 0.0
      %1474 = vmatpush.msra.mxu0 0.0
      %1475 = vmatpush.msra.mxu0 0.0
      %1476 = vmatpush.msra.mxu0 0.0
      %1477 = vmatpush.msra.mxu0 0.0
      %1478 = vmatpush.msra.mxu0 0.0
      %1479 = vmatpush.msra.mxu0 0.0
      %v1480 = vand.u32 %v230, 4294901760
      %1481 = vmatpush.msra.mxu0 %v1480
      %v1482 = vand.u32 %v229, 4294901760
      %1483 = vmatpush.msra.mxu0 %v1482
      %v1484 = vand.u32 %v228, 4294901760
      %1485 = vmatpush.msra.mxu0 %v1484
      %v1486 = vand.u32 %v227, 4294901760
      %1487 = vmatpush.msra.mxu0 %v1486
      %v1488 = vand.u32 %v1466, 4294901760
      %v1489 = vsub.f32 %v1466, %v1488
      %v1490 = vand.u32 %v1489, 4294901760
      %v1491 = vsub.f32 %v1489, %v1490
      %v1492 = vand.u32 %v1491, 4294901760
      %1493 = vmatmul.f32.gmra.mxu0 %v1492
      %v1494 = vpop.f32.mrf.mxu0
      %v1495 = vadd.f32 %v1464, %v1494
      %1496 = vdwg.mxu0
      %1497 = vmatpush.msra.mxu0 0.0
      %1498 = vmatpush.msra.mxu0 0.0
      %1499 = vmatpush.msra.mxu0 0.0
      %1500 = vmatpush.msra.mxu0 0.0
      %1501 = vmatpush.msra.mxu0 0.0
      %1502 = vmatpush.msra.mxu0 0.0
      %1503 = vmatpush.msra.mxu0 0.0
      %1504 = vmatpush.msra.mxu0 0.0
      %1505 = vmatpush.msra.mxu0 0.0
      %1506 = vmatpush.msra.mxu0 0.0
      %1507 = vmatpush.msra.mxu0 0.0
      %1508 = vmatpush.msra.mxu0 0.0
      %v1509 = vand.u32 %v230, 4294901760
      %v1510 = vsub.f32 %v230, %v1509
      %v1511 = vand.u32 %v1510, 4294901760
      %v1512 = vsub.f32 %v1510, %v1511
      %v1513 = vand.u32 %v1512, 4294901760
      %1514 = vmatpush.msra.mxu0 %v1513
      %v1515 = vand.u32 %v229, 4294901760
      %v1516 = vsub.f32 %v229, %v1515
      %v1517 = vand.u32 %v1516, 4294901760
      %v1518 = vsub.f32 %v1516, %v1517
      %v1519 = vand.u32 %v1518, 4294901760
      %1520 = vmatpush.msra.mxu0 %v1519
      %v1521 = vand.u32 %v228, 4294901760
      %v1522 = vsub.f32 %v228, %v1521
      %v1523 = vand.u32 %v1522, 4294901760
      %v1524 = vsub.f32 %v1522, %v1523
      %v1525 = vand.u32 %v1524, 4294901760
      %1526 = vmatpush.msra.mxu0 %v1525
      %v1527 = vand.u32 %v227, 4294901760
      %v1528 = vsub.f32 %v227, %v1527
      %v1529 = vand.u32 %v1528, 4294901760
      %v1530 = vsub.f32 %v1528, %v1529
      %v1531 = vand.u32 %v1530, 4294901760
      %1532 = vmatpush.msra.mxu0 %v1531
      %v1533 = vand.u32 %v1466, 4294901760
      %1534 = vmatmul.f32.gmra.mxu0 %v1533
      %v1535 = vpop.f32.mrf.mxu0
      %v1536 = vadd.f32 %v1495, %v1535
      %1537 = vdwg.mxu0
      %1538 = vmatpush.msra.mxu0 0.0
      %1539 = vmatpush.msra.mxu0 0.0
      %1540 = vmatpush.msra.mxu0 0.0
      %1541 = vmatpush.msra.mxu0 0.0
      %1542 = vmatpush.msra.mxu0 0.0
      %1543 = vmatpush.msra.mxu0 0.0
      %1544 = vmatpush.msra.mxu0 0.0
      %1545 = vmatpush.msra.mxu0 0.0
      %1546 = vmatpush.msra.mxu0 0.0
      %1547 = vmatpush.msra.mxu0 0.0
      %1548 = vmatpush.msra.mxu0 0.0
      %1549 = vmatpush.msra.mxu0 0.0
      %v1550 = vand.u32 %v230, 4294901760
      %v1551 = vsub.f32 %v230, %v1550
      %1552 = vmatpush.msra.mxu0 %v1551
      %v1553 = vand.u32 %v229, 4294901760
      %v1554 = vsub.f32 %v229, %v1553
      %1555 = vmatpush.msra.mxu0 %v1554
      %v1556 = vand.u32 %v228, 4294901760
      %v1557 = vsub.f32 %v228, %v1556
      %1558 = vmatpush.msra.mxu0 %v1557
      %v1559 = vand.u32 %v227, 4294901760
      %v1560 = vsub.f32 %v227, %v1559
      %1561 = vmatpush.msra.mxu0 %v1560
      %v1562 = vand.u32 %v1466, 4294901760
      %v1563 = vsub.f32 %v1466, %v1562
      %1564 = vmatmul.f32.gmra.mxu0 %v1563
      %v1565 = vpop.f32.mrf.mxu0
      %v1566 = vadd.f32 %v1536, %v1565
      %1567 = vdwg.mxu0
      %1568 = vmatpush.msra.mxu0 0.0
      %1569 = vmatpush.msra.mxu0 0.0
      %1570 = vmatpush.msra.mxu0 0.0
      %1571 = vmatpush.msra.mxu0 0.0
      %1572 = vmatpush.msra.mxu0 0.0
      %1573 = vmatpush.msra.mxu0 0.0
      %1574 = vmatpush.msra.mxu0 0.0
      %1575 = vmatpush.msra.mxu0 0.0
      %1576 = vmatpush.msra.mxu0 0.0
      %1577 = vmatpush.msra.mxu0 0.0
      %1578 = vmatpush.msra.mxu0 0.0
      %1579 = vmatpush.msra.mxu0 0.0
      %v1580 = vand.u32 %v230, 4294901760
      %1581 = vmatpush.msra.mxu0 %v1580
      %v1582 = vand.u32 %v229, 4294901760
      %1583 = vmatpush.msra.mxu0 %v1582
      %v1584 = vand.u32 %v228, 4294901760
      %1585 = vmatpush.msra.mxu0 %v1584
      %v1586 = vand.u32 %v227, 4294901760
      %1587 = vmatpush.msra.mxu0 %v1586
      %v1588 = vand.u32 %v1466, 4294901760
      %v1589 = vsub.f32 %v1466, %v1588
      %v1590 = vand.u32 %v1589, 4294901760
      %1591 = vmatmul.f32.gmra.mxu0 %v1590
      %v1592 = vpop.f32.mrf.mxu0
      %v1593 = vadd.f32 %v1566, %v1592
      %1594 = vdwg.mxu0
      %1595 = vmatpush.msra.mxu0 0.0
      %1596 = vmatpush.msra.mxu0 0.0
      %1597 = vmatpush.msra.mxu0 0.0
      %1598 = vmatpush.msra.mxu0 0.0
      %1599 = vmatpush.msra.mxu0 0.0
      %1600 = vmatpush.msra.mxu0 0.0
      %1601 = vmatpush.msra.mxu0 0.0
      %1602 = vmatpush.msra.mxu0 0.0
      %1603 = vmatpush.msra.mxu0 0.0
      %1604 = vmatpush.msra.mxu0 0.0
      %1605 = vmatpush.msra.mxu0 0.0
      %1606 = vmatpush.msra.mxu0 0.0
      %v1607 = vand.u32 %v230, 4294901760
      %v1608 = vsub.f32 %v230, %v1607
      %v1609 = vand.u32 %v1608, 4294901760
      %1610 = vmatpush.msra.mxu0 %v1609
      %v1611 = vand.u32 %v229, 4294901760
      %v1612 = vsub.f32 %v229, %v1611
      %v1613 = vand.u32 %v1612, 4294901760
      %1614 = vmatpush.msra.mxu0 %v1613
      %v1615 = vand.u32 %v228, 4294901760
      %v1616 = vsub.f32 %v228, %v1615
      %v1617 = vand.u32 %v1616, 4294901760
      %1618 = vmatpush.msra.mxu0 %v1617
      %v1619 = vand.u32 %v227, 4294901760
      %v1620 = vsub.f32 %v227, %v1619
      %v1621 = vand.u32 %v1620, 4294901760
      %1622 = vmatpush.msra.mxu0 %v1621
      %v1623 = vand.u32 %v1466, 4294901760
      %1624 = vmatmul.f32.gmra.mxu0 %v1623
      %v1625 = vpop.f32.mrf.mxu0
      %v1626 = vadd.f32 %v1593, %v1625
      %1627 = vdwg.mxu0
      %1628 = vmatpush.msra.mxu0 0.0
      %1629 = vmatpush.msra.mxu0 0.0
      %1630 = vmatpush.msra.mxu0 0.0
      %1631 = vmatpush.msra.mxu0 0.0
      %1632 = vmatpush.msra.mxu0 0.0
      %1633 = vmatpush.msra.mxu0 0.0
      %1634 = vmatpush.msra.mxu0 0.0
      %1635 = vmatpush.msra.mxu0 0.0
      %1636 = vmatpush.msra.mxu0 0.0
      %1637 = vmatpush.msra.mxu0 0.0
      %1638 = vmatpush.msra.mxu0 0.0
      %1639 = vmatpush.msra.mxu0 0.0
      %v1640 = vand.u32 %v230, 4294901760
      %1641 = vmatpush.msra.mxu0 %v1640
      %v1642 = vand.u32 %v229, 4294901760
      %1643 = vmatpush.msra.mxu0 %v1642
      %v1644 = vand.u32 %v228, 4294901760
      %1645 = vmatpush.msra.mxu0 %v1644
      %v1646 = vand.u32 %v227, 4294901760
      %1647 = vmatpush.msra.mxu0 %v1646
      %v1648 = vand.u32 %v1466, 4294901760
      %1649 = vmatmul.f32.gmra.mxu0 %v1648
      %v1650 = vpop.f32.mrf.mxu0
      %v1651 = vadd.f32 %v1626, %v1650
      %1652 = vdwg.mxu0
      %v1653 = vsel %vm507, %v1651, 0.0
      %v1654 = vand.u32 %v298, 4294901760
      %1655 = vmatpush.msra.mxu0 %v1654
      %v1656 = vand.u32 %v297, 4294901760
      %1657 = vmatpush.msra.mxu0 %v1656
      %v1658 = vand.u32 %v296, 4294901760
      %1659 = vmatpush.msra.mxu0 %v1658
      %v1660 = vand.u32 %v295, 4294901760
      %1661 = vmatpush.msra.mxu0 %v1660
      %v1662 = vand.u32 %v294, 4294901760
      %1663 = vmatpush.msra.mxu0 %v1662
      %v1664 = vand.u32 %v293, 4294901760
      %1665 = vmatpush.msra.mxu0 %v1664
      %v1666 = vand.u32 %v292, 4294901760
      %1667 = vmatpush.msra.mxu0 %v1666
      %v1668 = vand.u32 %v291, 4294901760
      %1669 = vmatpush.msra.mxu0 %v1668
      %v1670 = vand.u32 %v290, 4294901760
      %1671 = vmatpush.msra.mxu0 %v1670
      %v1672 = vand.u32 %v289, 4294901760
      %1673 = vmatpush.msra.mxu0 %v1672
      %v1674 = vand.u32 %v288, 4294901760
      %1675 = vmatpush.msra.mxu0 %v1674
      %v1676 = vand.u32 %v287, 4294901760
      %1677 = vmatpush.msra.mxu0 %v1676
      %v1678 = vand.u32 %v286, 4294901760
      %1679 = vmatpush.msra.mxu0 %v1678
      %v1680 = vand.u32 %v285, 4294901760
      %1681 = vmatpush.msra.mxu0 %v1680
      %v1682 = vand.u32 %v284, 4294901760
      %1683 = vmatpush.msra.mxu0 %v1682
      %v1684 = vand.u32 %v283, 4294901760
      %1685 = vmatpush.msra.mxu0 %v1684
      %v1686 = vand.u32 %v1651, 4294901760
      %v1687 = vsub.f32 %v1651, %v1686
      %v1688 = vand.u32 %v1687, 4294901760
      %v1689 = vsub.f32 %v1687, %v1688
      %v1690 = vand.u32 %v1689, 4294901760
      %1691 = vmatmul.f32.gmra.mxu0 %v1690
      %v1692 = vpop.f32.mrf.mxu0
      %v1693 = vadd.f32 0.0, %v1692
      %1694 = vdwg.mxu0
      %v1695 = vand.u32 %v298, 4294901760
      %v1696 = vsub.f32 %v298, %v1695
      %v1697 = vand.u32 %v1696, 4294901760
      %v1698 = vsub.f32 %v1696, %v1697
      %v1699 = vand.u32 %v1698, 4294901760
      %1700 = vmatpush.msra.mxu0 %v1699
      %v1701 = vand.u32 %v297, 4294901760
      %v1702 = vsub.f32 %v297, %v1701
      %v1703 = vand.u32 %v1702, 4294901760
      %v1704 = vsub.f32 %v1702, %v1703
      %v1705 = vand.u32 %v1704, 4294901760
      %1706 = vmatpush.msra.mxu0 %v1705
      %v1707 = vand.u32 %v296, 4294901760
      %v1708 = vsub.f32 %v296, %v1707
      %v1709 = vand.u32 %v1708, 4294901760
      %v1710 = vsub.f32 %v1708, %v1709
      %v1711 = vand.u32 %v1710, 4294901760
      %1712 = vmatpush.msra.mxu0 %v1711
      %v1713 = vand.u32 %v295, 4294901760
      %v1714 = vsub.f32 %v295, %v1713
      %v1715 = vand.u32 %v1714, 4294901760
      %v1716 = vsub.f32 %v1714, %v1715
      %v1717 = vand.u32 %v1716, 4294901760
      %1718 = vmatpush.msra.mxu0 %v1717
      %v1719 = vand.u32 %v294, 4294901760
      %v1720 = vsub.f32 %v294, %v1719
      %v1721 = vand.u32 %v1720, 4294901760
      %v1722 = vsub.f32 %v1720, %v1721
      %v1723 = vand.u32 %v1722, 4294901760
      %1724 = vmatpush.msra.mxu0 %v1723
      %v1725 = vand.u32 %v293, 4294901760
      %v1726 = vsub.f32 %v293, %v1725
      %v1727 = vand.u32 %v1726, 4294901760
      %v1728 = vsub.f32 %v1726, %v1727
      %v1729 = vand.u32 %v1728, 4294901760
      %1730 = vmatpush.msra.mxu0 %v1729
      %v1731 = vand.u32 %v292, 4294901760
      %v1732 = vsub.f32 %v292, %v1731
      %v1733 = vand.u32 %v1732, 4294901760
      %v1734 = vsub.f32 %v1732, %v1733
      %v1735 = vand.u32 %v1734, 4294901760
      %1736 = vmatpush.msra.mxu0 %v1735
      %v1737 = vand.u32 %v291, 4294901760
      %v1738 = vsub.f32 %v291, %v1737
      %v1739 = vand.u32 %v1738, 4294901760
      %v1740 = vsub.f32 %v1738, %v1739
      %v1741 = vand.u32 %v1740, 4294901760
      %1742 = vmatpush.msra.mxu0 %v1741
      %v1743 = vand.u32 %v290, 4294901760
      %v1744 = vsub.f32 %v290, %v1743
      %v1745 = vand.u32 %v1744, 4294901760
      %v1746 = vsub.f32 %v1744, %v1745
      %v1747 = vand.u32 %v1746, 4294901760
      %1748 = vmatpush.msra.mxu0 %v1747
      %v1749 = vand.u32 %v289, 4294901760
      %v1750 = vsub.f32 %v289, %v1749
      %v1751 = vand.u32 %v1750, 4294901760
      %v1752 = vsub.f32 %v1750, %v1751
      %v1753 = vand.u32 %v1752, 4294901760
      %1754 = vmatpush.msra.mxu0 %v1753
      %v1755 = vand.u32 %v288, 4294901760
      %v1756 = vsub.f32 %v288, %v1755
      %v1757 = vand.u32 %v1756, 4294901760
      %v1758 = vsub.f32 %v1756, %v1757
      %v1759 = vand.u32 %v1758, 4294901760
      %1760 = vmatpush.msra.mxu0 %v1759
      %v1761 = vand.u32 %v287, 4294901760
      %v1762 = vsub.f32 %v287, %v1761
      %v1763 = vand.u32 %v1762, 4294901760
      %v1764 = vsub.f32 %v1762, %v1763
      %v1765 = vand.u32 %v1764, 4294901760
      %1766 = vmatpush.msra.mxu0 %v1765
      %v1767 = vand.u32 %v286, 4294901760
      %v1768 = vsub.f32 %v286, %v1767
      %v1769 = vand.u32 %v1768, 4294901760
      %v1770 = vsub.f32 %v1768, %v1769
      %v1771 = vand.u32 %v1770, 4294901760
      %1772 = vmatpush.msra.mxu0 %v1771
      %v1773 = vand.u32 %v285, 4294901760
      %v1774 = vsub.f32 %v285, %v1773
      %v1775 = vand.u32 %v1774, 4294901760
      %v1776 = vsub.f32 %v1774, %v1775
      %v1777 = vand.u32 %v1776, 4294901760
      %1778 = vmatpush.msra.mxu0 %v1777
      %v1779 = vand.u32 %v284, 4294901760
      %v1780 = vsub.f32 %v284, %v1779
      %v1781 = vand.u32 %v1780, 4294901760
      %v1782 = vsub.f32 %v1780, %v1781
      %v1783 = vand.u32 %v1782, 4294901760
      %1784 = vmatpush.msra.mxu0 %v1783
      %v1785 = vand.u32 %v283, 4294901760
      %v1786 = vsub.f32 %v283, %v1785
      %v1787 = vand.u32 %v1786, 4294901760
      %v1788 = vsub.f32 %v1786, %v1787
      %v1789 = vand.u32 %v1788, 4294901760
      %1790 = vmatpush.msra.mxu0 %v1789
      %v1791 = vand.u32 %v1651, 4294901760
      %1792 = vmatmul.f32.gmra.mxu0 %v1791
      %v1793 = vpop.f32.mrf.mxu0
      %v1794 = vadd.f32 %v1693, %v1793
      %1795 = vdwg.mxu0
      %v1796 = vand.u32 %v298, 4294901760
      %v1797 = vsub.f32 %v298, %v1796
      %1798 = vmatpush.msra.mxu0 %v1797
      %v1799 = vand.u32 %v297, 4294901760
      %v1800 = vsub.f32 %v297, %v1799
      %1801 = vmatpush.msra.mxu0 %v1800
      %v1802 = vand.u32 %v296, 4294901760
      %v1803 = vsub.f32 %v296, %v1802
      %1804 = vmatpush.msra.mxu0 %v1803
      %v1805 = vand.u32 %v295, 4294901760
      %v1806 = vsub.f32 %v295, %v1805
      %1807 = vmatpush.msra.mxu0 %v1806
      %v1808 = vand.u32 %v294, 4294901760
      %v1809 = vsub.f32 %v294, %v1808
      %1810 = vmatpush.msra.mxu0 %v1809
      %v1811 = vand.u32 %v293, 4294901760
      %v1812 = vsub.f32 %v293, %v1811
      %1813 = vmatpush.msra.mxu0 %v1812
      %v1814 = vand.u32 %v292, 4294901760
      %v1815 = vsub.f32 %v292, %v1814
      %1816 = vmatpush.msra.mxu0 %v1815
      %v1817 = vand.u32 %v291, 4294901760
      %v1818 = vsub.f32 %v291, %v1817
      %1819 = vmatpush.msra.mxu0 %v1818
      %v1820 = vand.u32 %v290, 4294901760
      %v1821 = vsub.f32 %v290, %v1820
      %1822 = vmatpush.msra.mxu0 %v1821
      %v1823 = vand.u32 %v289, 4294901760
      %v1824 = vsub.f32 %v289, %v1823
      %1825 = vmatpush.msra.mxu0 %v1824
      %v1826 = vand.u32 %v288, 4294901760
      %v1827 = vsub.f32 %v288, %v1826
      %1828 = vmatpush.msra.mxu0 %v1827
      %v1829 = vand.u32 %v287, 4294901760
      %v1830 = vsub.f32 %v287, %v1829
      %1831 = vmatpush.msra.mxu0 %v1830
      %v1832 = vand.u32 %v286, 4294901760
      %v1833 = vsub.f32 %v286, %v1832
      %1834 = vmatpush.msra.mxu0 %v1833
      %v1835 = vand.u32 %v285, 4294901760
      %v1836 = vsub.f32 %v285, %v1835
      %1837 = vmatpush.msra.mxu0 %v1836
      %v1838 = vand.u32 %v284, 4294901760
      %v1839 = vsub.f32 %v284, %v1838
      %1840 = vmatpush.msra.mxu0 %v1839
      %v1841 = vand.u32 %v283, 4294901760
      %v1842 = vsub.f32 %v283, %v1841
      %1843 = vmatpush.msra.mxu0 %v1842
      %v1844 = vand.u32 %v1651, 4294901760
      %v1845 = vsub.f32 %v1651, %v1844
      %1846 = vmatmul.f32.gmra.mxu0 %v1845
      %v1847 = vpop.f32.mrf.mxu0
      %v1848 = vadd.f32 %v1794, %v1847
      %1849 = vdwg.mxu0
      %v1850 = vand.u32 %v298, 4294901760
      %1851 = vmatpush.msra.mxu0 %v1850
      %v1852 = vand.u32 %v297, 4294901760
      %1853 = vmatpush.msra.mxu0 %v1852
      %v1854 = vand.u32 %v296, 4294901760
      %1855 = vmatpush.msra.mxu0 %v1854
      %v1856 = vand.u32 %v295, 4294901760
      %1857 = vmatpush.msra.mxu0 %v1856
      %v1858 = vand.u32 %v294, 4294901760
      %1859 = vmatpush.msra.mxu0 %v1858
      %v1860 = vand.u32 %v293, 4294901760
      %1861 = vmatpush.msra.mxu0 %v1860
      %v1862 = vand.u32 %v292, 4294901760
      %1863 = vmatpush.msra.mxu0 %v1862
      %v1864 = vand.u32 %v291, 4294901760
      %1865 = vmatpush.msra.mxu0 %v1864
      %v1866 = vand.u32 %v290, 4294901760
      %1867 = vmatpush.msra.mxu0 %v1866
      %v1868 = vand.u32 %v289, 4294901760
      %1869 = vmatpush.msra.mxu0 %v1868
      %v1870 = vand.u32 %v288, 4294901760
      %1871 = vmatpush.msra.mxu0 %v1870
      %v1872 = vand.u32 %v287, 4294901760
      %1873 = vmatpush.msra.mxu0 %v1872
      %v1874 = vand.u32 %v286, 4294901760
      %1875 = vmatpush.msra.mxu0 %v1874
      %v1876 = vand.u32 %v285, 4294901760
      %1877 = vmatpush.msra.mxu0 %v1876
      %v1878 = vand.u32 %v284, 4294901760
      %1879 = vmatpush.msra.mxu0 %v1878
      %v1880 = vand.u32 %v283, 4294901760
      %1881 = vmatpush.msra.mxu0 %v1880
      %v1882 = vand.u32 %v1651, 4294901760
      %v1883 = vsub.f32 %v1651, %v1882
      %v1884 = vand.u32 %v1883, 4294901760
      %1885 = vmatmul.f32.gmra.mxu0 %v1884
      %v1886 = vpop.f32.mrf.mxu0
      %v1887 = vadd.f32 %v1848, %v1886
      %1888 = vdwg.mxu0
      %v1889 = vand.u32 %v298, 4294901760
      %v1890 = vsub.f32 %v298, %v1889
      %v1891 = vand.u32 %v1890, 4294901760
      %1892 = vmatpush.msra.mxu0 %v1891
      %v1893 = vand.u32 %v297, 4294901760
      %v1894 = vsub.f32 %v297, %v1893
      %v1895 = vand.u32 %v1894, 4294901760
      %1896 = vmatpush.msra.mxu0 %v1895
      %v1897 = vand.u32 %v296, 4294901760
      %v1898 = vsub.f32 %v296, %v1897
      %v1899 = vand.u32 %v1898, 4294901760
      %1900 = vmatpush.msra.mxu0 %v1899
      %v1901 = vand.u32 %v295, 4294901760
      %v1902 = vsub.f32 %v295, %v1901
      %v1903 = vand.u32 %v1902, 4294901760
      %1904 = vmatpush.msra.mxu0 %v1903
      %v1905 = vand.u32 %v294, 4294901760
      %v1906 = vsub.f32 %v294, %v1905
      %v1907 = vand.u32 %v1906, 4294901760
      %1908 = vmatpush.msra.mxu0 %v1907
      %v1909 = vand.u32 %v293, 4294901760
      %v1910 = vsub.f32 %v293, %v1909
      %v1911 = vand.u32 %v1910, 4294901760
      %1912 = vmatpush.msra.mxu0 %v1911
      %v1913 = vand.u32 %v292, 4294901760
      %v1914 = vsub.f32 %v292, %v1913
      %v1915 = vand.u32 %v1914, 4294901760
      %1916 = vmatpush.msra.mxu0 %v1915
      %v1917 = vand.u32 %v291, 4294901760
      %v1918 = vsub.f32 %v291, %v1917
      %v1919 = vand.u32 %v1918, 4294901760
      %1920 = vmatpush.msra.mxu0 %v1919
      %v1921 = vand.u32 %v290, 4294901760
      %v1922 = vsub.f32 %v290, %v1921
      %v1923 = vand.u32 %v1922, 4294901760
      %1924 = vmatpush.msra.mxu0 %v1923
      %v1925 = vand.u32 %v289, 4294901760
      %v1926 = vsub.f32 %v289, %v1925
      %v1927 = vand.u32 %v1926, 4294901760
      %1928 = vmatpush.msra.mxu0 %v1927
      %v1929 = vand.u32 %v288, 4294901760
      %v1930 = vsub.f32 %v288, %v1929
      %v1931 = vand.u32 %v1930, 4294901760
      %1932 = vmatpush.msra.mxu0 %v1931
      %v1933 = vand.u32 %v287, 4294901760
      %v1934 = vsub.f32 %v287, %v1933
      %v1935 = vand.u32 %v1934, 4294901760
      %1936 = vmatpush.msra.mxu0 %v1935
      %v1937 = vand.u32 %v286, 4294901760
      %v1938 = vsub.f32 %v286, %v1937
      %v1939 = vand.u32 %v1938, 4294901760
      %1940 = vmatpush.msra.mxu0 %v1939
      %v1941 = vand.u32 %v285, 4294901760
      %v1942 = vsub.f32 %v285, %v1941
      %v1943 = vand.u32 %v1942, 4294901760
      %1944 = vmatpush.msra.mxu0 %v1943
      %v1945 = vand.u32 %v284, 4294901760
      %v1946 = vsub.f32 %v284, %v1945
      %v1947 = vand.u32 %v1946, 4294901760
      %1948 = vmatpush.msra.mxu0 %v1947
      %v1949 = vand.u32 %v283, 4294901760
      %v1950 = vsub.f32 %v283, %v1949
      %v1951 = vand.u32 %v1950, 4294901760
      %1952 = vmatpush.msra.mxu0 %v1951
      %v1953 = vand.u32 %v1651, 4294901760
      %1954 = vmatmul.f32.gmra.mxu0 %v1953
      %v1955 = vpop.f32.mrf.mxu0
      %v1956 = vadd.f32 %v1887, %v1955
      %1957 = vdwg.mxu0
      %v1958 = vand.u32 %v298, 4294901760
      %1959 = vmatpush.msra.mxu0 %v1958
      %v1960 = vand.u32 %v297, 4294901760
      %1961 = vmatpush.msra.mxu0 %v1960
      %v1962 = vand.u32 %v296, 4294901760
      %1963 = vmatpush.msra.mxu0 %v1962
      %v1964 = vand.u32 %v295, 4294901760
      %1965 = vmatpush.msra.mxu0 %v1964
      %v1966 = vand.u32 %v294, 4294901760
      %1967 = vmatpush.msra.mxu0 %v1966
      %v1968 = vand.u32 %v293, 4294901760
      %1969 = vmatpush.msra.mxu0 %v1968
      %v1970 = vand.u32 %v292, 4294901760
      %1971 = vmatpush.msra.mxu0 %v1970
      %v1972 = vand.u32 %v291, 4294901760
      %1973 = vmatpush.msra.mxu0 %v1972
      %v1974 = vand.u32 %v290, 4294901760
      %1975 = vmatpush.msra.mxu0 %v1974
      %v1976 = vand.u32 %v289, 4294901760
      %1977 = vmatpush.msra.mxu0 %v1976
      %v1978 = vand.u32 %v288, 4294901760
      %1979 = vmatpush.msra.mxu0 %v1978
      %v1980 = vand.u32 %v287, 4294901760
      %1981 = vmatpush.msra.mxu0 %v1980
      %v1982 = vand.u32 %v286, 4294901760
      %1983 = vmatpush.msra.mxu0 %v1982
      %v1984 = vand.u32 %v285, 4294901760
      %1985 = vmatpush.msra.mxu0 %v1984
      %v1986 = vand.u32 %v284, 4294901760
      %1987 = vmatpush.msra.mxu0 %v1986
      %v1988 = vand.u32 %v283, 4294901760
      %1989 = vmatpush.msra.mxu0 %v1988
      %v1990 = vand.u32 %v1651, 4294901760
      %1991 = vmatmul.f32.gmra.mxu0 %v1990
      %v1992 = vpop.f32.mrf.mxu0
      %v1993 = vadd.f32 %v1956, %v1992
      %1994 = vdwg.mxu0
      %v1995 = vmul.f32 %v1653, %v1653
      %vm1996 = vcmask 1040384
      %v1997 = vsel %vm1996, %v1995, 0.0
      %1998 = vadd.xlane.f32.xlu0 %v1997
      %v1999 = vpop.xlane.xlu0 %1998
      %v2000 = vmax.f32 %v1999, 1e-16
      %v2001 = vrsqrt.pop %v2000
      %v2002 = vmul.f32 %v2001, %v2000
      %v2003 = vmul.f32 %v2002, %v2001
      %v2004 = vmul.f32 0.5, %v2003
      %v2005 = vsub.f32 1.5, %v2004
      %v2006 = vmul.f32 %v2001, %v2005
      %vm2007 = vweird.f32 %v2000
      %vm2008 = vweird.f32 %v2001
      %vm2009 = vmor %vm2007, %vm2008
      %v2010 = vsel %vm2009, %v2001, %v2006
      %v2011 = vmul.f32 %v1993, %v2010
      %v2012 = vrot.slane %v255, 3
      %v2014 = vmul.f32 %v2011, %v2012
      %v2015 = vmul.f32 %v2014, 1.442695
      %v2016 = vpow.pop %v2015
      %vm2017 = vcmask 326656
      %v2019 = vsel %vm2017, %v2016, 0
      %2021 = vmatpush.msra.mxu0 0.0
      %2022 = vmatpush.msra.mxu0 0.0
      %2023 = vmatpush.msra.mxu0 0.0
      %2024 = vmatpush.msra.mxu0 0.0
      %2025 = vmatpush.msra.mxu0 0.0
      %2026 = vmatpush.msra.mxu0 0.0
      %2027 = vmatpush.msra.mxu0 0.0
      %2028 = vmatpush.msra.mxu0 0.0
      %2029 = vmatpush.msra.mxu0 0.0
      %2030 = vmatpush.msra.mxu0 0.0
      %2031 = vmatpush.msra.mxu0 0.0
      %v2032 = vand.u32 %v308, 4294901760
      %2033 = vmatpush.msra.mxu0 %v2032
      %v2034 = vand.u32 %v307, 4294901760
      %2035 = vmatpush.msra.mxu0 %v2034
      %v2036 = vand.u32 %v306, 4294901760
      %2037 = vmatpush.msra.mxu0 %v2036
      %v2038 = vand.u32 %v305, 4294901760
      %2039 = vmatpush.msra.mxu0 %v2038
      %v2040 = vand.u32 %v304, 4294901760
      %2041 = vmatpush.msra.mxu0 %v2040
      %v2042 = vand.u32 %v2019, 4294901760
      %v2043 = vsub.f32 %v2019, %v2042
      %v2044 = vand.u32 %v2043, 4294901760
      %v2045 = vsub.f32 %v2043, %v2044
      %v2046 = vand.u32 %v2045, 4294901760
      %2047 = vmatmul.f32.gmra.mxu0 %v2046
      %v2048 = vpop.f32.mrf.mxu0
      %v2049 = vadd.f32 0.0, %v2048
      %2050 = vdwg.mxu0
      %2051 = vmatpush.msra.mxu0 0.0
      %2052 = vmatpush.msra.mxu0 0.0
      %2053 = vmatpush.msra.mxu0 0.0
      %2054 = vmatpush.msra.mxu0 0.0
      %2055 = vmatpush.msra.mxu0 0.0
      %2056 = vmatpush.msra.mxu0 0.0
      %2057 = vmatpush.msra.mxu0 0.0
      %2058 = vmatpush.msra.mxu0 0.0
      %2059 = vmatpush.msra.mxu0 0.0
      %2060 = vmatpush.msra.mxu0 0.0
      %2061 = vmatpush.msra.mxu0 0.0
      %v2062 = vand.u32 %v308, 4294901760
      %v2063 = vsub.f32 %v308, %v2062
      %v2064 = vand.u32 %v2063, 4294901760
      %v2065 = vsub.f32 %v2063, %v2064
      %v2066 = vand.u32 %v2065, 4294901760
      %2067 = vmatpush.msra.mxu0 %v2066
      %v2068 = vand.u32 %v307, 4294901760
      %v2069 = vsub.f32 %v307, %v2068
      %v2070 = vand.u32 %v2069, 4294901760
      %v2071 = vsub.f32 %v2069, %v2070
      %v2072 = vand.u32 %v2071, 4294901760
      %2073 = vmatpush.msra.mxu0 %v2072
      %v2074 = vand.u32 %v306, 4294901760
      %v2075 = vsub.f32 %v306, %v2074
      %v2076 = vand.u32 %v2075, 4294901760
      %v2077 = vsub.f32 %v2075, %v2076
      %v2078 = vand.u32 %v2077, 4294901760
      %2079 = vmatpush.msra.mxu0 %v2078
      %v2080 = vand.u32 %v305, 4294901760
      %v2081 = vsub.f32 %v305, %v2080
      %v2082 = vand.u32 %v2081, 4294901760
      %v2083 = vsub.f32 %v2081, %v2082
      %v2084 = vand.u32 %v2083, 4294901760
      %2085 = vmatpush.msra.mxu0 %v2084
      %v2086 = vand.u32 %v304, 4294901760
      %v2087 = vsub.f32 %v304, %v2086
      %v2088 = vand.u32 %v2087, 4294901760
      %v2089 = vsub.f32 %v2087, %v2088
      %v2090 = vand.u32 %v2089, 4294901760
      %2091 = vmatpush.msra.mxu0 %v2090
      %v2092 = vand.u32 %v2019, 4294901760
      %2093 = vmatmul.f32.gmra.mxu0 %v2092
      %v2094 = vpop.f32.mrf.mxu0
      %v2095 = vadd.f32 %v2049, %v2094
      %2096 = vdwg.mxu0
      %2097 = vmatpush.msra.mxu0 0.0
      %2098 = vmatpush.msra.mxu0 0.0
      %2099 = vmatpush.msra.mxu0 0.0
      %2100 = vmatpush.msra.mxu0 0.0
      %2101 = vmatpush.msra.mxu0 0.0
      %2102 = vmatpush.msra.mxu0 0.0
      %2103 = vmatpush.msra.mxu0 0.0
      %2104 = vmatpush.msra.mxu0 0.0
      %2105 = vmatpush.msra.mxu0 0.0
      %2106 = vmatpush.msra.mxu0 0.0
      %2107 = vmatpush.msra.mxu0 0.0
      %v2108 = vand.u32 %v308, 4294901760
      %v2109 = vsub.f32 %v308, %v2108
      %2110 = vmatpush.msra.mxu0 %v2109
      %v2111 = vand.u32 %v307, 4294901760
      %v2112 = vsub.f32 %v307, %v2111
      %2113 = vmatpush.msra.mxu0 %v2112
      %v2114 = vand.u32 %v306, 4294901760
      %v2115 = vsub.f32 %v306, %v2114
      %2116 = vmatpush.msra.mxu0 %v2115
      %v2117 = vand.u32 %v305, 4294901760
      %v2118 = vsub.f32 %v305, %v2117
      %2119 = vmatpush.msra.mxu0 %v2118
      %v2120 = vand.u32 %v304, 4294901760
      %v2121 = vsub.f32 %v304, %v2120
      %2122 = vmatpush.msra.mxu0 %v2121
      %v2123 = vand.u32 %v2019, 4294901760
      %v2124 = vsub.f32 %v2019, %v2123
      %2125 = vmatmul.f32.gmra.mxu0 %v2124
      %v2126 = vpop.f32.mrf.mxu0
      %v2127 = vadd.f32 %v2095, %v2126
      %2128 = vdwg.mxu0
      %2129 = vmatpush.msra.mxu0 0.0
      %2130 = vmatpush.msra.mxu0 0.0
      %2131 = vmatpush.msra.mxu0 0.0
      %2132 = vmatpush.msra.mxu0 0.0
      %2133 = vmatpush.msra.mxu0 0.0
      %2134 = vmatpush.msra.mxu0 0.0
      %2135 = vmatpush.msra.mxu0 0.0
      %2136 = vmatpush.msra.mxu0 0.0
      %2137 = vmatpush.msra.mxu0 0.0
      %2138 = vmatpush.msra.mxu0 0.0
      %2139 = vmatpush.msra.mxu0 0.0
      %v2140 = vand.u32 %v308, 4294901760
      %2141 = vmatpush.msra.mxu0 %v2140
      %v2142 = vand.u32 %v307, 4294901760
      %2143 = vmatpush.msra.mxu0 %v2142
      %v2144 = vand.u32 %v306, 4294901760
      %2145 = vmatpush.msra.mxu0 %v2144
      %v2146 = vand.u32 %v305, 4294901760
      %2147 = vmatpush.msra.mxu0 %v2146
      %v2148 = vand.u32 %v304, 4294901760
      %2149 = vmatpush.msra.mxu0 %v2148
      %v2150 = vand.u32 %v2019, 4294901760
      %v2151 = vsub.f32 %v2019, %v2150
      %v2152 = vand.u32 %v2151, 4294901760
      %2153 = vmatmul.f32.gmra.mxu0 %v2152
      %v2154 = vpop.f32.mrf.mxu0
      %v2155 = vadd.f32 %v2127, %v2154
      %2156 = vdwg.mxu0
      %2157 = vmatpush.msra.mxu0 0.0
      %2158 = vmatpush.msra.mxu0 0.0
      %2159 = vmatpush.msra.mxu0 0.0
      %2160 = vmatpush.msra.mxu0 0.0
      %2161 = vmatpush.msra.mxu0 0.0
      %2162 = vmatpush.msra.mxu0 0.0
      %2163 = vmatpush.msra.mxu0 0.0
      %2164 = vmatpush.msra.mxu0 0.0
      %2165 = vmatpush.msra.mxu0 0.0
      %2166 = vmatpush.msra.mxu0 0.0
      %2167 = vmatpush.msra.mxu0 0.0
      %v2168 = vand.u32 %v308, 4294901760
      %v2169 = vsub.f32 %v308, %v2168
      %v2170 = vand.u32 %v2169, 4294901760
      %2171 = vmatpush.msra.mxu0 %v2170
      %v2172 = vand.u32 %v307, 4294901760
      %v2173 = vsub.f32 %v307, %v2172
      %v2174 = vand.u32 %v2173, 4294901760
      %2175 = vmatpush.msra.mxu0 %v2174
      %v2176 = vand.u32 %v306, 4294901760
      %v2177 = vsub.f32 %v306, %v2176
      %v2178 = vand.u32 %v2177, 4294901760
      %2179 = vmatpush.msra.mxu0 %v2178
      %v2180 = vand.u32 %v305, 4294901760
      %v2181 = vsub.f32 %v305, %v2180
      %v2182 = vand.u32 %v2181, 4294901760
      %2183 = vmatpush.msra.mxu0 %v2182
      %v2184 = vand.u32 %v304, 4294901760
      %v2185 = vsub.f32 %v304, %v2184
      %v2186 = vand.u32 %v2185, 4294901760
      %2187 = vmatpush.msra.mxu0 %v2186
      %v2188 = vand.u32 %v2019, 4294901760
      %2189 = vmatmul.f32.gmra.mxu0 %v2188
      %v2190 = vpop.f32.mrf.mxu0
      %v2191 = vadd.f32 %v2155, %v2190
      %2192 = vdwg.mxu0
      %2193 = vmatpush.msra.mxu0 0.0
      %2194 = vmatpush.msra.mxu0 0.0
      %2195 = vmatpush.msra.mxu0 0.0
      %2196 = vmatpush.msra.mxu0 0.0
      %2197 = vmatpush.msra.mxu0 0.0
      %2198 = vmatpush.msra.mxu0 0.0
      %2199 = vmatpush.msra.mxu0 0.0
      %2200 = vmatpush.msra.mxu0 0.0
      %2201 = vmatpush.msra.mxu0 0.0
      %2202 = vmatpush.msra.mxu0 0.0
      %2203 = vmatpush.msra.mxu0 0.0
      %v2204 = vand.u32 %v308, 4294901760
      %2205 = vmatpush.msra.mxu0 %v2204
      %v2206 = vand.u32 %v307, 4294901760
      %2207 = vmatpush.msra.mxu0 %v2206
      %v2208 = vand.u32 %v306, 4294901760
      %2209 = vmatpush.msra.mxu0 %v2208
      %v2210 = vand.u32 %v305, 4294901760
      %2211 = vmatpush.msra.mxu0 %v2210
      %v2212 = vand.u32 %v304, 4294901760
      %2213 = vmatpush.msra.mxu0 %v2212
      %v2214 = vand.u32 %v2019, 4294901760
      %2215 = vmatmul.f32.gmra.mxu0 %v2214
      %v2216 = vpop.f32.mrf.mxu0
      %v2217 = vadd.f32 %v2191, %v2216
      %2218 = vdwg.mxu0
      %v2219 = vrcp.pop %v2217
      %v2220 = vmul.f32 %v2016, %v2219
      %v2221 = vrot.slane %v255, 4
      %v2223 = vmul.f32 %v2220, %v2221
      %2225 = vset.pattern.permute.xlu0 0
      %2226 = vperm.xlu0 %2225, %v256
      %v2227 = vpop.permute.xlu0 %2226
      %v2230 = vsel %vm2017, %v2223, 0
      %2232 = vmatpush.msra.mxu0 0.0
      %2233 = vmatpush.msra.mxu0 0.0
      %2234 = vmatpush.msra.mxu0 0.0
      %2235 = vmatpush.msra.mxu0 0.0
      %2236 = vmatpush.msra.mxu0 0.0
      %2237 = vmatpush.msra.mxu0 0.0
      %2238 = vmatpush.msra.mxu0 0.0
      %2239 = vmatpush.msra.mxu0 0.0
      %2240 = vmatpush.msra.mxu0 0.0
      %2241 = vmatpush.msra.mxu0 0.0
      %2242 = vmatpush.msra.mxu0 0.0
      %v2243 = vand.u32 %v313, 4294901760
      %2244 = vmatpush.msra.mxu0 %v2243
      %v2245 = vand.u32 %v312, 4294901760
      %2246 = vmatpush.msra.mxu0 %v2245
      %v2247 = vand.u32 %v311, 4294901760
      %2248 = vmatpush.msra.mxu0 %v2247
      %v2249 = vand.u32 %v310, 4294901760
      %2250 = vmatpush.msra.mxu0 %v2249
      %v2251 = vand.u32 %v309, 4294901760
      %2252 = vmatpush.msra.mxu0 %v2251
      %v2253 = vand.u32 %v2230, 4294901760
      %v2254 = vsub.f32 %v2230, %v2253
      %v2255 = vand.u32 %v2254, 4294901760
      %v2256 = vsub.f32 %v2254, %v2255
      %v2257 = vand.u32 %v2256, 4294901760
      %2258 = vmatmul.f32.gmra.mxu0 %v2257
      %v2259 = vpop.f32.mrf.mxu0
      %v2260 = vadd.f32 %v2227, %v2259
      %2261 = vdwg.mxu0
      %2262 = vmatpush.msra.mxu0 0.0
      %2263 = vmatpush.msra.mxu0 0.0
      %2264 = vmatpush.msra.mxu0 0.0
      %2265 = vmatpush.msra.mxu0 0.0
      %2266 = vmatpush.msra.mxu0 0.0
      %2267 = vmatpush.msra.mxu0 0.0
      %2268 = vmatpush.msra.mxu0 0.0
      %2269 = vmatpush.msra.mxu0 0.0
      %2270 = vmatpush.msra.mxu0 0.0
      %2271 = vmatpush.msra.mxu0 0.0
      %2272 = vmatpush.msra.mxu0 0.0
      %v2273 = vand.u32 %v313, 4294901760
      %v2274 = vsub.f32 %v313, %v2273
      %v2275 = vand.u32 %v2274, 4294901760
      %v2276 = vsub.f32 %v2274, %v2275
      %v2277 = vand.u32 %v2276, 4294901760
      %2278 = vmatpush.msra.mxu0 %v2277
      %v2279 = vand.u32 %v312, 4294901760
      %v2280 = vsub.f32 %v312, %v2279
      %v2281 = vand.u32 %v2280, 4294901760
      %v2282 = vsub.f32 %v2280, %v2281
      %v2283 = vand.u32 %v2282, 4294901760
      %2284 = vmatpush.msra.mxu0 %v2283
      %v2285 = vand.u32 %v311, 4294901760
      %v2286 = vsub.f32 %v311, %v2285
      %v2287 = vand.u32 %v2286, 4294901760
      %v2288 = vsub.f32 %v2286, %v2287
      %v2289 = vand.u32 %v2288, 4294901760
      %2290 = vmatpush.msra.mxu0 %v2289
      %v2291 = vand.u32 %v310, 4294901760
      %v2292 = vsub.f32 %v310, %v2291
      %v2293 = vand.u32 %v2292, 4294901760
      %v2294 = vsub.f32 %v2292, %v2293
      %v2295 = vand.u32 %v2294, 4294901760
      %2296 = vmatpush.msra.mxu0 %v2295
      %v2297 = vand.u32 %v309, 4294901760
      %v2298 = vsub.f32 %v309, %v2297
      %v2299 = vand.u32 %v2298, 4294901760
      %v2300 = vsub.f32 %v2298, %v2299
      %v2301 = vand.u32 %v2300, 4294901760
      %2302 = vmatpush.msra.mxu0 %v2301
      %v2303 = vand.u32 %v2230, 4294901760
      %2304 = vmatmul.f32.gmra.mxu0 %v2303
      %v2305 = vpop.f32.mrf.mxu0
      %v2306 = vadd.f32 %v2260, %v2305
      %2307 = vdwg.mxu0
      %2308 = vmatpush.msra.mxu0 0.0
      %2309 = vmatpush.msra.mxu0 0.0
      %2310 = vmatpush.msra.mxu0 0.0
      %2311 = vmatpush.msra.mxu0 0.0
      %2312 = vmatpush.msra.mxu0 0.0
      %2313 = vmatpush.msra.mxu0 0.0
      %2314 = vmatpush.msra.mxu0 0.0
      %2315 = vmatpush.msra.mxu0 0.0
      %2316 = vmatpush.msra.mxu0 0.0
      %2317 = vmatpush.msra.mxu0 0.0
      %2318 = vmatpush.msra.mxu0 0.0
      %v2319 = vand.u32 %v313, 4294901760
      %v2320 = vsub.f32 %v313, %v2319
      %2321 = vmatpush.msra.mxu0 %v2320
      %v2322 = vand.u32 %v312, 4294901760
      %v2323 = vsub.f32 %v312, %v2322
      %2324 = vmatpush.msra.mxu0 %v2323
      %v2325 = vand.u32 %v311, 4294901760
      %v2326 = vsub.f32 %v311, %v2325
      %2327 = vmatpush.msra.mxu0 %v2326
      %v2328 = vand.u32 %v310, 4294901760
      %v2329 = vsub.f32 %v310, %v2328
      %2330 = vmatpush.msra.mxu0 %v2329
      %v2331 = vand.u32 %v309, 4294901760
      %v2332 = vsub.f32 %v309, %v2331
      %2333 = vmatpush.msra.mxu0 %v2332
      %v2334 = vand.u32 %v2230, 4294901760
      %v2335 = vsub.f32 %v2230, %v2334
      %2336 = vmatmul.f32.gmra.mxu0 %v2335
      %v2337 = vpop.f32.mrf.mxu0
      %v2338 = vadd.f32 %v2306, %v2337
      %2339 = vdwg.mxu0
      %2340 = vmatpush.msra.mxu0 0.0
      %2341 = vmatpush.msra.mxu0 0.0
      %2342 = vmatpush.msra.mxu0 0.0
      %2343 = vmatpush.msra.mxu0 0.0
      %2344 = vmatpush.msra.mxu0 0.0
      %2345 = vmatpush.msra.mxu0 0.0
      %2346 = vmatpush.msra.mxu0 0.0
      %2347 = vmatpush.msra.mxu0 0.0
      %2348 = vmatpush.msra.mxu0 0.0
      %2349 = vmatpush.msra.mxu0 0.0
      %2350 = vmatpush.msra.mxu0 0.0
      %v2351 = vand.u32 %v313, 4294901760
      %2352 = vmatpush.msra.mxu0 %v2351
      %v2353 = vand.u32 %v312, 4294901760
      %2354 = vmatpush.msra.mxu0 %v2353
      %v2355 = vand.u32 %v311, 4294901760
      %2356 = vmatpush.msra.mxu0 %v2355
      %v2357 = vand.u32 %v310, 4294901760
      %2358 = vmatpush.msra.mxu0 %v2357
      %v2359 = vand.u32 %v309, 4294901760
      %2360 = vmatpush.msra.mxu0 %v2359
      %v2361 = vand.u32 %v2230, 4294901760
      %v2362 = vsub.f32 %v2230, %v2361
      %v2363 = vand.u32 %v2362, 4294901760
      %2364 = vmatmul.f32.gmra.mxu0 %v2363
      %v2365 = vpop.f32.mrf.mxu0
      %v2366 = vadd.f32 %v2338, %v2365
      %2367 = vdwg.mxu0
      %2368 = vmatpush.msra.mxu0 0.0
      %2369 = vmatpush.msra.mxu0 0.0
      %2370 = vmatpush.msra.mxu0 0.0
      %2371 = vmatpush.msra.mxu0 0.0
      %2372 = vmatpush.msra.mxu0 0.0
      %2373 = vmatpush.msra.mxu0 0.0
      %2374 = vmatpush.msra.mxu0 0.0
      %2375 = vmatpush.msra.mxu0 0.0
      %2376 = vmatpush.msra.mxu0 0.0
      %2377 = vmatpush.msra.mxu0 0.0
      %2378 = vmatpush.msra.mxu0 0.0
      %v2379 = vand.u32 %v313, 4294901760
      %v2380 = vsub.f32 %v313, %v2379
      %v2381 = vand.u32 %v2380, 4294901760
      %2382 = vmatpush.msra.mxu0 %v2381
      %v2383 = vand.u32 %v312, 4294901760
      %v2384 = vsub.f32 %v312, %v2383
      %v2385 = vand.u32 %v2384, 4294901760
      %2386 = vmatpush.msra.mxu0 %v2385
      %v2387 = vand.u32 %v311, 4294901760
      %v2388 = vsub.f32 %v311, %v2387
      %v2389 = vand.u32 %v2388, 4294901760
      %2390 = vmatpush.msra.mxu0 %v2389
      %v2391 = vand.u32 %v310, 4294901760
      %v2392 = vsub.f32 %v310, %v2391
      %v2393 = vand.u32 %v2392, 4294901760
      %2394 = vmatpush.msra.mxu0 %v2393
      %v2395 = vand.u32 %v309, 4294901760
      %v2396 = vsub.f32 %v309, %v2395
      %v2397 = vand.u32 %v2396, 4294901760
      %2398 = vmatpush.msra.mxu0 %v2397
      %v2399 = vand.u32 %v2230, 4294901760
      %2400 = vmatmul.f32.gmra.mxu0 %v2399
      %v2401 = vpop.f32.mrf.mxu0
      %v2402 = vadd.f32 %v2366, %v2401
      %2403 = vdwg.mxu0
      %2404 = vmatpush.msra.mxu0 0.0
      %2405 = vmatpush.msra.mxu0 0.0
      %2406 = vmatpush.msra.mxu0 0.0
      %2407 = vmatpush.msra.mxu0 0.0
      %2408 = vmatpush.msra.mxu0 0.0
      %2409 = vmatpush.msra.mxu0 0.0
      %2410 = vmatpush.msra.mxu0 0.0
      %2411 = vmatpush.msra.mxu0 0.0
      %2412 = vmatpush.msra.mxu0 0.0
      %2413 = vmatpush.msra.mxu0 0.0
      %2414 = vmatpush.msra.mxu0 0.0
      %v2415 = vand.u32 %v313, 4294901760
      %2416 = vmatpush.msra.mxu0 %v2415
      %v2417 = vand.u32 %v312, 4294901760
      %2418 = vmatpush.msra.mxu0 %v2417
      %v2419 = vand.u32 %v311, 4294901760
      %2420 = vmatpush.msra.mxu0 %v2419
      %v2421 = vand.u32 %v310, 4294901760
      %2422 = vmatpush.msra.mxu0 %v2421
      %v2423 = vand.u32 %v309, 4294901760
      %2424 = vmatpush.msra.mxu0 %v2423
      %v2425 = vand.u32 %v2230, 4294901760
      %2426 = vmatmul.f32.gmra.mxu0 %v2425
      %v2427 = vpop.f32.mrf.mxu0
      %v2428 = vadd.f32 %v2402, %v2427
      %2429 = vdwg.mxu0
      %v2430 = vsub.f32 0.0, %v2428
      %v2431 = vmul.f32 %v2430, 1.442695
      %v2432 = vpow.pop %v2431
      %v2433 = vadd.f32 %v2432, 1.0
      %v2434 = vrcp.pop %v2433
      %v2436 = vsel %vm1460, %v2434, 0
      %vm2438 = vcmask 1044480
      %v2440 = vsel %vm2438, %v314, 0
      %2442 = vmatpush.msra.mxu0 0.0
      %2443 = vmatpush.msra.mxu0 0.0
      %2444 = vmatpush.msra.mxu0 0.0
      %2445 = vmatpush.msra.mxu0 0.0
      %2446 = vmatpush.msra.mxu0 0.0
      %2447 = vmatpush.msra.mxu0 0.0
      %2448 = vmatpush.msra.mxu0 0.0
      %2449 = vmatpush.msra.mxu0 0.0
      %2450 = vmatpush.msra.mxu0 0.0
      %2451 = vmatpush.msra.mxu0 0.0
      %2452 = vmatpush.msra.mxu0 0.0
      %2453 = vmatpush.msra.mxu0 0.0
      %2454 = vmatpush.msra.mxu0 0.0
      %2455 = vmatpush.msra.mxu0 0.0
      %2456 = vmatpush.msra.mxu0 0.0
      %v2457 = vand.u32 %v2440, 4294901760
      %2458 = vmatpush.msra.mxu0 %v2457
      %v2459 = vand.u32 %v2436, 4294901760
      %v2460 = vsub.f32 %v2436, %v2459
      %v2461 = vand.u32 %v2460, 4294901760
      %v2462 = vsub.f32 %v2460, %v2461
      %v2463 = vand.u32 %v2462, 4294901760
      %2464 = vmatmul.f32.gmra.mxu0 %v2463
      %v2465 = vpop.f32.mrf.mxu0
      %v2466 = vadd.f32 0.0, %v2465
      %2467 = vdwg.mxu0
      %2468 = vmatpush.msra.mxu0 0.0
      %2469 = vmatpush.msra.mxu0 0.0
      %2470 = vmatpush.msra.mxu0 0.0
      %2471 = vmatpush.msra.mxu0 0.0
      %2472 = vmatpush.msra.mxu0 0.0
      %2473 = vmatpush.msra.mxu0 0.0
      %2474 = vmatpush.msra.mxu0 0.0
      %2475 = vmatpush.msra.mxu0 0.0
      %2476 = vmatpush.msra.mxu0 0.0
      %2477 = vmatpush.msra.mxu0 0.0
      %2478 = vmatpush.msra.mxu0 0.0
      %2479 = vmatpush.msra.mxu0 0.0
      %2480 = vmatpush.msra.mxu0 0.0
      %2481 = vmatpush.msra.mxu0 0.0
      %2482 = vmatpush.msra.mxu0 0.0
      %v2483 = vand.u32 %v2440, 4294901760
      %v2484 = vsub.f32 %v2440, %v2483
      %v2485 = vand.u32 %v2484, 4294901760
      %v2486 = vsub.f32 %v2484, %v2485
      %v2487 = vand.u32 %v2486, 4294901760
      %2488 = vmatpush.msra.mxu0 %v2487
      %v2489 = vand.u32 %v2436, 4294901760
      %2490 = vmatmul.f32.gmra.mxu0 %v2489
      %v2491 = vpop.f32.mrf.mxu0
      %v2492 = vadd.f32 %v2466, %v2491
      %2493 = vdwg.mxu0
      %2494 = vmatpush.msra.mxu0 0.0
      %2495 = vmatpush.msra.mxu0 0.0
      %2496 = vmatpush.msra.mxu0 0.0
      %2497 = vmatpush.msra.mxu0 0.0
      %2498 = vmatpush.msra.mxu0 0.0
      %2499 = vmatpush.msra.mxu0 0.0
      %2500 = vmatpush.msra.mxu0 0.0
      %2501 = vmatpush.msra.mxu0 0.0
      %2502 = vmatpush.msra.mxu0 0.0
      %2503 = vmatpush.msra.mxu0 0.0
      %2504 = vmatpush.msra.mxu0 0.0
      %2505 = vmatpush.msra.mxu0 0.0
      %2506 = vmatpush.msra.mxu0 0.0
      %2507 = vmatpush.msra.mxu0 0.0
      %2508 = vmatpush.msra.mxu0 0.0
      %v2509 = vand.u32 %v2440, 4294901760
      %v2510 = vsub.f32 %v2440, %v2509
      %2511 = vmatpush.msra.mxu0 %v2510
      %v2512 = vand.u32 %v2436, 4294901760
      %v2513 = vsub.f32 %v2436, %v2512
      %2514 = vmatmul.f32.gmra.mxu0 %v2513
      %v2515 = vpop.f32.mrf.mxu0
      %v2516 = vadd.f32 %v2492, %v2515
      %2517 = vdwg.mxu0
      %2518 = vmatpush.msra.mxu0 0.0
      %2519 = vmatpush.msra.mxu0 0.0
      %2520 = vmatpush.msra.mxu0 0.0
      %2521 = vmatpush.msra.mxu0 0.0
      %2522 = vmatpush.msra.mxu0 0.0
      %2523 = vmatpush.msra.mxu0 0.0
      %2524 = vmatpush.msra.mxu0 0.0
      %2525 = vmatpush.msra.mxu0 0.0
      %2526 = vmatpush.msra.mxu0 0.0
      %2527 = vmatpush.msra.mxu0 0.0
      %2528 = vmatpush.msra.mxu0 0.0
      %2529 = vmatpush.msra.mxu0 0.0
      %2530 = vmatpush.msra.mxu0 0.0
      %2531 = vmatpush.msra.mxu0 0.0
      %2532 = vmatpush.msra.mxu0 0.0
      %v2533 = vand.u32 %v2440, 4294901760
      %2534 = vmatpush.msra.mxu0 %v2533
      %v2535 = vand.u32 %v2436, 4294901760
      %v2536 = vsub.f32 %v2436, %v2535
      %v2537 = vand.u32 %v2536, 4294901760
      %2538 = vmatmul.f32.gmra.mxu0 %v2537
      %v2539 = vpop.f32.mrf.mxu0
      %v2540 = vadd.f32 %v2516, %v2539
      %2541 = vdwg.mxu0
      %2542 = vmatpush.msra.mxu0 0.0
      %2543 = vmatpush.msra.mxu0 0.0
      %2544 = vmatpush.msra.mxu0 0.0
      %2545 = vmatpush.msra.mxu0 0.0
      %2546 = vmatpush.msra.mxu0 0.0
      %2547 = vmatpush.msra.mxu0 0.0
      %2548 = vmatpush.msra.mxu0 0.0
      %2549 = vmatpush.msra.mxu0 0.0
      %2550 = vmatpush.msra.mxu0 0.0
      %2551 = vmatpush.msra.mxu0 0.0
      %2552 = vmatpush.msra.mxu0 0.0
      %2553 = vmatpush.msra.mxu0 0.0
      %2554 = vmatpush.msra.mxu0 0.0
      %2555 = vmatpush.msra.mxu0 0.0
      %2556 = vmatpush.msra.mxu0 0.0
      %v2557 = vand.u32 %v2440, 4294901760
      %v2558 = vsub.f32 %v2440, %v2557
      %v2559 = vand.u32 %v2558, 4294901760
      %2560 = vmatpush.msra.mxu0 %v2559
      %v2561 = vand.u32 %v2436, 4294901760
      %2562 = vmatmul.f32.gmra.mxu0 %v2561
      %v2563 = vpop.f32.mrf.mxu0
      %v2564 = vadd.f32 %v2540, %v2563
      %2565 = vdwg.mxu0
      %2566 = vmatpush.msra.mxu0 0.0
      %2567 = vmatpush.msra.mxu0 0.0
      %2568 = vmatpush.msra.mxu0 0.0
      %2569 = vmatpush.msra.mxu0 0.0
      %2570 = vmatpush.msra.mxu0 0.0
      %2571 = vmatpush.msra.mxu0 0.0
      %2572 = vmatpush.msra.mxu0 0.0
      %2573 = vmatpush.msra.mxu0 0.0
      %2574 = vmatpush.msra.mxu0 0.0
      %2575 = vmatpush.msra.mxu0 0.0
      %2576 = vmatpush.msra.mxu0 0.0
      %2577 = vmatpush.msra.mxu0 0.0
      %2578 = vmatpush.msra.mxu0 0.0
      %2579 = vmatpush.msra.mxu0 0.0
      %2580 = vmatpush.msra.mxu0 0.0
      %v2581 = vand.u32 %v2440, 4294901760
      %2582 = vmatpush.msra.mxu0 %v2581
      %v2583 = vand.u32 %v2436, 4294901760
      %2584 = vmatmul.f32.gmra.mxu0 %v2583
      %v2585 = vpop.f32.mrf.mxu0
      %v2586 = vadd.f32 %v2564, %v2585
      %2587 = vdwg.mxu0
      %v2588 = vmul.f32 %v2220, %v2586
      %v2590 = vsel %vm2017, %v2588, 0
      %2592 = vmatpush.msra.mxu0 0.0
      %2593 = vmatpush.msra.mxu0 0.0
      %2594 = vmatpush.msra.mxu0 0.0
      %2595 = vmatpush.msra.mxu0 0.0
      %2596 = vmatpush.msra.mxu0 0.0
      %2597 = vmatpush.msra.mxu0 0.0
      %2598 = vmatpush.msra.mxu0 0.0
      %2599 = vmatpush.msra.mxu0 0.0
      %2600 = vmatpush.msra.mxu0 0.0
      %2601 = vmatpush.msra.mxu0 0.0
      %2602 = vmatpush.msra.mxu0 0.0
      %v2603 = vand.u32 %v303, 4294901760
      %2604 = vmatpush.msra.mxu0 %v2603
      %v2605 = vand.u32 %v302, 4294901760
      %2606 = vmatpush.msra.mxu0 %v2605
      %v2607 = vand.u32 %v301, 4294901760
      %2608 = vmatpush.msra.mxu0 %v2607
      %v2609 = vand.u32 %v300, 4294901760
      %2610 = vmatpush.msra.mxu0 %v2609
      %v2611 = vand.u32 %v299, 4294901760
      %2612 = vmatpush.msra.mxu0 %v2611
      %v2613 = vand.u32 %v2590, 4294901760
      %v2614 = vsub.f32 %v2590, %v2613
      %v2615 = vand.u32 %v2614, 4294901760
      %v2616 = vsub.f32 %v2614, %v2615
      %v2617 = vand.u32 %v2616, 4294901760
      %2618 = vmatmul.f32.gmra.mxu0 %v2617
      %v2619 = vpop.f32.mrf.mxu0
      %v2620 = vadd.f32 0.0, %v2619
      %2621 = vdwg.mxu0
      %2622 = vmatpush.msra.mxu0 0.0
      %2623 = vmatpush.msra.mxu0 0.0
      %2624 = vmatpush.msra.mxu0 0.0
      %2625 = vmatpush.msra.mxu0 0.0
      %2626 = vmatpush.msra.mxu0 0.0
      %2627 = vmatpush.msra.mxu0 0.0
      %2628 = vmatpush.msra.mxu0 0.0
      %2629 = vmatpush.msra.mxu0 0.0
      %2630 = vmatpush.msra.mxu0 0.0
      %2631 = vmatpush.msra.mxu0 0.0
      %2632 = vmatpush.msra.mxu0 0.0
      %v2633 = vand.u32 %v303, 4294901760
      %v2634 = vsub.f32 %v303, %v2633
      %v2635 = vand.u32 %v2634, 4294901760
      %v2636 = vsub.f32 %v2634, %v2635
      %v2637 = vand.u32 %v2636, 4294901760
      %2638 = vmatpush.msra.mxu0 %v2637
      %v2639 = vand.u32 %v302, 4294901760
      %v2640 = vsub.f32 %v302, %v2639
      %v2641 = vand.u32 %v2640, 4294901760
      %v2642 = vsub.f32 %v2640, %v2641
      %v2643 = vand.u32 %v2642, 4294901760
      %2644 = vmatpush.msra.mxu0 %v2643
      %v2645 = vand.u32 %v301, 4294901760
      %v2646 = vsub.f32 %v301, %v2645
      %v2647 = vand.u32 %v2646, 4294901760
      %v2648 = vsub.f32 %v2646, %v2647
      %v2649 = vand.u32 %v2648, 4294901760
      %2650 = vmatpush.msra.mxu0 %v2649
      %v2651 = vand.u32 %v300, 4294901760
      %v2652 = vsub.f32 %v300, %v2651
      %v2653 = vand.u32 %v2652, 4294901760
      %v2654 = vsub.f32 %v2652, %v2653
      %v2655 = vand.u32 %v2654, 4294901760
      %2656 = vmatpush.msra.mxu0 %v2655
      %v2657 = vand.u32 %v299, 4294901760
      %v2658 = vsub.f32 %v299, %v2657
      %v2659 = vand.u32 %v2658, 4294901760
      %v2660 = vsub.f32 %v2658, %v2659
      %v2661 = vand.u32 %v2660, 4294901760
      %2662 = vmatpush.msra.mxu0 %v2661
      %v2663 = vand.u32 %v2590, 4294901760
      %2664 = vmatmul.f32.gmra.mxu0 %v2663
      %v2665 = vpop.f32.mrf.mxu0
      %v2666 = vadd.f32 %v2620, %v2665
      %2667 = vdwg.mxu0
      %2668 = vmatpush.msra.mxu0 0.0
      %2669 = vmatpush.msra.mxu0 0.0
      %2670 = vmatpush.msra.mxu0 0.0
      %2671 = vmatpush.msra.mxu0 0.0
      %2672 = vmatpush.msra.mxu0 0.0
      %2673 = vmatpush.msra.mxu0 0.0
      %2674 = vmatpush.msra.mxu0 0.0
      %2675 = vmatpush.msra.mxu0 0.0
      %2676 = vmatpush.msra.mxu0 0.0
      %2677 = vmatpush.msra.mxu0 0.0
      %2678 = vmatpush.msra.mxu0 0.0
      %v2679 = vand.u32 %v303, 4294901760
      %v2680 = vsub.f32 %v303, %v2679
      %2681 = vmatpush.msra.mxu0 %v2680
      %v2682 = vand.u32 %v302, 4294901760
      %v2683 = vsub.f32 %v302, %v2682
      %2684 = vmatpush.msra.mxu0 %v2683
      %v2685 = vand.u32 %v301, 4294901760
      %v2686 = vsub.f32 %v301, %v2685
      %2687 = vmatpush.msra.mxu0 %v2686
      %v2688 = vand.u32 %v300, 4294901760
      %v2689 = vsub.f32 %v300, %v2688
      %2690 = vmatpush.msra.mxu0 %v2689
      %v2691 = vand.u32 %v299, 4294901760
      %v2692 = vsub.f32 %v299, %v2691
      %2693 = vmatpush.msra.mxu0 %v2692
      %v2694 = vand.u32 %v2590, 4294901760
      %v2695 = vsub.f32 %v2590, %v2694
      %2696 = vmatmul.f32.gmra.mxu0 %v2695
      %v2697 = vpop.f32.mrf.mxu0
      %v2698 = vadd.f32 %v2666, %v2697
      %2699 = vdwg.mxu0
      %2700 = vmatpush.msra.mxu0 0.0
      %2701 = vmatpush.msra.mxu0 0.0
      %2702 = vmatpush.msra.mxu0 0.0
      %2703 = vmatpush.msra.mxu0 0.0
      %2704 = vmatpush.msra.mxu0 0.0
      %2705 = vmatpush.msra.mxu0 0.0
      %2706 = vmatpush.msra.mxu0 0.0
      %2707 = vmatpush.msra.mxu0 0.0
      %2708 = vmatpush.msra.mxu0 0.0
      %2709 = vmatpush.msra.mxu0 0.0
      %2710 = vmatpush.msra.mxu0 0.0
      %v2711 = vand.u32 %v303, 4294901760
      %2712 = vmatpush.msra.mxu0 %v2711
      %v2713 = vand.u32 %v302, 4294901760
      %2714 = vmatpush.msra.mxu0 %v2713
      %v2715 = vand.u32 %v301, 4294901760
      %2716 = vmatpush.msra.mxu0 %v2715
      %v2717 = vand.u32 %v300, 4294901760
      %2718 = vmatpush.msra.mxu0 %v2717
      %v2719 = vand.u32 %v299, 4294901760
      %2720 = vmatpush.msra.mxu0 %v2719
      %v2721 = vand.u32 %v2590, 4294901760
      %v2722 = vsub.f32 %v2590, %v2721
      %v2723 = vand.u32 %v2722, 4294901760
      %2724 = vmatmul.f32.gmra.mxu0 %v2723
      %v2725 = vpop.f32.mrf.mxu0
      %v2726 = vadd.f32 %v2698, %v2725
      %2727 = vdwg.mxu0
      %2728 = vmatpush.msra.mxu0 0.0
      %2729 = vmatpush.msra.mxu0 0.0
      %2730 = vmatpush.msra.mxu0 0.0
      %2731 = vmatpush.msra.mxu0 0.0
      %2732 = vmatpush.msra.mxu0 0.0
      %2733 = vmatpush.msra.mxu0 0.0
      %2734 = vmatpush.msra.mxu0 0.0
      %2735 = vmatpush.msra.mxu0 0.0
      %2736 = vmatpush.msra.mxu0 0.0
      %2737 = vmatpush.msra.mxu0 0.0
      %2738 = vmatpush.msra.mxu0 0.0
      %v2739 = vand.u32 %v303, 4294901760
      %v2740 = vsub.f32 %v303, %v2739
      %v2741 = vand.u32 %v2740, 4294901760
      %2742 = vmatpush.msra.mxu0 %v2741
      %v2743 = vand.u32 %v302, 4294901760
      %v2744 = vsub.f32 %v302, %v2743
      %v2745 = vand.u32 %v2744, 4294901760
      %2746 = vmatpush.msra.mxu0 %v2745
      %v2747 = vand.u32 %v301, 4294901760
      %v2748 = vsub.f32 %v301, %v2747
      %v2749 = vand.u32 %v2748, 4294901760
      %2750 = vmatpush.msra.mxu0 %v2749
      %v2751 = vand.u32 %v300, 4294901760
      %v2752 = vsub.f32 %v300, %v2751
      %v2753 = vand.u32 %v2752, 4294901760
      %2754 = vmatpush.msra.mxu0 %v2753
      %v2755 = vand.u32 %v299, 4294901760
      %v2756 = vsub.f32 %v299, %v2755
      %v2757 = vand.u32 %v2756, 4294901760
      %2758 = vmatpush.msra.mxu0 %v2757
      %v2759 = vand.u32 %v2590, 4294901760
      %2760 = vmatmul.f32.gmra.mxu0 %v2759
      %v2761 = vpop.f32.mrf.mxu0
      %v2762 = vadd.f32 %v2726, %v2761
      %2763 = vdwg.mxu0
      %2764 = vmatpush.msra.mxu0 0.0
      %2765 = vmatpush.msra.mxu0 0.0
      %2766 = vmatpush.msra.mxu0 0.0
      %2767 = vmatpush.msra.mxu0 0.0
      %2768 = vmatpush.msra.mxu0 0.0
      %2769 = vmatpush.msra.mxu0 0.0
      %2770 = vmatpush.msra.mxu0 0.0
      %2771 = vmatpush.msra.mxu0 0.0
      %2772 = vmatpush.msra.mxu0 0.0
      %2773 = vmatpush.msra.mxu0 0.0
      %2774 = vmatpush.msra.mxu0 0.0
      %v2775 = vand.u32 %v303, 4294901760
      %2776 = vmatpush.msra.mxu0 %v2775
      %v2777 = vand.u32 %v302, 4294901760
      %2778 = vmatpush.msra.mxu0 %v2777
      %v2779 = vand.u32 %v301, 4294901760
      %2780 = vmatpush.msra.mxu0 %v2779
      %v2781 = vand.u32 %v300, 4294901760
      %2782 = vmatpush.msra.mxu0 %v2781
      %v2783 = vand.u32 %v299, 4294901760
      %2784 = vmatpush.msra.mxu0 %v2783
      %v2785 = vand.u32 %v2590, 4294901760
      %2786 = vmatmul.f32.gmra.mxu0 %v2785
      %v2787 = vpop.f32.mrf.mxu0
      %v2788 = vadd.f32 %v2762, %v2787
      %2789 = vdwg.mxu0
      %v2790 = vmax.f32 %v1651, 0.0
      %v2791 = vmax.f32 %v2788, 0.0
      %v2793 = vsel %vm556, %v2791, 0
      %2795 = vmatpush.msra.mxu0 0.0
      %2796 = vmatpush.msra.mxu0 0.0
      %2797 = vmatpush.msra.mxu0 0.0
      %2798 = vmatpush.msra.mxu0 0.0
      %2799 = vmatpush.msra.mxu0 0.0
      %2800 = vmatpush.msra.mxu0 0.0
      %2801 = vmatpush.msra.mxu0 0.0
      %2802 = vmatpush.msra.mxu0 0.0
      %v2803 = vand.u32 %v280, 4294901760
      %2804 = vmatpush.msra.mxu0 %v2803
      %v2805 = vand.u32 %v279, 4294901760
      %2806 = vmatpush.msra.mxu0 %v2805
      %v2807 = vand.u32 %v278, 4294901760
      %2808 = vmatpush.msra.mxu0 %v2807
      %v2809 = vand.u32 %v277, 4294901760
      %2810 = vmatpush.msra.mxu0 %v2809
      %v2811 = vand.u32 %v276, 4294901760
      %2812 = vmatpush.msra.mxu0 %v2811
      %v2813 = vand.u32 %v275, 4294901760
      %2814 = vmatpush.msra.mxu0 %v2813
      %v2815 = vand.u32 %v274, 4294901760
      %2816 = vmatpush.msra.mxu0 %v2815
      %v2817 = vand.u32 %v273, 4294901760
      %2818 = vmatpush.msra.mxu0 %v2817
      %v2819 = vand.u32 %v2793, 4294901760
      %v2820 = vsub.f32 %v2793, %v2819
      %v2821 = vand.u32 %v2820, 4294901760
      %v2822 = vsub.f32 %v2820, %v2821
      %v2823 = vand.u32 %v2822, 4294901760
      %2824 = vmatmul.f32.gmra.mxu0 %v2823
      %v2825 = vpop.f32.mrf.mxu0
      %v2826 = vadd.f32 0.0, %v2825
      %2827 = vdwg.mxu0
      %2828 = vmatpush.msra.mxu0 0.0
      %2829 = vmatpush.msra.mxu0 0.0
      %2830 = vmatpush.msra.mxu0 0.0
      %2831 = vmatpush.msra.mxu0 0.0
      %2832 = vmatpush.msra.mxu0 0.0
      %2833 = vmatpush.msra.mxu0 0.0
      %2834 = vmatpush.msra.mxu0 0.0
      %2835 = vmatpush.msra.mxu0 0.0
      %v2836 = vand.u32 %v280, 4294901760
      %v2837 = vsub.f32 %v280, %v2836
      %v2838 = vand.u32 %v2837, 4294901760
      %v2839 = vsub.f32 %v2837, %v2838
      %v2840 = vand.u32 %v2839, 4294901760
      %2841 = vmatpush.msra.mxu0 %v2840
      %v2842 = vand.u32 %v279, 4294901760
      %v2843 = vsub.f32 %v279, %v2842
      %v2844 = vand.u32 %v2843, 4294901760
      %v2845 = vsub.f32 %v2843, %v2844
      %v2846 = vand.u32 %v2845, 4294901760
      %2847 = vmatpush.msra.mxu0 %v2846
      %v2848 = vand.u32 %v278, 4294901760
      %v2849 = vsub.f32 %v278, %v2848
      %v2850 = vand.u32 %v2849, 4294901760
      %v2851 = vsub.f32 %v2849, %v2850
      %v2852 = vand.u32 %v2851, 4294901760
      %2853 = vmatpush.msra.mxu0 %v2852
      %v2854 = vand.u32 %v277, 4294901760
      %v2855 = vsub.f32 %v277, %v2854
      %v2856 = vand.u32 %v2855, 4294901760
      %v2857 = vsub.f32 %v2855, %v2856
      %v2858 = vand.u32 %v2857, 4294901760
      %2859 = vmatpush.msra.mxu0 %v2858
      %v2860 = vand.u32 %v276, 4294901760
      %v2861 = vsub.f32 %v276, %v2860
      %v2862 = vand.u32 %v2861, 4294901760
      %v2863 = vsub.f32 %v2861, %v2862
      %v2864 = vand.u32 %v2863, 4294901760
      %2865 = vmatpush.msra.mxu0 %v2864
      %v2866 = vand.u32 %v275, 4294901760
      %v2867 = vsub.f32 %v275, %v2866
      %v2868 = vand.u32 %v2867, 4294901760
      %v2869 = vsub.f32 %v2867, %v2868
      %v2870 = vand.u32 %v2869, 4294901760
      %2871 = vmatpush.msra.mxu0 %v2870
      %v2872 = vand.u32 %v274, 4294901760
      %v2873 = vsub.f32 %v274, %v2872
      %v2874 = vand.u32 %v2873, 4294901760
      %v2875 = vsub.f32 %v2873, %v2874
      %v2876 = vand.u32 %v2875, 4294901760
      %2877 = vmatpush.msra.mxu0 %v2876
      %v2878 = vand.u32 %v273, 4294901760
      %v2879 = vsub.f32 %v273, %v2878
      %v2880 = vand.u32 %v2879, 4294901760
      %v2881 = vsub.f32 %v2879, %v2880
      %v2882 = vand.u32 %v2881, 4294901760
      %2883 = vmatpush.msra.mxu0 %v2882
      %v2884 = vand.u32 %v2793, 4294901760
      %2885 = vmatmul.f32.gmra.mxu0 %v2884
      %v2886 = vpop.f32.mrf.mxu0
      %v2887 = vadd.f32 %v2826, %v2886
      %2888 = vdwg.mxu0
      %2889 = vmatpush.msra.mxu0 0.0
      %2890 = vmatpush.msra.mxu0 0.0
      %2891 = vmatpush.msra.mxu0 0.0
      %2892 = vmatpush.msra.mxu0 0.0
      %2893 = vmatpush.msra.mxu0 0.0
      %2894 = vmatpush.msra.mxu0 0.0
      %2895 = vmatpush.msra.mxu0 0.0
      %2896 = vmatpush.msra.mxu0 0.0
      %v2897 = vand.u32 %v280, 4294901760
      %v2898 = vsub.f32 %v280, %v2897
      %2899 = vmatpush.msra.mxu0 %v2898
      %v2900 = vand.u32 %v279, 4294901760
      %v2901 = vsub.f32 %v279, %v2900
      %2902 = vmatpush.msra.mxu0 %v2901
      %v2903 = vand.u32 %v278, 4294901760
      %v2904 = vsub.f32 %v278, %v2903
      %2905 = vmatpush.msra.mxu0 %v2904
      %v2906 = vand.u32 %v277, 4294901760
      %v2907 = vsub.f32 %v277, %v2906
      %2908 = vmatpush.msra.mxu0 %v2907
      %v2909 = vand.u32 %v276, 4294901760
      %v2910 = vsub.f32 %v276, %v2909
      %2911 = vmatpush.msra.mxu0 %v2910
      %v2912 = vand.u32 %v275, 4294901760
      %v2913 = vsub.f32 %v275, %v2912
      %2914 = vmatpush.msra.mxu0 %v2913
      %v2915 = vand.u32 %v274, 4294901760
      %v2916 = vsub.f32 %v274, %v2915
      %2917 = vmatpush.msra.mxu0 %v2916
      %v2918 = vand.u32 %v273, 4294901760
      %v2919 = vsub.f32 %v273, %v2918
      %2920 = vmatpush.msra.mxu0 %v2919
      %v2921 = vand.u32 %v2793, 4294901760
      %v2922 = vsub.f32 %v2793, %v2921
      %2923 = vmatmul.f32.gmra.mxu0 %v2922
      %v2924 = vpop.f32.mrf.mxu0
      %v2925 = vadd.f32 %v2887, %v2924
      %2926 = vdwg.mxu0
      %2927 = vmatpush.msra.mxu0 0.0
      %2928 = vmatpush.msra.mxu0 0.0
      %2929 = vmatpush.msra.mxu0 0.0
      %2930 = vmatpush.msra.mxu0 0.0
      %2931 = vmatpush.msra.mxu0 0.0
      %2932 = vmatpush.msra.mxu0 0.0
      %2933 = vmatpush.msra.mxu0 0.0
      %2934 = vmatpush.msra.mxu0 0.0
      %v2935 = vand.u32 %v280, 4294901760
      %2936 = vmatpush.msra.mxu0 %v2935
      %v2937 = vand.u32 %v279, 4294901760
      %2938 = vmatpush.msra.mxu0 %v2937
      %v2939 = vand.u32 %v278, 4294901760
      %2940 = vmatpush.msra.mxu0 %v2939
      %v2941 = vand.u32 %v277, 4294901760
      %2942 = vmatpush.msra.mxu0 %v2941
      %v2943 = vand.u32 %v276, 4294901760
      %2944 = vmatpush.msra.mxu0 %v2943
      %v2945 = vand.u32 %v275, 4294901760
      %2946 = vmatpush.msra.mxu0 %v2945
      %v2947 = vand.u32 %v274, 4294901760
      %2948 = vmatpush.msra.mxu0 %v2947
      %v2949 = vand.u32 %v273, 4294901760
      %2950 = vmatpush.msra.mxu0 %v2949
      %v2951 = vand.u32 %v2793, 4294901760
      %v2952 = vsub.f32 %v2793, %v2951
      %v2953 = vand.u32 %v2952, 4294901760
      %2954 = vmatmul.f32.gmra.mxu0 %v2953
      %v2955 = vpop.f32.mrf.mxu0
      %v2956 = vadd.f32 %v2925, %v2955
      %2957 = vdwg.mxu0
      %2958 = vmatpush.msra.mxu0 0.0
      %2959 = vmatpush.msra.mxu0 0.0
      %2960 = vmatpush.msra.mxu0 0.0
      %2961 = vmatpush.msra.mxu0 0.0
      %2962 = vmatpush.msra.mxu0 0.0
      %2963 = vmatpush.msra.mxu0 0.0
      %2964 = vmatpush.msra.mxu0 0.0
      %2965 = vmatpush.msra.mxu0 0.0
      %v2966 = vand.u32 %v280, 4294901760
      %v2967 = vsub.f32 %v280, %v2966
      %v2968 = vand.u32 %v2967, 4294901760
      %2969 = vmatpush.msra.mxu0 %v2968
      %v2970 = vand.u32 %v279, 4294901760
      %v2971 = vsub.f32 %v279, %v2970
      %v2972 = vand.u32 %v2971, 4294901760
      %2973 = vmatpush.msra.mxu0 %v2972
      %v2974 = vand.u32 %v278, 4294901760
      %v2975 = vsub.f32 %v278, %v2974
      %v2976 = vand.u32 %v2975, 4294901760
      %2977 = vmatpush.msra.mxu0 %v2976
      %v2978 = vand.u32 %v277, 4294901760
      %v2979 = vsub.f32 %v277, %v2978
      %v2980 = vand.u32 %v2979, 4294901760
      %2981 = vmatpush.msra.mxu0 %v2980
      %v2982 = vand.u32 %v276, 4294901760
      %v2983 = vsub.f32 %v276, %v2982
      %v2984 = vand.u32 %v2983, 4294901760
      %2985 = vmatpush.msra.mxu0 %v2984
      %v2986 = vand.u32 %v275, 4294901760
      %v2987 = vsub.f32 %v275, %v2986
      %v2988 = vand.u32 %v2987, 4294901760
      %2989 = vmatpush.msra.mxu0 %v2988
      %v2990 = vand.u32 %v274, 4294901760
      %v2991 = vsub.f32 %v274, %v2990
      %v2992 = vand.u32 %v2991, 4294901760
      %2993 = vmatpush.msra.mxu0 %v2992
      %v2994 = vand.u32 %v273, 4294901760
      %v2995 = vsub.f32 %v273, %v2994
      %v2996 = vand.u32 %v2995, 4294901760
      %2997 = vmatpush.msra.mxu0 %v2996
      %v2998 = vand.u32 %v2793, 4294901760
      %2999 = vmatmul.f32.gmra.mxu0 %v2998
      %v3000 = vpop.f32.mrf.mxu0
      %v3001 = vadd.f32 %v2956, %v3000
      %3002 = vdwg.mxu0
      %3003 = vmatpush.msra.mxu0 0.0
      %3004 = vmatpush.msra.mxu0 0.0
      %3005 = vmatpush.msra.mxu0 0.0
      %3006 = vmatpush.msra.mxu0 0.0
      %3007 = vmatpush.msra.mxu0 0.0
      %3008 = vmatpush.msra.mxu0 0.0
      %3009 = vmatpush.msra.mxu0 0.0
      %3010 = vmatpush.msra.mxu0 0.0
      %v3011 = vand.u32 %v280, 4294901760
      %3012 = vmatpush.msra.mxu0 %v3011
      %v3013 = vand.u32 %v279, 4294901760
      %3014 = vmatpush.msra.mxu0 %v3013
      %v3015 = vand.u32 %v278, 4294901760
      %3016 = vmatpush.msra.mxu0 %v3015
      %v3017 = vand.u32 %v277, 4294901760
      %3018 = vmatpush.msra.mxu0 %v3017
      %v3019 = vand.u32 %v276, 4294901760
      %3020 = vmatpush.msra.mxu0 %v3019
      %v3021 = vand.u32 %v275, 4294901760
      %3022 = vmatpush.msra.mxu0 %v3021
      %v3023 = vand.u32 %v274, 4294901760
      %3024 = vmatpush.msra.mxu0 %v3023
      %v3025 = vand.u32 %v273, 4294901760
      %3026 = vmatpush.msra.mxu0 %v3025
      %v3027 = vand.u32 %v2793, 4294901760
      %3028 = vmatmul.f32.gmra.mxu0 %v3027
      %v3029 = vpop.f32.mrf.mxu0
      %v3030 = vadd.f32 %v3001, %v3029
      %3031 = vdwg.mxu0
      %v3033 = vsel %vm556, %v2790, 0
      %3035 = vmatpush.msra.mxu0 0.0
      %3036 = vmatpush.msra.mxu0 0.0
      %3037 = vmatpush.msra.mxu0 0.0
      %3038 = vmatpush.msra.mxu0 0.0
      %3039 = vmatpush.msra.mxu0 0.0
      %3040 = vmatpush.msra.mxu0 0.0
      %3041 = vmatpush.msra.mxu0 0.0
      %3042 = vmatpush.msra.mxu0 0.0
      %v3043 = vand.u32 %v272, 4294901760
      %3044 = vmatpush.msra.mxu0 %v3043
      %v3045 = vand.u32 %v271, 4294901760
      %3046 = vmatpush.msra.mxu0 %v3045
      %v3047 = vand.u32 %v270, 4294901760
      %3048 = vmatpush.msra.mxu0 %v3047
      %v3049 = vand.u32 %v269, 4294901760
      %3050 = vmatpush.msra.mxu0 %v3049
      %v3051 = vand.u32 %v268, 4294901760
      %3052 = vmatpush.msra.mxu0 %v3051
      %v3053 = vand.u32 %v267, 4294901760
      %3054 = vmatpush.msra.mxu0 %v3053
      %v3055 = vand.u32 %v266, 4294901760
      %3056 = vmatpush.msra.mxu0 %v3055
      %v3057 = vand.u32 %v265, 4294901760
      %3058 = vmatpush.msra.mxu0 %v3057
      %v3059 = vand.u32 %v3033, 4294901760
      %v3060 = vsub.f32 %v3033, %v3059
      %v3061 = vand.u32 %v3060, 4294901760
      %v3062 = vsub.f32 %v3060, %v3061
      %v3063 = vand.u32 %v3062, 4294901760
      %3064 = vmatmul.f32.gmra.mxu0 %v3063
      %v3065 = vpop.f32.mrf.mxu0
      %v3066 = vadd.f32 %v3030, %v3065
      %3067 = vdwg.mxu0
      %3068 = vmatpush.msra.mxu0 0.0
      %3069 = vmatpush.msra.mxu0 0.0
      %3070 = vmatpush.msra.mxu0 0.0
      %3071 = vmatpush.msra.mxu0 0.0
      %3072 = vmatpush.msra.mxu0 0.0
      %3073 = vmatpush.msra.mxu0 0.0
      %3074 = vmatpush.msra.mxu0 0.0
      %3075 = vmatpush.msra.mxu0 0.0
      %v3076 = vand.u32 %v272, 4294901760
      %v3077 = vsub.f32 %v272, %v3076
      %v3078 = vand.u32 %v3077, 4294901760
      %v3079 = vsub.f32 %v3077, %v3078
      %v3080 = vand.u32 %v3079, 4294901760
      %3081 = vmatpush.msra.mxu0 %v3080
      %v3082 = vand.u32 %v271, 4294901760
      %v3083 = vsub.f32 %v271, %v3082
      %v3084 = vand.u32 %v3083, 4294901760
      %v3085 = vsub.f32 %v3083, %v3084
      %v3086 = vand.u32 %v3085, 4294901760
      %3087 = vmatpush.msra.mxu0 %v3086
      %v3088 = vand.u32 %v270, 4294901760
      %v3089 = vsub.f32 %v270, %v3088
      %v3090 = vand.u32 %v3089, 4294901760
      %v3091 = vsub.f32 %v3089, %v3090
      %v3092 = vand.u32 %v3091, 4294901760
      %3093 = vmatpush.msra.mxu0 %v3092
      %v3094 = vand.u32 %v269, 4294901760
      %v3095 = vsub.f32 %v269, %v3094
      %v3096 = vand.u32 %v3095, 4294901760
      %v3097 = vsub.f32 %v3095, %v3096
      %v3098 = vand.u32 %v3097, 4294901760
      %3099 = vmatpush.msra.mxu0 %v3098
      %v3100 = vand.u32 %v268, 4294901760
      %v3101 = vsub.f32 %v268, %v3100
      %v3102 = vand.u32 %v3101, 4294901760
      %v3103 = vsub.f32 %v3101, %v3102
      %v3104 = vand.u32 %v3103, 4294901760
      %3105 = vmatpush.msra.mxu0 %v3104
      %v3106 = vand.u32 %v267, 4294901760
      %v3107 = vsub.f32 %v267, %v3106
      %v3108 = vand.u32 %v3107, 4294901760
      %v3109 = vsub.f32 %v3107, %v3108
      %v3110 = vand.u32 %v3109, 4294901760
      %3111 = vmatpush.msra.mxu0 %v3110
      %v3112 = vand.u32 %v266, 4294901760
      %v3113 = vsub.f32 %v266, %v3112
      %v3114 = vand.u32 %v3113, 4294901760
      %v3115 = vsub.f32 %v3113, %v3114
      %v3116 = vand.u32 %v3115, 4294901760
      %3117 = vmatpush.msra.mxu0 %v3116
      %v3118 = vand.u32 %v265, 4294901760
      %v3119 = vsub.f32 %v265, %v3118
      %v3120 = vand.u32 %v3119, 4294901760
      %v3121 = vsub.f32 %v3119, %v3120
      %v3122 = vand.u32 %v3121, 4294901760
      %3123 = vmatpush.msra.mxu0 %v3122
      %v3124 = vand.u32 %v3033, 4294901760
      %3125 = vmatmul.f32.gmra.mxu0 %v3124
      %v3126 = vpop.f32.mrf.mxu0
      %v3127 = vadd.f32 %v3066, %v3126
      %3128 = vdwg.mxu0
      %3129 = vmatpush.msra.mxu0 0.0
      %3130 = vmatpush.msra.mxu0 0.0
      %3131 = vmatpush.msra.mxu0 0.0
      %3132 = vmatpush.msra.mxu0 0.0
      %3133 = vmatpush.msra.mxu0 0.0
      %3134 = vmatpush.msra.mxu0 0.0
      %3135 = vmatpush.msra.mxu0 0.0
      %3136 = vmatpush.msra.mxu0 0.0
      %v3137 = vand.u32 %v272, 4294901760
      %v3138 = vsub.f32 %v272, %v3137
      %3139 = vmatpush.msra.mxu0 %v3138
      %v3140 = vand.u32 %v271, 4294901760
      %v3141 = vsub.f32 %v271, %v3140
      %3142 = vmatpush.msra.mxu0 %v3141
      %v3143 = vand.u32 %v270, 4294901760
      %v3144 = vsub.f32 %v270, %v3143
      %3145 = vmatpush.msra.mxu0 %v3144
      %v3146 = vand.u32 %v269, 4294901760
      %v3147 = vsub.f32 %v269, %v3146
      %3148 = vmatpush.msra.mxu0 %v3147
      %v3149 = vand.u32 %v268, 4294901760
      %v3150 = vsub.f32 %v268, %v3149
      %3151 = vmatpush.msra.mxu0 %v3150
      %v3152 = vand.u32 %v267, 4294901760
      %v3153 = vsub.f32 %v267, %v3152
      %3154 = vmatpush.msra.mxu0 %v3153
      %v3155 = vand.u32 %v266, 4294901760
      %v3156 = vsub.f32 %v266, %v3155
      %3157 = vmatpush.msra.mxu0 %v3156
      %v3158 = vand.u32 %v265, 4294901760
      %v3159 = vsub.f32 %v265, %v3158
      %3160 = vmatpush.msra.mxu0 %v3159
      %v3161 = vand.u32 %v3033, 4294901760
      %v3162 = vsub.f32 %v3033, %v3161
      %3163 = vmatmul.f32.gmra.mxu0 %v3162
      %v3164 = vpop.f32.mrf.mxu0
      %v3165 = vadd.f32 %v3127, %v3164
      %3166 = vdwg.mxu0
      %3167 = vmatpush.msra.mxu0 0.0
      %3168 = vmatpush.msra.mxu0 0.0
      %3169 = vmatpush.msra.mxu0 0.0
      %3170 = vmatpush.msra.mxu0 0.0
      %3171 = vmatpush.msra.mxu0 0.0
      %3172 = vmatpush.msra.mxu0 0.0
      %3173 = vmatpush.msra.mxu0 0.0
      %3174 = vmatpush.msra.mxu0 0.0
      %v3175 = vand.u32 %v272, 4294901760
      %3176 = vmatpush.msra.mxu0 %v3175
      %v3177 = vand.u32 %v271, 4294901760
      %3178 = vmatpush.msra.mxu0 %v3177
      %v3179 = vand.u32 %v270, 4294901760
      %3180 = vmatpush.msra.mxu0 %v3179
      %v3181 = vand.u32 %v269, 4294901760
      %3182 = vmatpush.msra.mxu0 %v3181
      %v3183 = vand.u32 %v268, 4294901760
      %3184 = vmatpush.msra.mxu0 %v3183
      %v3185 = vand.u32 %v267, 4294901760
      %3186 = vmatpush.msra.mxu0 %v3185
      %v3187 = vand.u32 %v266, 4294901760
      %3188 = vmatpush.msra.mxu0 %v3187
      %v3189 = vand.u32 %v265, 4294901760
      %3190 = vmatpush.msra.mxu0 %v3189
      %v3191 = vand.u32 %v3033, 4294901760
      %v3192 = vsub.f32 %v3033, %v3191
      %v3193 = vand.u32 %v3192, 4294901760
      %3194 = vmatmul.f32.gmra.mxu0 %v3193
      %v3195 = vpop.f32.mrf.mxu0
      %v3196 = vadd.f32 %v3165, %v3195
      %3197 = vdwg.mxu0
      %3198 = vmatpush.msra.mxu0 0.0
      %3199 = vmatpush.msra.mxu0 0.0
      %3200 = vmatpush.msra.mxu0 0.0
      %3201 = vmatpush.msra.mxu0 0.0
      %3202 = vmatpush.msra.mxu0 0.0
      %3203 = vmatpush.msra.mxu0 0.0
      %3204 = vmatpush.msra.mxu0 0.0
      %3205 = vmatpush.msra.mxu0 0.0
      %v3206 = vand.u32 %v272, 4294901760
      %v3207 = vsub.f32 %v272, %v3206
      %v3208 = vand.u32 %v3207, 4294901760
      %3209 = vmatpush.msra.mxu0 %v3208
      %v3210 = vand.u32 %v271, 4294901760
      %v3211 = vsub.f32 %v271, %v3210
      %v3212 = vand.u32 %v3211, 4294901760
      %3213 = vmatpush.msra.mxu0 %v3212
      %v3214 = vand.u32 %v270, 4294901760
      %v3215 = vsub.f32 %v270, %v3214
      %v3216 = vand.u32 %v3215, 4294901760
      %3217 = vmatpush.msra.mxu0 %v3216
      %v3218 = vand.u32 %v269, 4294901760
      %v3219 = vsub.f32 %v269, %v3218
      %v3220 = vand.u32 %v3219, 4294901760
      %3221 = vmatpush.msra.mxu0 %v3220
      %v3222 = vand.u32 %v268, 4294901760
      %v3223 = vsub.f32 %v268, %v3222
      %v3224 = vand.u32 %v3223, 4294901760
      %3225 = vmatpush.msra.mxu0 %v3224
      %v3226 = vand.u32 %v267, 4294901760
      %v3227 = vsub.f32 %v267, %v3226
      %v3228 = vand.u32 %v3227, 4294901760
      %3229 = vmatpush.msra.mxu0 %v3228
      %v3230 = vand.u32 %v266, 4294901760
      %v3231 = vsub.f32 %v266, %v3230
      %v3232 = vand.u32 %v3231, 4294901760
      %3233 = vmatpush.msra.mxu0 %v3232
      %v3234 = vand.u32 %v265, 4294901760
      %v3235 = vsub.f32 %v265, %v3234
      %v3236 = vand.u32 %v3235, 4294901760
      %3237 = vmatpush.msra.mxu0 %v3236
      %v3238 = vand.u32 %v3033, 4294901760
      %3239 = vmatmul.f32.gmra.mxu0 %v3238
      %v3240 = vpop.f32.mrf.mxu0
      %v3241 = vadd.f32 %v3196, %v3240
      %3242 = vdwg.mxu0
      %3243 = vmatpush.msra.mxu0 0.0
      %3244 = vmatpush.msra.mxu0 0.0
      %3245 = vmatpush.msra.mxu0 0.0
      %3246 = vmatpush.msra.mxu0 0.0
      %3247 = vmatpush.msra.mxu0 0.0
      %3248 = vmatpush.msra.mxu0 0.0
      %3249 = vmatpush.msra.mxu0 0.0
      %3250 = vmatpush.msra.mxu0 0.0
      %v3251 = vand.u32 %v272, 4294901760
      %3252 = vmatpush.msra.mxu0 %v3251
      %v3253 = vand.u32 %v271, 4294901760
      %3254 = vmatpush.msra.mxu0 %v3253
      %v3255 = vand.u32 %v270, 4294901760
      %3256 = vmatpush.msra.mxu0 %v3255
      %v3257 = vand.u32 %v269, 4294901760
      %3258 = vmatpush.msra.mxu0 %v3257
      %v3259 = vand.u32 %v268, 4294901760
      %3260 = vmatpush.msra.mxu0 %v3259
      %v3261 = vand.u32 %v267, 4294901760
      %3262 = vmatpush.msra.mxu0 %v3261
      %v3263 = vand.u32 %v266, 4294901760
      %3264 = vmatpush.msra.mxu0 %v3263
      %v3265 = vand.u32 %v265, 4294901760
      %3266 = vmatpush.msra.mxu0 %v3265
      %v3267 = vand.u32 %v3033, 4294901760
      %3268 = vmatmul.f32.gmra.mxu0 %v3267
      %v3269 = vpop.f32.mrf.mxu0
      %v3270 = vadd.f32 %v3241, %v3269
      %3271 = vdwg.mxu0
      %v3272 = vrot.slane %v255, 6
      %v3274 = vadd.f32 %v3270, %v3272
      %vm3275 = vcmask 32768
      %3276 = vst.msk [vmem:[%s221 + $0x8] sm:$0x1] %vm3275, %v3274
      %v3278 = vsel %vm1460, %v3274, 0
      %v3281 = vsel %vm2438, %v282, 0
      %3283 = vmatpush.msra.mxu0 0.0
      %3284 = vmatpush.msra.mxu0 0.0
      %3285 = vmatpush.msra.mxu0 0.0
      %3286 = vmatpush.msra.mxu0 0.0
      %3287 = vmatpush.msra.mxu0 0.0
      %3288 = vmatpush.msra.mxu0 0.0
      %3289 = vmatpush.msra.mxu0 0.0
      %3290 = vmatpush.msra.mxu0 0.0
      %3291 = vmatpush.msra.mxu0 0.0
      %3292 = vmatpush.msra.mxu0 0.0
      %3293 = vmatpush.msra.mxu0 0.0
      %3294 = vmatpush.msra.mxu0 0.0
      %3295 = vmatpush.msra.mxu0 0.0
      %3296 = vmatpush.msra.mxu0 0.0
      %3297 = vmatpush.msra.mxu0 0.0
      %v3298 = vand.u32 %v3281, 4294901760
      %3299 = vmatpush.msra.mxu0 %v3298
      %v3300 = vand.u32 %v3278, 4294901760
      %v3301 = vsub.f32 %v3278, %v3300
      %v3302 = vand.u32 %v3301, 4294901760
      %v3303 = vsub.f32 %v3301, %v3302
      %v3304 = vand.u32 %v3303, 4294901760
      %3305 = vmatmul.f32.gmra.mxu0 %v3304
      %v3306 = vpop.f32.mrf.mxu0
      %v3307 = vadd.f32 0.0, %v3306
      %3308 = vdwg.mxu0
      %3309 = vmatpush.msra.mxu0 0.0
      %3310 = vmatpush.msra.mxu0 0.0
      %3311 = vmatpush.msra.mxu0 0.0
      %3312 = vmatpush.msra.mxu0 0.0
      %3313 = vmatpush.msra.mxu0 0.0
      %3314 = vmatpush.msra.mxu0 0.0
      %3315 = vmatpush.msra.mxu0 0.0
      %3316 = vmatpush.msra.mxu0 0.0
      %3317 = vmatpush.msra.mxu0 0.0
      %3318 = vmatpush.msra.mxu0 0.0
      %3319 = vmatpush.msra.mxu0 0.0
      %3320 = vmatpush.msra.mxu0 0.0
      %3321 = vmatpush.msra.mxu0 0.0
      %3322 = vmatpush.msra.mxu0 0.0
      %3323 = vmatpush.msra.mxu0 0.0
      %v3324 = vand.u32 %v3281, 4294901760
      %v3325 = vsub.f32 %v3281, %v3324
      %v3326 = vand.u32 %v3325, 4294901760
      %v3327 = vsub.f32 %v3325, %v3326
      %v3328 = vand.u32 %v3327, 4294901760
      %3329 = vmatpush.msra.mxu0 %v3328
      %v3330 = vand.u32 %v3278, 4294901760
      %3331 = vmatmul.f32.gmra.mxu0 %v3330
      %v3332 = vpop.f32.mrf.mxu0
      %v3333 = vadd.f32 %v3307, %v3332
      %3334 = vdwg.mxu0
      %3335 = vmatpush.msra.mxu0 0.0
      %3336 = vmatpush.msra.mxu0 0.0
      %3337 = vmatpush.msra.mxu0 0.0
      %3338 = vmatpush.msra.mxu0 0.0
      %3339 = vmatpush.msra.mxu0 0.0
      %3340 = vmatpush.msra.mxu0 0.0
      %3341 = vmatpush.msra.mxu0 0.0
      %3342 = vmatpush.msra.mxu0 0.0
      %3343 = vmatpush.msra.mxu0 0.0
      %3344 = vmatpush.msra.mxu0 0.0
      %3345 = vmatpush.msra.mxu0 0.0
      %3346 = vmatpush.msra.mxu0 0.0
      %3347 = vmatpush.msra.mxu0 0.0
      %3348 = vmatpush.msra.mxu0 0.0
      %3349 = vmatpush.msra.mxu0 0.0
      %v3350 = vand.u32 %v3281, 4294901760
      %v3351 = vsub.f32 %v3281, %v3350
      %3352 = vmatpush.msra.mxu0 %v3351
      %v3353 = vand.u32 %v3278, 4294901760
      %v3354 = vsub.f32 %v3278, %v3353
      %3355 = vmatmul.f32.gmra.mxu0 %v3354
      %v3356 = vpop.f32.mrf.mxu0
      %v3357 = vadd.f32 %v3333, %v3356
      %3358 = vdwg.mxu0
      %3359 = vmatpush.msra.mxu0 0.0
      %3360 = vmatpush.msra.mxu0 0.0
      %3361 = vmatpush.msra.mxu0 0.0
      %3362 = vmatpush.msra.mxu0 0.0
      %3363 = vmatpush.msra.mxu0 0.0
      %3364 = vmatpush.msra.mxu0 0.0
      %3365 = vmatpush.msra.mxu0 0.0
      %3366 = vmatpush.msra.mxu0 0.0
      %3367 = vmatpush.msra.mxu0 0.0
      %3368 = vmatpush.msra.mxu0 0.0
      %3369 = vmatpush.msra.mxu0 0.0
      %3370 = vmatpush.msra.mxu0 0.0
      %3371 = vmatpush.msra.mxu0 0.0
      %3372 = vmatpush.msra.mxu0 0.0
      %3373 = vmatpush.msra.mxu0 0.0
      %v3374 = vand.u32 %v3281, 4294901760
      %3375 = vmatpush.msra.mxu0 %v3374
      %v3376 = vand.u32 %v3278, 4294901760
      %v3377 = vsub.f32 %v3278, %v3376
      %v3378 = vand.u32 %v3377, 4294901760
      %3379 = vmatmul.f32.gmra.mxu0 %v3378
      %v3380 = vpop.f32.mrf.mxu0
      %v3381 = vadd.f32 %v3357, %v3380
      %3382 = vdwg.mxu0
      %3383 = vmatpush.msra.mxu0 0.0
      %3384 = vmatpush.msra.mxu0 0.0
      %3385 = vmatpush.msra.mxu0 0.0
      %3386 = vmatpush.msra.mxu0 0.0
      %3387 = vmatpush.msra.mxu0 0.0
      %3388 = vmatpush.msra.mxu0 0.0
      %3389 = vmatpush.msra.mxu0 0.0
      %3390 = vmatpush.msra.mxu0 0.0
      %3391 = vmatpush.msra.mxu0 0.0
      %3392 = vmatpush.msra.mxu0 0.0
      %3393 = vmatpush.msra.mxu0 0.0
      %3394 = vmatpush.msra.mxu0 0.0
      %3395 = vmatpush.msra.mxu0 0.0
      %3396 = vmatpush.msra.mxu0 0.0
      %3397 = vmatpush.msra.mxu0 0.0
      %v3398 = vand.u32 %v3281, 4294901760
      %v3399 = vsub.f32 %v3281, %v3398
      %v3400 = vand.u32 %v3399, 4294901760
      %3401 = vmatpush.msra.mxu0 %v3400
      %v3402 = vand.u32 %v3278, 4294901760
      %3403 = vmatmul.f32.gmra.mxu0 %v3402
      %v3404 = vpop.f32.mrf.mxu0
      %v3405 = vadd.f32 %v3381, %v3404
      %3406 = vdwg.mxu0
      %3407 = vmatpush.msra.mxu0 0.0
      %3408 = vmatpush.msra.mxu0 0.0
      %3409 = vmatpush.msra.mxu0 0.0
      %3410 = vmatpush.msra.mxu0 0.0
      %3411 = vmatpush.msra.mxu0 0.0
      %3412 = vmatpush.msra.mxu0 0.0
      %3413 = vmatpush.msra.mxu0 0.0
      %3414 = vmatpush.msra.mxu0 0.0
      %3415 = vmatpush.msra.mxu0 0.0
      %3416 = vmatpush.msra.mxu0 0.0
      %3417 = vmatpush.msra.mxu0 0.0
      %3418 = vmatpush.msra.mxu0 0.0
      %3419 = vmatpush.msra.mxu0 0.0
      %3420 = vmatpush.msra.mxu0 0.0
      %3421 = vmatpush.msra.mxu0 0.0
      %v3422 = vand.u32 %v3281, 4294901760
      %3423 = vmatpush.msra.mxu0 %v3422
      %v3424 = vand.u32 %v3278, 4294901760
      %3425 = vmatmul.f32.gmra.mxu0 %v3424
      %v3426 = vpop.f32.mrf.mxu0
      %v3427 = vadd.f32 %v3405, %v3426
      %3428 = vdwg.mxu0
      %v3430 = vrot.slane %v1458, 7
      %v3431 = vsel %vm1460, %v3430, 0
      %v3434 = vsel %vm2438, %v281, 0
      %3436 = vmatpush.msra.mxu0 0.0
      %3437 = vmatpush.msra.mxu0 0.0
      %3438 = vmatpush.msra.mxu0 0.0
      %3439 = vmatpush.msra.mxu0 0.0
      %3440 = vmatpush.msra.mxu0 0.0
      %3441 = vmatpush.msra.mxu0 0.0
      %3442 = vmatpush.msra.mxu0 0.0
      %3443 = vmatpush.msra.mxu0 0.0
      %3444 = vmatpush.msra.mxu0 0.0
      %3445 = vmatpush.msra.mxu0 0.0
      %3446 = vmatpush.msra.mxu0 0.0
      %3447 = vmatpush.msra.mxu0 0.0
      %3448 = vmatpush.msra.mxu0 0.0
      %3449 = vmatpush.msra.mxu0 0.0
      %3450 = vmatpush.msra.mxu0 0.0
      %v3451 = vand.u32 %v3434, 4294901760
      %3452 = vmatpush.msra.mxu0 %v3451
      %v3453 = vand.u32 %v3431, 4294901760
      %v3454 = vsub.f32 %v3431, %v3453
      %v3455 = vand.u32 %v3454, 4294901760
      %v3456 = vsub.f32 %v3454, %v3455
      %v3457 = vand.u32 %v3456, 4294901760
      %3458 = vmatmul.f32.gmra.mxu0 %v3457
      %v3459 = vpop.f32.mrf.mxu0
      %v3460 = vadd.f32 %v3427, %v3459
      %3461 = vdwg.mxu0
      %3462 = vmatpush.msra.mxu0 0.0
      %3463 = vmatpush.msra.mxu0 0.0
      %3464 = vmatpush.msra.mxu0 0.0
      %3465 = vmatpush.msra.mxu0 0.0
      %3466 = vmatpush.msra.mxu0 0.0
      %3467 = vmatpush.msra.mxu0 0.0
      %3468 = vmatpush.msra.mxu0 0.0
      %3469 = vmatpush.msra.mxu0 0.0
      %3470 = vmatpush.msra.mxu0 0.0
      %3471 = vmatpush.msra.mxu0 0.0
      %3472 = vmatpush.msra.mxu0 0.0
      %3473 = vmatpush.msra.mxu0 0.0
      %3474 = vmatpush.msra.mxu0 0.0
      %3475 = vmatpush.msra.mxu0 0.0
      %3476 = vmatpush.msra.mxu0 0.0
      %v3477 = vand.u32 %v3434, 4294901760
      %v3478 = vsub.f32 %v3434, %v3477
      %v3479 = vand.u32 %v3478, 4294901760
      %v3480 = vsub.f32 %v3478, %v3479
      %v3481 = vand.u32 %v3480, 4294901760
      %3482 = vmatpush.msra.mxu0 %v3481
      %v3483 = vand.u32 %v3431, 4294901760
      %3484 = vmatmul.f32.gmra.mxu0 %v3483
      %v3485 = vpop.f32.mrf.mxu0
      %v3486 = vadd.f32 %v3460, %v3485
      %3487 = vdwg.mxu0
      %3488 = vmatpush.msra.mxu0 0.0
      %3489 = vmatpush.msra.mxu0 0.0
      %3490 = vmatpush.msra.mxu0 0.0
      %3491 = vmatpush.msra.mxu0 0.0
      %3492 = vmatpush.msra.mxu0 0.0
      %3493 = vmatpush.msra.mxu0 0.0
      %3494 = vmatpush.msra.mxu0 0.0
      %3495 = vmatpush.msra.mxu0 0.0
      %3496 = vmatpush.msra.mxu0 0.0
      %3497 = vmatpush.msra.mxu0 0.0
      %3498 = vmatpush.msra.mxu0 0.0
      %3499 = vmatpush.msra.mxu0 0.0
      %3500 = vmatpush.msra.mxu0 0.0
      %3501 = vmatpush.msra.mxu0 0.0
      %3502 = vmatpush.msra.mxu0 0.0
      %v3503 = vand.u32 %v3434, 4294901760
      %v3504 = vsub.f32 %v3434, %v3503
      %3505 = vmatpush.msra.mxu0 %v3504
      %v3506 = vand.u32 %v3431, 4294901760
      %v3507 = vsub.f32 %v3431, %v3506
      %3508 = vmatmul.f32.gmra.mxu0 %v3507
      %v3509 = vpop.f32.mrf.mxu0
      %v3510 = vadd.f32 %v3486, %v3509
      %3511 = vdwg.mxu0
      %3512 = vmatpush.msra.mxu0 0.0
      %3513 = vmatpush.msra.mxu0 0.0
      %3514 = vmatpush.msra.mxu0 0.0
      %3515 = vmatpush.msra.mxu0 0.0
      %3516 = vmatpush.msra.mxu0 0.0
      %3517 = vmatpush.msra.mxu0 0.0
      %3518 = vmatpush.msra.mxu0 0.0
      %3519 = vmatpush.msra.mxu0 0.0
      %3520 = vmatpush.msra.mxu0 0.0
      %3521 = vmatpush.msra.mxu0 0.0
      %3522 = vmatpush.msra.mxu0 0.0
      %3523 = vmatpush.msra.mxu0 0.0
      %3524 = vmatpush.msra.mxu0 0.0
      %3525 = vmatpush.msra.mxu0 0.0
      %3526 = vmatpush.msra.mxu0 0.0
      %v3527 = vand.u32 %v3434, 4294901760
      %3528 = vmatpush.msra.mxu0 %v3527
      %v3529 = vand.u32 %v3431, 4294901760
      %v3530 = vsub.f32 %v3431, %v3529
      %v3531 = vand.u32 %v3530, 4294901760
      %3532 = vmatmul.f32.gmra.mxu0 %v3531
      %v3533 = vpop.f32.mrf.mxu0
      %v3534 = vadd.f32 %v3510, %v3533
      %3535 = vdwg.mxu0
      %3536 = vmatpush.msra.mxu0 0.0
      %3537 = vmatpush.msra.mxu0 0.0
      %3538 = vmatpush.msra.mxu0 0.0
      %3539 = vmatpush.msra.mxu0 0.0
      %3540 = vmatpush.msra.mxu0 0.0
      %3541 = vmatpush.msra.mxu0 0.0
      %3542 = vmatpush.msra.mxu0 0.0
      %3543 = vmatpush.msra.mxu0 0.0
      %3544 = vmatpush.msra.mxu0 0.0
      %3545 = vmatpush.msra.mxu0 0.0
      %3546 = vmatpush.msra.mxu0 0.0
      %3547 = vmatpush.msra.mxu0 0.0
      %3548 = vmatpush.msra.mxu0 0.0
      %3549 = vmatpush.msra.mxu0 0.0
      %3550 = vmatpush.msra.mxu0 0.0
      %v3551 = vand.u32 %v3434, 4294901760
      %v3552 = vsub.f32 %v3434, %v3551
      %v3553 = vand.u32 %v3552, 4294901760
      %3554 = vmatpush.msra.mxu0 %v3553
      %v3555 = vand.u32 %v3431, 4294901760
      %3556 = vmatmul.f32.gmra.mxu0 %v3555
      %v3557 = vpop.f32.mrf.mxu0
      %v3558 = vadd.f32 %v3534, %v3557
      %3559 = vdwg.mxu0
      %3560 = vmatpush.msra.mxu0 0.0
      %3561 = vmatpush.msra.mxu0 0.0
      %3562 = vmatpush.msra.mxu0 0.0
      %3563 = vmatpush.msra.mxu0 0.0
      %3564 = vmatpush.msra.mxu0 0.0
      %3565 = vmatpush.msra.mxu0 0.0
      %3566 = vmatpush.msra.mxu0 0.0
      %3567 = vmatpush.msra.mxu0 0.0
      %3568 = vmatpush.msra.mxu0 0.0
      %3569 = vmatpush.msra.mxu0 0.0
      %3570 = vmatpush.msra.mxu0 0.0
      %3571 = vmatpush.msra.mxu0 0.0
      %3572 = vmatpush.msra.mxu0 0.0
      %3573 = vmatpush.msra.mxu0 0.0
      %3574 = vmatpush.msra.mxu0 0.0
      %v3575 = vand.u32 %v3434, 4294901760
      %3576 = vmatpush.msra.mxu0 %v3575
      %v3577 = vand.u32 %v3431, 4294901760
      %3578 = vmatmul.f32.gmra.mxu0 %v3577
      %v3579 = vpop.f32.mrf.mxu0
      %v3580 = vadd.f32 %v3558, %v3579
      %3581 = vdwg.mxu0
      %v3582 = vrot.slane %v255, 7
      %v3584 = vadd.f32 %v3580, %v3582
      %3585 = vst.msk [vmem:[%s221 + $0x9] sm:$0x1] %vm3275, %v3584
      %p3586 = scmp.lt.s32.totalorder %s16, 1
      %s3587 = scalar_select %p3586, %s16, 1
      %s3588 = smul.addr %s3587, 2
      %s3589 = smul.addr %s3588, 8
      %s3590 = scalar_lea.vmem %s5, %s3589
      // Predicated region
      $region41: #{combined_colar_forward.1} parent=39 // pred_check
        %p3591 = pneg %p144
      $region42: #{combined_colar_forward.1} parent=39 // pred_check_branch
        %3593 = sbr.rel (%p3591) target = $region44
      $region43: #{combined_colar_forward.1} parent=39 // pred_region
        _
      $region44: #{combined_colar_forward.1} parent=39 // pred_fallthru
        _
    $region40: #{combined_colar_forward.1} parent=5 // pred_fallthru
      _
    %p3594 = scmp.le.s32.totalorder 2, %s11
    // Predicated region
    $region45: #{combined_colar_forward.1} parent=5 // pred_check
      %p3595 = pneg %p3594
    $region46: #{combined_colar_forward.1} parent=5 // pred_check_branch
      %3597 = sbr.rel (%p3595) target = $region48
    $region47: #{combined_colar_forward.1} parent=5 // pred_region
      %s3598 = ssub.s32 %s11, 2
      // Predicated region
      $region49: #{combined_colar_forward.1} parent=47 // pred_check
        %p3599 = pneg %p150
      $region50: #{combined_colar_forward.1} parent=47 // pred_check_branch
        %3601 = sbr.rel (%p3599) target = $region52
      $region51: #{combined_colar_forward.1} parent=47 // pred_region
        %p3602 = scmp.lt.s32.totalorder %s17, 1
        %s3603 = scalar_select %p3602, %s17, 1
        %s3604 = smul.addr %s3603, 2
        %s3605 = smul.addr %s3604, 8
        %s3606 = scalar_lea.vmem %s5, %s3605
      $region52: #{combined_colar_forward.1} parent=47 // pred_fallthru
        _
    $region48: #{combined_colar_forward.1} parent=5 // pred_fallthru
      _
  $region6: #{combined_colar_forward.1} parent=0 // loop_footer
    %s15 = sadd.s32 1, %s11
  $region7: #{combined_colar_forward.1} parent=0 // loop_footer_branch
    %10 = sbr.rel target = $region3
  $region8: #{combined_colar_forward.1} parent=0 // loop_exit
    _

</llo_original>
